<compile_context>
chip_gen: v6e
topology: v6e:2x2x1
jax: 0.10.0
libtpu: 0.0.40
codegen_flags: <defaults>
</compile_context>

<pallas_src>
import jax
import jax.numpy as jnp
from jax.experimental import pallas as pl
from jax.experimental.pallas import tpu as pltpu


def convblock_forward(x_nchw, weight_oihw, gamma, beta, eps=1e-5):
    N, Cin, H, W = x_nchw.shape
    Cout = weight_oihw.shape[0]
    Hp, Wp = H + 2, W + 2            # zero-padded spatial extents (pad=1)
    FLAT_OUT = H * Wp                # accumulator rows; last 2 cols per row are halo scrap
    FLAT_IN = Hp * Wp + 2            # flattened padded rows (+2 so the last tap slice fits)

    # ---- layout plumbing (edges only; kernels run channels-last) ------------
    x_nhwc = jnp.transpose(x_nchw, (0, 2, 3, 1))
    x_pad = jnp.pad(x_nhwc, ((0, 0), (1, 1), (1, 1), (0, 0)))
    x_flat = jnp.pad(x_pad.reshape(N, Hp * Wp, Cin), ((0, 0), (0, 2), (0, 0)))
    x_flat = x_flat.astype(jnp.bfloat16)                            # bf16 MXU operand
    # (Cout, Cin, 3, 3) -> (3, 3, Cin, Cout) -> (9, Cin, Cout) taps, bf16
    w_taps = jnp.transpose(weight_oihw, (2, 3, 1, 0)).reshape(9, Cin, Cout)
    w_taps = w_taps.astype(jnp.bfloat16)
    # valid-column mask, hoisted out of the kernel (VMEM-resident, constant index_map)
    col = jnp.arange(FLAT_OUT, dtype=jnp.int32) % Wp
    valid_mask = (col < W).astype(jnp.float32).reshape(FLAT_OUT, 1)

    # ---- pass 1: conv as 9 MXU GEMMs (register accumulation) + fused stats ---
    def conv_stats_kernel(x_ref, w_ref, m_ref, y_ref, sum_ref, sq_ref):
        acc = jnp.dot(x_ref[0, pl.ds(0, FLAT_OUT), :], w_ref[0],
                      preferred_element_type=jnp.float32)
        for tap in range(1, 9):                       # static taps, unrolled
            kh, kw = divmod(tap, 3)
            off = kh * Wp + kw
            acc = acc + jnp.dot(x_ref[0, pl.ds(off, FLAT_OUT), :], w_ref[tap],
                                preferred_element_type=jnp.float32)
        y_ref[0] = acc.astype(y_ref.dtype)
        # fused epilogue: per-image channel sum / sum-of-squares over valid pixels
        masked = acc * m_ref[...]
        sum_ref[0] = jnp.sum(masked, axis=0, keepdims=True)
        sq_ref[0] = jnp.sum(masked * masked, axis=0, keepdims=True)

    y_flat, ch_sum, ch_sq = pl.pallas_call(
        conv_stats_kernel,
        out_shape=(
            jax.ShapeDtypeStruct((N, FLAT_OUT, Cout), jnp.bfloat16),
            jax.ShapeDtypeStruct((N, 1, Cout), jnp.float32),
            jax.ShapeDtypeStruct((N, 1, Cout), jnp.float32),
        ),
        grid_spec=pltpu.PrefetchScalarGridSpec(
            num_scalar_prefetch=0,
            grid=(N,),
            in_specs=[
                pl.BlockSpec((1, FLAT_IN, Cin), lambda n: (n, 0, 0)),
                # constant index_maps -> DMA'd once, VMEM-resident across the grid
                pl.BlockSpec((9, Cin, Cout), lambda n: (0, 0, 0)),
                pl.BlockSpec((FLAT_OUT, 1), lambda n: (0, 0)),
            ],
            out_specs=[
                pl.BlockSpec((1, FLAT_OUT, Cout), lambda n: (n, 0, 0)),
                pl.BlockSpec((1, 1, Cout), lambda n: (n, 0, 0)),
                pl.BlockSpec((1, 1, Cout), lambda n: (n, 0, 0)),
            ],
        ),
        compiler_params=pltpu.CompilerParams(dimension_semantics=("parallel",)),
    )(x_flat, w_taps, valid_mask)

    # ---- per-channel BN statistics (tiny, plain JAX, kept in f32) ------------
    # TODO(synk): running_mean / running_var buffer updates (training-mode side
    # effect of nn.BatchNorm2d) are not carried; only the forward output is.
    count = N * H * W
    mean = jnp.sum(ch_sum, axis=(0, 1)) / count
    var = jnp.sum(ch_sq, axis=(0, 1)) / count - mean * mean    # biased var, as torch BN
    inv_std = jax.lax.rsqrt(var + eps)
    scale = (gamma * inv_std).reshape(1, Cout).astype(jnp.float32)
    shift = (beta - mean * gamma * inv_std).reshape(1, Cout).astype(jnp.float32)

    # ---- pass 2: fused normalize + SiLU, emitting compact NHWC ---------------
    def bn_silu_kernel(y_ref, s_ref, b_ref, o_ref):
        z = y_ref[0].astype(jnp.float32) * s_ref[...] + b_ref[...]
        act = (z * jax.nn.sigmoid(z)).astype(o_ref.dtype)
        for h in range(H):                     # drop the 2 halo scrap columns per row
            o_ref[0, h, :, :] = act[h * Wp:h * Wp + W, :]

    y_nhwc = pl.pallas_call(
        bn_silu_kernel,
        out_shape=jax.ShapeDtypeStruct((N, H, W, Cout), x_nchw.dtype),
        grid_spec=pltpu.PrefetchScalarGridSpec(
            num_scalar_prefetch=0,
            grid=(N,),
            in_specs=[
                pl.BlockSpec((1, FLAT_OUT, Cout), lambda n: (n, 0, 0)),
                pl.BlockSpec((1, Cout), lambda n: (0, 0)),
                pl.BlockSpec((1, Cout), lambda n: (0, 0)),
            ],
            out_specs=pl.BlockSpec((1, H, W, Cout), lambda n: (n, 0, 0, 0)),
        ),
        compiler_params=pltpu.CompilerParams(dimension_semantics=("parallel",)),
    )(y_flat, scale, shift)

    # back to NCHW only at the module edge (an NHWC consumer could skip this)
    return jnp.transpose(y_nhwc, (0, 3, 1, 2))


def _reference_convblock(x_nchw, weight_oihw, gamma, beta, eps=1e-5):
    y = jax.lax.conv_general_dilated(
        x_nchw, weight_oihw, window_strides=(1, 1), padding="SAME",
        dimension_numbers=("NCHW", "OIHW", "NCHW"))
    mean = jnp.mean(y, axis=(0, 2, 3))
    var = jnp.var(y, axis=(0, 2, 3))
    yn = (y - mean[None, :, None, None]) * jax.lax.rsqrt(var + eps)[None, :, None, None]
    yn = yn * gamma[None, :, None, None] + beta[None, :, None, None]
    return yn * jax.nn.sigmoid(yn)


if __name__ == "__main__":
    key = jax.random.PRNGKey(0)
    kx, kw = jax.random.split(key)
    N, Cin, Cout, H, W = 2, 4, 8, 16, 16
    x = jax.random.normal(kx, (N, Cin, H, W), dtype=jnp.float32)
    w = jax.random.normal(kw, (Cout, Cin, 3, 3), dtype=jnp.float32) * 0.2
    gamma = jnp.ones((Cout,), jnp.float32)   # fresh nn.BatchNorm2d weight
    beta = jnp.zeros((Cout,), jnp.float32)   # fresh nn.BatchNorm2d bias

    fwd = jax.jit(convblock_forward)
    out = jax.block_until_ready(fwd(x, w, gamma, beta))

    ref = _reference_convblock(x, w, gamma, beta)
    assert out.shape == (N, Cout, H, W)
    max_err = float(jnp.max(jnp.abs(out - ref)))
    assert jnp.allclose(out, ref, rtol=5e-2, atol=5e-2), max_err
    print("KERNEL_OK")
</pallas_src>

<mosaic_0001>
module attributes {stable_mosaic.version = 11 : i64} {
  func.func @bn_silu_kernel(%arg0: i32, %arg1: memref<1x288x8xbf16, #tpu.memory_space<vmem>>, %arg2: memref<1x8xf32, #tpu.memory_space<vmem>>, %arg3: memref<1x8xf32, #tpu.memory_space<vmem>>, %arg4: memref<1x16x16x8xf32, #tpu.memory_space<vmem>>) attributes {dimension_semantics = [#tpu.dimension_semantics<parallel>], iteration_bounds = array<i64: 2>, scalar_prefetch = 0 : i64, scratch_operands = 0 : i64, tpu.core_type = #tpu.core_type<tc>, window_params = [{transform_indices = @transform_0, window_bounds = array<i64: 1, 288, 8>}, {pipeline_mode = #tpu.pipeline_mode<synchronous>, transform_indices = @transform_1, window_bounds = array<i64: 1, 8>}, {pipeline_mode = #tpu.pipeline_mode<synchronous>, transform_indices = @transform_2, window_bounds = array<i64: 1, 8>}, {transform_indices = @transform_3, window_bounds = array<i64: 1, 16, 16, 8>}]} {
    %c0 = arith.constant 0 : index
    %c0_0 = arith.constant 0 : index
    %c0_1 = arith.constant 0 : index
    %0 = vector.load %arg1[%c0, %c0_0, %c0_1] : memref<1x288x8xbf16, #tpu.memory_space<vmem>>, vector<1x288x8xbf16>
    %1 = vector.shape_cast %0 : vector<1x288x8xbf16> to vector<288x8xbf16>
    %2 = arith.extf %1 : vector<288x8xbf16> to vector<288x8xf32>
    %c0_2 = arith.constant 0 : index
    %c0_3 = arith.constant 0 : index
    %3 = vector.load %arg2[%c0_2, %c0_3] : memref<1x8xf32, #tpu.memory_space<vmem>>, vector<1x8xf32>
    %4 = vector.broadcast %3 : vector<1x8xf32> to vector<288x8xf32>
    %5 = arith.mulf %2, %4 : vector<288x8xf32>
    %c0_4 = arith.constant 0 : index
    %c0_5 = arith.constant 0 : index
    %6 = vector.load %arg3[%c0_4, %c0_5] : memref<1x8xf32, #tpu.memory_space<vmem>>, vector<1x8xf32>
    %7 = vector.broadcast %6 : vector<1x8xf32> to vector<288x8xf32>
    %8 = arith.addf %5, %7 : vector<288x8xf32>
    %9 = arith.negf %8 : vector<288x8xf32>
    %10 = math.exp %9 : vector<288x8xf32>
    %cst = arith.constant 1.000000e+00 : f32
    %11 = vector.broadcast %cst : f32 to vector<288x8xf32>
    %12 = arith.addf %11, %10 : vector<288x8xf32>
    %13 = arith.divf %11, %12 : vector<288x8xf32>
    %14 = arith.mulf %8, %13 : vector<288x8xf32>
    %15 = vector.extract_strided_slice %14 {offsets = [0, 0], sizes = [16, 8], strides = [1, 1]} : vector<288x8xf32> to vector<16x8xf32>
    %c0_6 = arith.constant 0 : index
    %c0_7 = arith.constant 0 : index
    %c0_8 = arith.constant 0 : index
    %c0_9 = arith.constant 0 : index
    %16 = vector.load %arg4[%c0_6, %c0_7, %c0_8, %c0_9] : memref<1x16x16x8xf32, #tpu.memory_space<vmem>>, vector<1x1x16x8xf32>
    %17 = vector.shape_cast %16 : vector<1x1x16x8xf32> to vector<16x8xf32>
    %18 = vector.shape_cast %15 : vector<16x8xf32> to vector<1x1x16x8xf32>
    tpu.vector_store %arg4[%c0_6, %c0_7, %c0_8, %c0_9], %18 {strides = array<i32>} : memref<1x16x16x8xf32, #tpu.memory_space<vmem>>, vector<1x1x16x8xf32>,
    %19 = vector.extract_strided_slice %14 {offsets = [18, 0], sizes = [16, 8], strides = [1, 1]} : vector<288x8xf32> to vector<16x8xf32>
    %c0_10 = arith.constant 0 : index
    %c1 = arith.constant 1 : index
    %c0_11 = arith.constant 0 : index
    %c0_12 = arith.constant 0 : index
    %20 = vector.load %arg4[%c0_10, %c1, %c0_11, %c0_12] : memref<1x16x16x8xf32, #tpu.memory_space<vmem>>, vector<1x1x16x8xf32>
    %21 = vector.shape_cast %20 : vector<1x1x16x8xf32> to vector<16x8xf32>
    %22 = vector.shape_cast %19 : vector<16x8xf32> to vector<1x1x16x8xf32>
    tpu.vector_store %arg4[%c0_10, %c1, %c0_11, %c0_12], %22 {strides = array<i32>} : memref<1x16x16x8xf32, #tpu.memory_space<vmem>>, vector<1x1x16x8xf32>,
    %23 = vector.extract_strided_slice %14 {offsets = [36, 0], sizes = [16, 8], strides = [1, 1]} : vector<288x8xf32> to vector<16x8xf32>
    %c0_13 = arith.constant 0 : index
    %c2 = arith.constant 2 : index
    %c0_14 = arith.constant 0 : index
    %c0_15 = arith.constant 0 : index
    %24 = vector.load %arg4[%c0_13, %c2, %c0_14, %c0_15] : memref<1x16x16x8xf32, #tpu.memory_space<vmem>>, vector<1x1x16x8xf32>
    %25 = vector.shape_cast %24 : vector<1x1x16x8xf32> to vector<16x8xf32>
    %26 = vector.shape_cast %23 : vector<16x8xf32> to vector<1x1x16x8xf32>
    tpu.vector_store %arg4[%c0_13, %c2, %c0_14, %c0_15], %26 {strides = array<i32>} : memref<1x16x16x8xf32, #tpu.memory_space<vmem>>, vector<1x1x16x8xf32>,
    %27 = vector.extract_strided_slice %14 {offsets = [54, 0], sizes = [16, 8], strides = [1, 1]} : vector<288x8xf32> to vector<16x8xf32>
    %c0_16 = arith.constant 0 : index
    %c3 = arith.constant 3 : index
    %c0_17 = arith.constant 0 : index
    %c0_18 = arith.constant 0 : index
    %28 = vector.load %arg4[%c0_16, %c3, %c0_17, %c0_18] : memref<1x16x16x8xf32, #tpu.memory_space<vmem>>, vector<1x1x16x8xf32>
    %29 = vector.shape_cast %28 : vector<1x1x16x8xf32> to vector<16x8xf32>
    %30 = vector.shape_cast %27 : vector<16x8xf32> to vector<1x1x16x8xf32>
    tpu.vector_store %arg4[%c0_16, %c3, %c0_17, %c0_18], %30 {strides = array<i32>} : memref<1x16x16x8xf32, #tpu.memory_space<vmem>>, vector<1x1x16x8xf32>,
    %31 = vector.extract_strided_slice %14 {offsets = [72, 0], sizes = [16, 8], strides = [1, 1]} : vector<288x8xf32> to vector<16x8xf32>
    %c0_19 = arith.constant 0 : index
    %c4 = arith.constant 4 : index
    %c0_20 = arith.constant 0 : index
    %c0_21 = arith.constant 0 : index
    %32 = vector.load %arg4[%c0_19, %c4, %c0_20, %c0_21] : memref<1x16x16x8xf32, #tpu.memory_space<vmem>>, vector<1x1x16x8xf32>
    %33 = vector.shape_cast %32 : vector<1x1x16x8xf32> to vector<16x8xf32>
    %34 = vector.shape_cast %31 : vector<16x8xf32> to vector<1x1x16x8xf32>
    tpu.vector_store %arg4[%c0_19, %c4, %c0_20, %c0_21], %34 {strides = array<i32>} : memref<1x16x16x8xf32, #tpu.memory_space<vmem>>, vector<1x1x16x8xf32>,
    %35 = vector.extract_strided_slice %14 {offsets = [90, 0], sizes = [16, 8], strides = [1, 1]} : vector<288x8xf32> to vector<16x8xf32>
    %c0_22 = arith.constant 0 : index
    %c5 = arith.constant 5 : index
    %c0_23 = arith.constant 0 : index
    %c0_24 = arith.constant 0 : index
    %36 = vector.load %arg4[%c0_22, %c5, %c0_23, %c0_24] : memref<1x16x16x8xf32, #tpu.memory_space<vmem>>, vector<1x1x16x8xf32>
    %37 = vector.shape_cast %36 : vector<1x1x16x8xf32> to vector<16x8xf32>
    %38 = vector.shape_cast %35 : vector<16x8xf32> to vector<1x1x16x8xf32>
    tpu.vector_store %arg4[%c0_22, %c5, %c0_23, %c0_24], %38 {strides = array<i32>} : memref<1x16x16x8xf32, #tpu.memory_space<vmem>>, vector<1x1x16x8xf32>,
    %39 = vector.extract_strided_slice %14 {offsets = [108, 0], sizes = [16, 8], strides = [1, 1]} : vector<288x8xf32> to vector<16x8xf32>
    %c0_25 = arith.constant 0 : index
    %c6 = arith.constant 6 : index
    %c0_26 = arith.constant 0 : index
    %c0_27 = arith.constant 0 : index
    %40 = vector.load %arg4[%c0_25, %c6, %c0_26, %c0_27] : memref<1x16x16x8xf32, #tpu.memory_space<vmem>>, vector<1x1x16x8xf32>
    %41 = vector.shape_cast %40 : vector<1x1x16x8xf32> to vector<16x8xf32>
    %42 = vector.shape_cast %39 : vector<16x8xf32> to vector<1x1x16x8xf32>
    tpu.vector_store %arg4[%c0_25, %c6, %c0_26, %c0_27], %42 {strides = array<i32>} : memref<1x16x16x8xf32, #tpu.memory_space<vmem>>, vector<1x1x16x8xf32>,
    %43 = vector.extract_strided_slice %14 {offsets = [126, 0], sizes = [16, 8], strides = [1, 1]} : vector<288x8xf32> to vector<16x8xf32>
    %c0_28 = arith.constant 0 : index
    %c7 = arith.constant 7 : index
    %c0_29 = arith.constant 0 : index
    %c0_30 = arith.constant 0 : index
    %44 = vector.load %arg4[%c0_28, %c7, %c0_29, %c0_30] : memref<1x16x16x8xf32, #tpu.memory_space<vmem>>, vector<1x1x16x8xf32>
    %45 = vector.shape_cast %44 : vector<1x1x16x8xf32> to vector<16x8xf32>
    %46 = vector.shape_cast %43 : vector<16x8xf32> to vector<1x1x16x8xf32>
    tpu.vector_store %arg4[%c0_28, %c7, %c0_29, %c0_30], %46 {strides = array<i32>} : memref<1x16x16x8xf32, #tpu.memory_space<vmem>>, vector<1x1x16x8xf32>,
    %47 = vector.extract_strided_slice %14 {offsets = [144, 0], sizes = [16, 8], strides = [1, 1]} : vector<288x8xf32> to vector<16x8xf32>
    %c0_31 = arith.constant 0 : index
    %c8 = arith.constant 8 : index
    %c0_32 = arith.constant 0 : index
    %c0_33 = arith.constant 0 : index
    %48 = vector.load %arg4[%c0_31, %c8, %c0_32, %c0_33] : memref<1x16x16x8xf32, #tpu.memory_space<vmem>>, vector<1x1x16x8xf32>
    %49 = vector.shape_cast %48 : vector<1x1x16x8xf32> to vector<16x8xf32>
    %50 = vector.shape_cast %47 : vector<16x8xf32> to vector<1x1x16x8xf32>
    tpu.vector_store %arg4[%c0_31, %c8, %c0_32, %c0_33], %50 {strides = array<i32>} : memref<1x16x16x8xf32, #tpu.memory_space<vmem>>, vector<1x1x16x8xf32>,
    %51 = vector.extract_strided_slice %14 {offsets = [162, 0], sizes = [16, 8], strides = [1, 1]} : vector<288x8xf32> to vector<16x8xf32>
    %c0_34 = arith.constant 0 : index
    %c9 = arith.constant 9 : index
    %c0_35 = arith.constant 0 : index
    %c0_36 = arith.constant 0 : index
    %52 = vector.load %arg4[%c0_34, %c9, %c0_35, %c0_36] : memref<1x16x16x8xf32, #tpu.memory_space<vmem>>, vector<1x1x16x8xf32>
    %53 = vector.shape_cast %52 : vector<1x1x16x8xf32> to vector<16x8xf32>
    %54 = vector.shape_cast %51 : vector<16x8xf32> to vector<1x1x16x8xf32>
    tpu.vector_store %arg4[%c0_34, %c9, %c0_35, %c0_36], %54 {strides = array<i32>} : memref<1x16x16x8xf32, #tpu.memory_space<vmem>>, vector<1x1x16x8xf32>,
    %55 = vector.extract_strided_slice %14 {offsets = [180, 0], sizes = [16, 8], strides = [1, 1]} : vector<288x8xf32> to vector<16x8xf32>
    %c0_37 = arith.constant 0 : index
    %c10 = arith.constant 10 : index
    %c0_38 = arith.constant 0 : index
    %c0_39 = arith.constant 0 : index
    %56 = vector.load %arg4[%c0_37, %c10, %c0_38, %c0_39] : memref<1x16x16x8xf32, #tpu.memory_space<vmem>>, vector<1x1x16x8xf32>
    %57 = vector.shape_cast %56 : vector<1x1x16x8xf32> to vector<16x8xf32>
    %58 = vector.shape_cast %55 : vector<16x8xf32> to vector<1x1x16x8xf32>
    tpu.vector_store %arg4[%c0_37, %c10, %c0_38, %c0_39], %58 {strides = array<i32>} : memref<1x16x16x8xf32, #tpu.memory_space<vmem>>, vector<1x1x16x8xf32>,
    %59 = vector.extract_strided_slice %14 {offsets = [198, 0], sizes = [16, 8], strides = [1, 1]} : vector<288x8xf32> to vector<16x8xf32>
    %c0_40 = arith.constant 0 : index
    %c11 = arith.constant 11 : index
    %c0_41 = arith.constant 0 : index
    %c0_42 = arith.constant 0 : index
    %60 = vector.load %arg4[%c0_40, %c11, %c0_41, %c0_42] : memref<1x16x16x8xf32, #tpu.memory_space<vmem>>, vector<1x1x16x8xf32>
    %61 = vector.shape_cast %60 : vector<1x1x16x8xf32> to vector<16x8xf32>
    %62 = vector.shape_cast %59 : vector<16x8xf32> to vector<1x1x16x8xf32>
    tpu.vector_store %arg4[%c0_40, %c11, %c0_41, %c0_42], %62 {strides = array<i32>} : memref<1x16x16x8xf32, #tpu.memory_space<vmem>>, vector<1x1x16x8xf32>,
    %63 = vector.extract_strided_slice %14 {offsets = [216, 0], sizes = [16, 8], strides = [1, 1]} : vector<288x8xf32> to vector<16x8xf32>
    %c0_43 = arith.constant 0 : index
    %c12 = arith.constant 12 : index
    %c0_44 = arith.constant 0 : index
    %c0_45 = arith.constant 0 : index
    %64 = vector.load %arg4[%c0_43, %c12, %c0_44, %c0_45] : memref<1x16x16x8xf32, #tpu.memory_space<vmem>>, vector<1x1x16x8xf32>
    %65 = vector.shape_cast %64 : vector<1x1x16x8xf32> to vector<16x8xf32>
    %66 = vector.shape_cast %63 : vector<16x8xf32> to vector<1x1x16x8xf32>
    tpu.vector_store %arg4[%c0_43, %c12, %c0_44, %c0_45], %66 {strides = array<i32>} : memref<1x16x16x8xf32, #tpu.memory_space<vmem>>, vector<1x1x16x8xf32>,
    %67 = vector.extract_strided_slice %14 {offsets = [234, 0], sizes = [16, 8], strides = [1, 1]} : vector<288x8xf32> to vector<16x8xf32>
    %c0_46 = arith.constant 0 : index
    %c13 = arith.constant 13 : index
    %c0_47 = arith.constant 0 : index
    %c0_48 = arith.constant 0 : index
    %68 = vector.load %arg4[%c0_46, %c13, %c0_47, %c0_48] : memref<1x16x16x8xf32, #tpu.memory_space<vmem>>, vector<1x1x16x8xf32>
    %69 = vector.shape_cast %68 : vector<1x1x16x8xf32> to vector<16x8xf32>
    %70 = vector.shape_cast %67 : vector<16x8xf32> to vector<1x1x16x8xf32>
    tpu.vector_store %arg4[%c0_46, %c13, %c0_47, %c0_48], %70 {strides = array<i32>} : memref<1x16x16x8xf32, #tpu.memory_space<vmem>>, vector<1x1x16x8xf32>,
    %71 = vector.extract_strided_slice %14 {offsets = [252, 0], sizes = [16, 8], strides = [1, 1]} : vector<288x8xf32> to vector<16x8xf32>
    %c0_49 = arith.constant 0 : index
    %c14 = arith.constant 14 : index
    %c0_50 = arith.constant 0 : index
    %c0_51 = arith.constant 0 : index
    %72 = vector.load %arg4[%c0_49, %c14, %c0_50, %c0_51] : memref<1x16x16x8xf32, #tpu.memory_space<vmem>>, vector<1x1x16x8xf32>
    %73 = vector.shape_cast %72 : vector<1x1x16x8xf32> to vector<16x8xf32>
    %74 = vector.shape_cast %71 : vector<16x8xf32> to vector<1x1x16x8xf32>
    tpu.vector_store %arg4[%c0_49, %c14, %c0_50, %c0_51], %74 {strides = array<i32>} : memref<1x16x16x8xf32, #tpu.memory_space<vmem>>, vector<1x1x16x8xf32>,
    %75 = vector.extract_strided_slice %14 {offsets = [270, 0], sizes = [16, 8], strides = [1, 1]} : vector<288x8xf32> to vector<16x8xf32>
    %c0_52 = arith.constant 0 : index
    %c15 = arith.constant 15 : index
    %c0_53 = arith.constant 0 : index
    %c0_54 = arith.constant 0 : index
    %76 = vector.load %arg4[%c0_52, %c15, %c0_53, %c0_54] : memref<1x16x16x8xf32, #tpu.memory_space<vmem>>, vector<1x1x16x8xf32>
    %77 = vector.shape_cast %76 : vector<1x1x16x8xf32> to vector<16x8xf32>
    %78 = vector.shape_cast %75 : vector<16x8xf32> to vector<1x1x16x8xf32>
    tpu.vector_store %arg4[%c0_52, %c15, %c0_53, %c0_54], %78 {strides = array<i32>} : memref<1x16x16x8xf32, #tpu.memory_space<vmem>>, vector<1x1x16x8xf32>,
    return
  }
  func.func @transform_0(%arg0: i32) -> (i32, i32, i32) {
    %c0_i32 = arith.constant 0 : i32
    %c0_i32_0 = arith.constant 0 : i32
    %c0_i32_1 = arith.constant 0 : i32
    return %arg0, %c0_i32, %c0_i32_0 : i32, i32, i32
  }
  func.func @transform_1(%arg0: i32) -> (i32, i32) {
    %c0_i32 = arith.constant 0 : i32
    %c0_i32_0 = arith.constant 0 : i32
    %c0_i32_1 = arith.constant 0 : i32
    return %c0_i32, %c0_i32_0 : i32, i32
  }
  func.func @transform_2(%arg0: i32) -> (i32, i32) {
    %c0_i32 = arith.constant 0 : i32
    %c0_i32_0 = arith.constant 0 : i32
    %c0_i32_1 = arith.constant 0 : i32
    return %c0_i32, %c0_i32_0 : i32, i32
  }
  func.func @transform_3(%arg0: i32) -> (i32, i32, i32, i32) {
    %c0_i32 = arith.constant 0 : i32
    %c0_i32_0 = arith.constant 0 : i32
    %c0_i32_1 = arith.constant 0 : i32
    %c0_i32_2 = arith.constant 0 : i32
    return %arg0, %c0_i32, %c0_i32_0, %c0_i32_1 : i32, i32, i32, i32
  }
}

module attributes {stable_mosaic.version = 11 : i64} {
  func.func @conv_stats_kernel(%arg0: i32, %arg1: memref<1x326x4xbf16, #tpu.memory_space<vmem>>, %arg2: memref<9x4x8xbf16, #tpu.memory_space<vmem>>, %arg3: memref<288x1xf32, #tpu.memory_space<vmem>>, %arg4: memref<1x288x8xbf16, #tpu.memory_space<vmem>>, %arg5: memref<1x1x8xf32, #tpu.memory_space<vmem>>, %arg6: memref<1x1x8xf32, #tpu.memory_space<vmem>>) attributes {dimension_semantics = [#tpu.dimension_semantics<parallel>], iteration_bounds = array<i64: 2>, scalar_prefetch = 0 : i64, scratch_operands = 0 : i64, tpu.core_type = #tpu.core_type<tc>, window_params = [{transform_indices = @transform_0, window_bounds = array<i64: 1, 326, 4>}, {pipeline_mode = #tpu.pipeline_mode<synchronous>, transform_indices = @transform_1, window_bounds = array<i64: 9, 4, 8>}, {pipeline_mode = #tpu.pipeline_mode<synchronous>, transform_indices = @transform_2, window_bounds = array<i64: 288, 1>}, {transform_indices = @transform_3, window_bounds = array<i64: 1, 288, 8>}, {transform_indices = @transform_4, window_bounds = array<i64: 1, 1, 8>}, {transform_indices = @transform_5, window_bounds = array<i64: 1, 1, 8>}]} {
    %c0 = arith.constant 0 : index
    %c0_0 = arith.constant 0 : index
    %c0_1 = arith.constant 0 : index
    %0 = vector.load %arg1[%c0, %c0_0, %c0_1] : memref<1x326x4xbf16, #tpu.memory_space<vmem>>, vector<1x288x4xbf16>
    %1 = vector.shape_cast %0 : vector<1x288x4xbf16> to vector<288x4xbf16>
    %c0_2 = arith.constant 0 : index
    %c0_3 = arith.constant 0 : index
    %c0_4 = arith.constant 0 : index
    %2 = vector.load %arg2[%c0_2, %c0_3, %c0_4] : memref<9x4x8xbf16, #tpu.memory_space<vmem>>, vector<1x4x8xbf16>
    %3 = vector.shape_cast %2 : vector<1x4x8xbf16> to vector<4x8xbf16>
    %cst = arith.constant dense<0.000000e+00> : vector<288x8xf32>
    %4 = tpu.matmul %1, %3, %cst {dimension_numbers = #tpu.dot_dimension_numbers<[1], [0], [0], [1], [0, 0, 1, 1], [], []>} : vector<288x4xbf16>, vector<4x8xbf16>, vector<288x8xf32> -> vector<288x8xf32>
    %c0_5 = arith.constant 0 : index
    %c1 = arith.constant 1 : index
    %c0_6 = arith.constant 0 : index
    %5 = vector.load %arg1[%c0_5, %c1, %c0_6] : memref<1x326x4xbf16, #tpu.memory_space<vmem>>, vector<1x288x4xbf16>
    %6 = vector.shape_cast %5 : vector<1x288x4xbf16> to vector<288x4xbf16>
    %c1_7 = arith.constant 1 : index
    %c0_8 = arith.constant 0 : index
    %c0_9 = arith.constant 0 : index
    %7 = vector.load %arg2[%c1_7, %c0_8, %c0_9] : memref<9x4x8xbf16, #tpu.memory_space<vmem>>, vector<1x4x8xbf16>
    %8 = vector.shape_cast %7 : vector<1x4x8xbf16> to vector<4x8xbf16>
    %cst_10 = arith.constant dense<0.000000e+00> : vector<288x8xf32>
    %9 = tpu.matmul %6, %8, %cst_10 {dimension_numbers = #tpu.dot_dimension_numbers<[1], [0], [0], [1], [0, 0, 1, 1], [], []>} : vector<288x4xbf16>, vector<4x8xbf16>, vector<288x8xf32> -> vector<288x8xf32>
    %10 = arith.addf %4, %9 : vector<288x8xf32>
    %c0_11 = arith.constant 0 : index
    %c2 = arith.constant 2 : index
    %c0_12 = arith.constant 0 : index
    %11 = vector.load %arg1[%c0_11, %c2, %c0_12] : memref<1x326x4xbf16, #tpu.memory_space<vmem>>, vector<1x288x4xbf16>
    %12 = vector.shape_cast %11 : vector<1x288x4xbf16> to vector<288x4xbf16>
    %c2_13 = arith.constant 2 : index
    %c0_14 = arith.constant 0 : index
    %c0_15 = arith.constant 0 : index
    %13 = vector.load %arg2[%c2_13, %c0_14, %c0_15] : memref<9x4x8xbf16, #tpu.memory_space<vmem>>, vector<1x4x8xbf16>
    %14 = vector.shape_cast %13 : vector<1x4x8xbf16> to vector<4x8xbf16>
    %cst_16 = arith.constant dense<0.000000e+00> : vector<288x8xf32>
    %15 = tpu.matmul %12, %14, %cst_16 {dimension_numbers = #tpu.dot_dimension_numbers<[1], [0], [0], [1], [0, 0, 1, 1], [], []>} : vector<288x4xbf16>, vector<4x8xbf16>, vector<288x8xf32> -> vector<288x8xf32>
    %16 = arith.addf %10, %15 : vector<288x8xf32>
    %c0_17 = arith.constant 0 : index
    %c18 = arith.constant 18 : index
    %c0_18 = arith.constant 0 : index
    %17 = vector.load %arg1[%c0_17, %c18, %c0_18] : memref<1x326x4xbf16, #tpu.memory_space<vmem>>, vector<1x288x4xbf16>
    %18 = vector.shape_cast %17 : vector<1x288x4xbf16> to vector<288x4xbf16>
    %c3 = arith.constant 3 : index
    %c0_19 = arith.constant 0 : index
    %c0_20 = arith.constant 0 : index
    %19 = vector.load %arg2[%c3, %c0_19, %c0_20] : memref<9x4x8xbf16, #tpu.memory_space<vmem>>, vector<1x4x8xbf16>
    %20 = vector.shape_cast %19 : vector<1x4x8xbf16> to vector<4x8xbf16>
    %cst_21 = arith.constant dense<0.000000e+00> : vector<288x8xf32>
    %21 = tpu.matmul %18, %20, %cst_21 {dimension_numbers = #tpu.dot_dimension_numbers<[1], [0], [0], [1], [0, 0, 1, 1], [], []>} : vector<288x4xbf16>, vector<4x8xbf16>, vector<288x8xf32> -> vector<288x8xf32>
    %22 = arith.addf %16, %21 : vector<288x8xf32>
    %c0_22 = arith.constant 0 : index
    %c19 = arith.constant 19 : index
    %c0_23 = arith.constant 0 : index
    %23 = vector.load %arg1[%c0_22, %c19, %c0_23] : memref<1x326x4xbf16, #tpu.memory_space<vmem>>, vector<1x288x4xbf16>
    %24 = vector.shape_cast %23 : vector<1x288x4xbf16> to vector<288x4xbf16>
    %c4 = arith.constant 4 : index
    %c0_24 = arith.constant 0 : index
    %c0_25 = arith.constant 0 : index
    %25 = vector.load %arg2[%c4, %c0_24, %c0_25] : memref<9x4x8xbf16, #tpu.memory_space<vmem>>, vector<1x4x8xbf16>
    %26 = vector.shape_cast %25 : vector<1x4x8xbf16> to vector<4x8xbf16>
    %cst_26 = arith.constant dense<0.000000e+00> : vector<288x8xf32>
    %27 = tpu.matmul %24, %26, %cst_26 {dimension_numbers = #tpu.dot_dimension_numbers<[1], [0], [0], [1], [0, 0, 1, 1], [], []>} : vector<288x4xbf16>, vector<4x8xbf16>, vector<288x8xf32> -> vector<288x8xf32>
    %28 = arith.addf %22, %27 : vector<288x8xf32>
    %c0_27 = arith.constant 0 : index
    %c20 = arith.constant 20 : index
    %c0_28 = arith.constant 0 : index
    %29 = vector.load %arg1[%c0_27, %c20, %c0_28] : memref<1x326x4xbf16, #tpu.memory_space<vmem>>, vector<1x288x4xbf16>
    %30 = vector.shape_cast %29 : vector<1x288x4xbf16> to vector<288x4xbf16>
    %c5 = arith.constant 5 : index
    %c0_29 = arith.constant 0 : index
    %c0_30 = arith.constant 0 : index
    %31 = vector.load %arg2[%c5, %c0_29, %c0_30] : memref<9x4x8xbf16, #tpu.memory_space<vmem>>, vector<1x4x8xbf16>
    %32 = vector.shape_cast %31 : vector<1x4x8xbf16> to vector<4x8xbf16>
    %cst_31 = arith.constant dense<0.000000e+00> : vector<288x8xf32>
    %33 = tpu.matmul %30, %32, %cst_31 {dimension_numbers = #tpu.dot_dimension_numbers<[1], [0], [0], [1], [0, 0, 1, 1], [], []>} : vector<288x4xbf16>, vector<4x8xbf16>, vector<288x8xf32> -> vector<288x8xf32>
    %34 = arith.addf %28, %33 : vector<288x8xf32>
    %c0_32 = arith.constant 0 : index
    %c36 = arith.constant 36 : index
    %c0_33 = arith.constant 0 : index
    %35 = vector.load %arg1[%c0_32, %c36, %c0_33] : memref<1x326x4xbf16, #tpu.memory_space<vmem>>, vector<1x288x4xbf16>
    %36 = vector.shape_cast %35 : vector<1x288x4xbf16> to vector<288x4xbf16>
    %c6 = arith.constant 6 : index
    %c0_34 = arith.constant 0 : index
    %c0_35 = arith.constant 0 : index
    %37 = vector.load %arg2[%c6, %c0_34, %c0_35] : memref<9x4x8xbf16, #tpu.memory_space<vmem>>, vector<1x4x8xbf16>
    %38 = vector.shape_cast %37 : vector<1x4x8xbf16> to vector<4x8xbf16>
    %cst_36 = arith.constant dense<0.000000e+00> : vector<288x8xf32>
    %39 = tpu.matmul %36, %38, %cst_36 {dimension_numbers = #tpu.dot_dimension_numbers<[1], [0], [0], [1], [0, 0, 1, 1], [], []>} : vector<288x4xbf16>, vector<4x8xbf16>, vector<288x8xf32> -> vector<288x8xf32>
    %40 = arith.addf %34, %39 : vector<288x8xf32>
    %c0_37 = arith.constant 0 : index
    %c37 = arith.constant 37 : index
    %c0_38 = arith.constant 0 : index
    %41 = vector.load %arg1[%c0_37, %c37, %c0_38] : memref<1x326x4xbf16, #tpu.memory_space<vmem>>, vector<1x288x4xbf16>
    %42 = vector.shape_cast %41 : vector<1x288x4xbf16> to vector<288x4xbf16>
    %c7 = arith.constant 7 : index
    %c0_39 = arith.constant 0 : index
    %c0_40 = arith.constant 0 : index
    %43 = vector.load %arg2[%c7, %c0_39, %c0_40] : memref<9x4x8xbf16, #tpu.memory_space<vmem>>, vector<1x4x8xbf16>
    %44 = vector.shape_cast %43 : vector<1x4x8xbf16> to vector<4x8xbf16>
    %cst_41 = arith.constant dense<0.000000e+00> : vector<288x8xf32>
    %45 = tpu.matmul %42, %44, %cst_41 {dimension_numbers = #tpu.dot_dimension_numbers<[1], [0], [0], [1], [0, 0, 1, 1], [], []>} : vector<288x4xbf16>, vector<4x8xbf16>, vector<288x8xf32> -> vector<288x8xf32>
    %46 = arith.addf %40, %45 : vector<288x8xf32>
    %c0_42 = arith.constant 0 : index
    %c38 = arith.constant 38 : index
    %c0_43 = arith.constant 0 : index
    %47 = vector.load %arg1[%c0_42, %c38, %c0_43] : memref<1x326x4xbf16, #tpu.memory_space<vmem>>, vector<1x288x4xbf16>
    %48 = vector.shape_cast %47 : vector<1x288x4xbf16> to vector<288x4xbf16>
    %c8 = arith.constant 8 : index
    %c0_44 = arith.constant 0 : index
    %c0_45 = arith.constant 0 : index
    %49 = vector.load %arg2[%c8, %c0_44, %c0_45] : memref<9x4x8xbf16, #tpu.memory_space<vmem>>, vector<1x4x8xbf16>
    %50 = vector.shape_cast %49 : vector<1x4x8xbf16> to vector<4x8xbf16>
    %cst_46 = arith.constant dense<0.000000e+00> : vector<288x8xf32>
    %51 = tpu.matmul %48, %50, %cst_46 {dimension_numbers = #tpu.dot_dimension_numbers<[1], [0], [0], [1], [0, 0, 1, 1], [], []>} : vector<288x4xbf16>, vector<4x8xbf16>, vector<288x8xf32> -> vector<288x8xf32>
    %52 = arith.addf %46, %51 : vector<288x8xf32>
    %53 = arith.truncf %52 : vector<288x8xf32> to vector<288x8xbf16>
    %c0_47 = arith.constant 0 : index
    %c0_48 = arith.constant 0 : index
    %c0_49 = arith.constant 0 : index
    %54 = vector.load %arg4[%c0_47, %c0_48, %c0_49] : memref<1x288x8xbf16, #tpu.memory_space<vmem>>, vector<1x288x8xbf16>
    %55 = vector.shape_cast %54 : vector<1x288x8xbf16> to vector<288x8xbf16>
    %56 = vector.shape_cast %53 : vector<288x8xbf16> to vector<1x288x8xbf16>
    tpu.vector_store %arg4[%c0_47, %c0_48, %c0_49], %56 {strides = array<i32>} : memref<1x288x8xbf16, #tpu.memory_space<vmem>>, vector<1x288x8xbf16>,
    %c0_50 = arith.constant 0 : index
    %c0_51 = arith.constant 0 : index
    %57 = vector.load %arg3[%c0_50, %c0_51] : memref<288x1xf32, #tpu.memory_space<vmem>>, vector<288x1xf32>
    %58 = vector.broadcast %57 : vector<288x1xf32> to vector<288x8xf32>
    %59 = arith.mulf %52, %58 : vector<288x8xf32>
    %cst_52 = arith.constant dense<0.000000e+00> : vector<8xf32>
    %60 = vector.multi_reduction <add>, %59, %cst_52 [0] : vector<288x8xf32> to vector<8xf32>
    %61 = vector.shape_cast %60 : vector<8xf32> to vector<1x8xf32>
    %c0_53 = arith.constant 0 : index
    %c0_54 = arith.constant 0 : index
    %c0_55 = arith.constant 0 : index
    %62 = vector.load %arg5[%c0_53, %c0_54, %c0_55] : memref<1x1x8xf32, #tpu.memory_space<vmem>>, vector<1x1x8xf32>
    %63 = vector.shape_cast %62 : vector<1x1x8xf32> to vector<1x8xf32>
    %64 = vector.shape_cast %61 : vector<1x8xf32> to vector<1x1x8xf32>
    tpu.vector_store %arg5[%c0_53, %c0_54, %c0_55], %64 {strides = array<i32>} : memref<1x1x8xf32, #tpu.memory_space<vmem>>, vector<1x1x8xf32>,
    %65 = arith.mulf %59, %59 : vector<288x8xf32>
    %cst_56 = arith.constant dense<0.000000e+00> : vector<8xf32>
    %66 = vector.multi_reduction <add>, %65, %cst_56 [0] : vector<288x8xf32> to vector<8xf32>
    %67 = vector.shape_cast %66 : vector<8xf32> to vector<1x8xf32>
    %c0_57 = arith.constant 0 : index
    %c0_58 = arith.constant 0 : index
    %c0_59 = arith.constant 0 : index
    %68 = vector.load %arg6[%c0_57, %c0_58, %c0_59] : memref<1x1x8xf32, #tpu.memory_space<vmem>>, vector<1x1x8xf32>
    %69 = vector.shape_cast %68 : vector<1x1x8xf32> to vector<1x8xf32>
    %70 = vector.shape_cast %67 : vector<1x8xf32> to vector<1x1x8xf32>
    tpu.vector_store %arg6[%c0_57, %c0_58, %c0_59], %70 {strides = array<i32>} : memref<1x1x8xf32, #tpu.memory_space<vmem>>, vector<1x1x8xf32>,
    return
  }
  func.func @transform_0(%arg0: i32) -> (i32, i32, i32) {
    %c0_i32 = arith.constant 0 : i32
    %c0_i32_0 = arith.constant 0 : i32
    %c0_i32_1 = arith.constant 0 : i32
    return %arg0, %c0_i32, %c0_i32_0 : i32, i32, i32
  }
  func.func @transform_1(%arg0: i32) -> (i32, i32, i32) {
    %c0_i32 = arith.constant 0 : i32
    %c0_i32_0 = arith.constant 0 : i32
    %c0_i32_1 = arith.constant 0 : i32
    %c0_i32_2 = arith.constant 0 : i32
    return %c0_i32, %c0_i32_0, %c0_i32_1 : i32, i32, i32
  }
  func.func @transform_2(%arg0: i32) -> (i32, i32) {
    %c0_i32 = arith.constant 0 : i32
    %c0_i32_0 = arith.constant 0 : i32
    %c0_i32_1 = arith.constant 0 : i32
    return %c0_i32, %c0_i32_0 : i32, i32
  }
  func.func @transform_3(%arg0: i32) -> (i32, i32, i32) {
    %c0_i32 = arith.constant 0 : i32
    %c0_i32_0 = arith.constant 0 : i32
    %c0_i32_1 = arith.constant 0 : i32
    return %arg0, %c0_i32, %c0_i32_0 : i32, i32, i32
  }
  func.func @transform_4(%arg0: i32) -> (i32, i32, i32) {
    %c0_i32 = arith.constant 0 : i32
    %c0_i32_0 = arith.constant 0 : i32
    %c0_i32_1 = arith.constant 0 : i32
    return %arg0, %c0_i32, %c0_i32_0 : i32, i32, i32
  }
  func.func @transform_5(%arg0: i32) -> (i32, i32, i32) {
    %c0_i32 = arith.constant 0 : i32
    %c0_i32_0 = arith.constant 0 : i32
    %c0_i32_1 = arith.constant 0 : i32
    return %arg0, %c0_i32, %c0_i32_0 : i32, i32, i32
  }
}

</mosaic_0001>

<llo_original>
// kernel: convblock_forward.3
$region0: #{convblock_forward.3}
  #allocation0 [shape = 'u32[]', space=smem, size = 0x4, offset = 0x4, fixed_abs, tag = 'smem constant byte address 0x4 - core index']
  #allocation1 [shape = 'u32[144,128]{1,0:T(1,128)}', space=vmem, size = 0x12000, scoped, tag = 'internal scratch']
  %s0 = inlined_call_operand.vmem [shape: bf16[2,288,8], index: 0, kind: input, shape index: {}]
  %s1 = inlined_call_operand.vmem [shape: f32[1,8], index: 1, kind: input, shape index: {}]
  %s2 = inlined_call_operand.vmem [shape: f32[1,8], index: 2, kind: input, shape index: {}]
  %s3 = inlined_call_operand.vmem [shape: f32[2,16,16,8], index: 3, kind: output, shape index: {}]
  %s4 = sld [smem:[#allocation0]]
  $region45: #{convblock_forward.3} parent=0
    _
  %s6 = ssub.s32 1, %s4
  %s7 = scalar_select 0, %s6, %s4
  loop: start=0, step=1, limit=4
  $region2: #{convblock_forward.3} parent=0 // loop_pre_header
    _
  $region3: #{convblock_forward.3} parent=0 // loop_header
    %s9 = sphi 0, %s13
    %p10 = scmp.ge.s32.totalorder %s9, 4
    %s19 = sphi 0, %s21
    %s22 = sphi 0, %s19
    %s23 = sphi 0, %s22
    %s39 = sphi 0, %s23
    %s43 = sphi 0, %s43
    %s45 = sphi 0, %s43
    %s46 = sphi 0, %s45
    %s60 = sphi 0, %s46
    %s64 = sphi 0, %s64
    %s66 = sphi 0, %s64
    %s67 = sphi 0, %s66
    %s81 = sphi 0, %s67
    %s87 = sphi 0, %s89
    %s90 = sphi 0, %s87
    %s91 = sphi 0, %s90
    %s107 = sphi 0, %s91
  $region4: #{convblock_forward.3} parent=0 // loop_header_branch
    %12 = sbr.rel (%p10) target = $region8
  $region5: #{convblock_forward.3} parent=0 // loop_body
    %s14 = ssub.s32 %s9, 1
    %s15 = ssub.s32 %s9, 2
    %s16 = sadd.s32 %s9, 1
    %s17 = ssub.s32 %s9, %s16
    %p18 = scmp.eq.s32.totalorder %s17, 0
    %s20 = sadd.s32 %s19, 1
    %s21 = scalar_select %p18, %s19, %s20
    %p24 = pneg %p18
    %p25 = scmp.eq.s32.totalorder %s9, 1
    %p26 = por %p24, %p25
    %p27 = scmp.ne.s32.totalorder %s19, %s22
    %p28 = scmp.eq.s32.totalorder %s9, 0
    %p29 = por %p27, %p28
    %p30 = scmp.ne.s32.totalorder %s19, %s22
    %p31 = scmp.eq.s32.totalorder %s14, 1
    %p32 = por %p30, %p31
    %p33 = scmp.ne.s32.totalorder %s22, %s23
    %p34 = scmp.eq.s32.totalorder %s14, 0
    %p35 = por %p33, %p34
    %p36 = scmp.ne.s32.totalorder %s22, %s23
    %p37 = scmp.eq.s32.totalorder %s15, 1
    %p38 = por %p36, %p37
    %p40 = scmp.ne.s32.totalorder %s23, %s39
    %p41 = scmp.eq.s32.totalorder %s15, 0
    %p42 = por %p40, %p41
    %s44 = sadd.s32 %s43, 1
    %p47 = scmp.eq.s32.totalorder %s9, 1
    %p48 = scmp.ne.s32.totalorder %s43, %s45
    %p49 = scmp.eq.s32.totalorder %s9, 0
    %p50 = por %p48, %p49
    %p51 = scmp.ne.s32.totalorder %s43, %s45
    %p52 = scmp.eq.s32.totalorder %s14, 1
    %p53 = por %p51, %p52
    %p54 = scmp.ne.s32.totalorder %s45, %s46
    %p55 = scmp.eq.s32.totalorder %s14, 0
    %p56 = por %p54, %p55
    %p57 = scmp.ne.s32.totalorder %s45, %s46
    %p58 = scmp.eq.s32.totalorder %s15, 1
    %p59 = por %p57, %p58
    %p61 = scmp.ne.s32.totalorder %s46, %s60
    %p62 = scmp.eq.s32.totalorder %s15, 0
    %p63 = por %p61, %p62
    %s65 = sadd.s32 %s64, 1
    %p68 = scmp.eq.s32.totalorder %s9, 1
    %p69 = scmp.ne.s32.totalorder %s64, %s66
    %p70 = scmp.eq.s32.totalorder %s9, 0
    %p71 = por %p69, %p70
    %p72 = scmp.ne.s32.totalorder %s64, %s66
    %p73 = scmp.eq.s32.totalorder %s14, 1
    %p74 = por %p72, %p73
    %p75 = scmp.ne.s32.totalorder %s66, %s67
    %p76 = scmp.eq.s32.totalorder %s14, 0
    %p77 = por %p75, %p76
    %p78 = scmp.ne.s32.totalorder %s66, %s67
    %p79 = scmp.eq.s32.totalorder %s15, 1
    %p80 = por %p78, %p79
    %p82 = scmp.ne.s32.totalorder %s67, %s81
    %p83 = scmp.eq.s32.totalorder %s15, 0
    %p84 = por %p82, %p83
    %s85 = ssub.s32 %s9, %s16
    %p86 = scmp.eq.s32.totalorder %s85, 0
    %s88 = sadd.s32 %s87, 1
    %s89 = scalar_select %p86, %s87, %s88
    %p92 = pneg %p86
    %p93 = scmp.eq.s32.totalorder %s9, 1
    %p94 = por %p92, %p93
    %p95 = scmp.ne.s32.totalorder %s87, %s90
    %p96 = scmp.eq.s32.totalorder %s9, 0
    %p97 = por %p95, %p96
    %p98 = scmp.ne.s32.totalorder %s87, %s90
    %p99 = scmp.eq.s32.totalorder %s14, 1
    %p100 = por %p98, %p99
    %p101 = scmp.ne.s32.totalorder %s90, %s91
    %p102 = scmp.eq.s32.totalorder %s14, 0
    %p103 = por %p101, %p102
    %p104 = scmp.ne.s32.totalorder %s90, %s91
    %p105 = scmp.eq.s32.totalorder %s15, 1
    %p106 = por %p104, %p105
    %p108 = scmp.ne.s32.totalorder %s91, %s107
    %p109 = scmp.eq.s32.totalorder %s15, 0
    %p110 = por %p108, %p109
    %p111 = scmp.le.s32.totalorder 1, %s9
    %p112 = scmp.lt.s32.totalorder %s9, 3
    %p113 = pnand %p111, %p112
    %p114 = pneg %p113
    // Predicated region
    $region9: #{convblock_forward.3} parent=5 // pred_check
      _
    $region10: #{convblock_forward.3} parent=5 // pred_check_branch
      %116 = sbr.rel (%p113) target = $region12
    $region11: #{convblock_forward.3} parent=5 // pred_region
      %s117 = ssub.s32 %s9, 1
      // Predicated region
      $region13: #{convblock_forward.3} parent=11 // pred_check
        %p118 = pneg %p56
      $region14: #{convblock_forward.3} parent=11 // pred_check_branch
        %120 = sbr.rel (%p118) target = $region16
      $region15: #{convblock_forward.3} parent=11 // pred_region
        _
      $region16: #{convblock_forward.3} parent=11 // pred_fallthru
        _
      // Predicated region
      $region17: #{convblock_forward.3} parent=11 // pred_check
        %p121 = pneg %p77
      $region18: #{convblock_forward.3} parent=11 // pred_check_branch
        %123 = sbr.rel (%p121) target = $region20
      $region19: #{convblock_forward.3} parent=11 // pred_region
        _
      $region20: #{convblock_forward.3} parent=11 // pred_fallthru
        _
    $region12: #{convblock_forward.3} parent=5 // pred_fallthru
      _
    %p124 = scmp.lt.s32.totalorder %s9, 2
    // Predicated region
    $region21: #{convblock_forward.3} parent=5 // pred_check
      %p125 = pneg %p124
    $region22: #{convblock_forward.3} parent=5 // pred_check_branch
      %127 = sbr.rel (%p125) target = $region24
    $region23: #{convblock_forward.3} parent=5 // pred_region
      // Predicated region
      $region25: #{convblock_forward.3} parent=23 // pred_check
        %p128 = pneg %p29
      $region26: #{convblock_forward.3} parent=23 // pred_check_branch
        %130 = sbr.rel (%p128) target = $region28
      $region27: #{convblock_forward.3} parent=23 // pred_region
        %p131 = scmp.lt.s32.totalorder %s9, 1
        %s132 = scalar_select %p131, %s9, 1
        %s133 = smul.addr %s132, 36
        %s134 = smul.addr %s133, 4
        %s135 = scalar_lea.vmem %s0, %s134
      $region28: #{convblock_forward.3} parent=23 // pred_fallthru
        _
    $region24: #{convblock_forward.3} parent=5 // pred_fallthru
      _
    %p136 = scmp.le.s32.totalorder 1, %s9
    %p137 = scmp.lt.s32.totalorder %s9, 3
    %p138 = pnand %p136, %p137
    %p139 = pneg %p138
    // Predicated region
    $region29: #{convblock_forward.3} parent=5 // pred_check
      _
    $region30: #{convblock_forward.3} parent=5 // pred_check_branch
      %141 = sbr.rel (%p138) target = $region32
    $region31: #{convblock_forward.3} parent=5 // pred_region
      %s142 = ssub.s32 %s9, 1
      %p143 = scmp.lt.s32.totalorder %s14, 1
      %s144 = scalar_select %p143, %s14, 1
      %s145 = smul.addr %s144, 36
      %s146 = smul.addr %s145, 4
      %s147 = scalar_lea.vmem %s0, %s146
      %p148 = pneg %p35
      %p149 = pneg %p32
      %p150 = pneg %p56
      %p151 = pneg %p53
      %p152 = pneg %p77
      %p153 = pneg %p74
      %p154 = pneg %p103
      %p155 = pneg %p100
      %p156 = scmp.lt.s32.totalorder %s14, 1
      %s157 = scalar_select %p156, %s14, 1
      %s158 = smul.addr %s157, 32
      %s159 = smul.addr %s158, 8
      %s160 = scalar_lea.vmem %s3, %s159
      %p161 = scmp.lt.s32.totalorder %s14, 1
      %s162 = scalar_select %p161, %s14, 1
      %s163 = smul.addr %s162, 36
      %s164 = smul.addr %s163, 4
      %s165 = scalar_lea.vmem %s0, %s164
      %p166 = scmp.lt.s32.totalorder %s14, 1
      %s167 = scalar_select %p166, %s14, 1
      %s168 = smul.addr %s167, 32
      %s169 = smul.addr %s168, 8
      %s170 = scalar_lea.vmem %s3, %s169
      %v171 = vld [vmem:[%s165] sm:$0xf]
      %v172 = vld [vmem:[%s165 + $0x4] sm:$0xf]
      %v173 = vld [vmem:[%s165 + $0x8] sm:$0xf]
      %v174 = vld [vmem:[%s165 + $0xc] sm:$0xf]
      %v175 = vld [vmem:[%s165 + $0x10] sm:$0xf]
      %v176 = vld [vmem:[%s165 + $0x14] sm:$0xf]
      %v177 = vld [vmem:[%s165 + $0x18] sm:$0xf]
      %v178 = vld [vmem:[%s165 + $0x1c] sm:$0xf]
      %v179 = vld [vmem:[%s165 + $0x20] sm:$0xf]
      %v180 = vld [vmem:[%s165 + $0x24] sm:$0xf]
      %v181 = vld [vmem:[%s165 + $0x28] sm:$0xf]
      %v182 = vld [vmem:[%s165 + $0x2c] sm:$0xf]
      %v183 = vld [vmem:[%s165 + $0x30] sm:$0xf]
      %v184 = vld [vmem:[%s165 + $0x34] sm:$0xf]
      %v185 = vld [vmem:[%s165 + $0x38] sm:$0xf]
      %v186 = vld [vmem:[%s165 + $0x3c] sm:$0xf]
      %v187 = vld [vmem:[%s165 + $0x40] sm:$0xf]
      %v188 = vld [vmem:[%s165 + $0x44] sm:$0xf]
      %v189 = vld [vmem:[%s165 + $0x48] sm:$0xf]
      %v190 = vld [vmem:[%s165 + $0x4c] sm:$0xf]
      %v191 = vld [vmem:[%s165 + $0x50] sm:$0xf]
      %v192 = vld [vmem:[%s165 + $0x54] sm:$0xf]
      %v193 = vld [vmem:[%s165 + $0x58] sm:$0xf]
      %v194 = vld [vmem:[%s165 + $0x5c] sm:$0xf]
      %v195 = vld [vmem:[%s165 + $0x60] sm:$0xf]
      %v196 = vld [vmem:[%s165 + $0x64] sm:$0xf]
      %v197 = vld [vmem:[%s165 + $0x68] sm:$0xf]
      %v198 = vld [vmem:[%s165 + $0x6c] sm:$0xf]
      %v199 = vld [vmem:[%s165 + $0x70] sm:$0xf]
      %v200 = vld [vmem:[%s165 + $0x74] sm:$0xf]
      %v201 = vld [vmem:[%s165 + $0x78] sm:$0xf]
      %v202 = vld [vmem:[%s165 + $0x7c] sm:$0xf]
      %v203 = vld [vmem:[%s165 + $0x80] sm:$0xf]
      %v204 = vld [vmem:[%s165 + $0x84] sm:$0xf]
      %v205 = vld [vmem:[%s165 + $0x88] sm:$0xf]
      %v206 = vld [vmem:[%s165 + $0x8c] sm:$0xf]
      %v207 = vunpack.c.l.bf16 %v171
      %v208 = vunpack.c.l.bf16 %v172
      %v209 = vunpack.c.l.bf16 %v173
      %v210 = vunpack.c.l.bf16 %v174
      %v211 = vunpack.c.l.bf16 %v175
      %v212 = vunpack.c.l.bf16 %v176
      %v213 = vunpack.c.l.bf16 %v177
      %v214 = vunpack.c.l.bf16 %v178
      %v215 = vunpack.c.l.bf16 %v179
      %v216 = vunpack.c.l.bf16 %v180
      %v217 = vunpack.c.l.bf16 %v181
      %v218 = vunpack.c.l.bf16 %v182
      %v219 = vunpack.c.l.bf16 %v183
      %v220 = vunpack.c.l.bf16 %v184
      %v221 = vunpack.c.l.bf16 %v185
      %v222 = vunpack.c.l.bf16 %v186
      %v223 = vunpack.c.l.bf16 %v187
      %v224 = vunpack.c.l.bf16 %v188
      %v225 = vunpack.c.l.bf16 %v189
      %v226 = vunpack.c.l.bf16 %v190
      %v227 = vunpack.c.l.bf16 %v191
      %v228 = vunpack.c.l.bf16 %v192
      %v229 = vunpack.c.l.bf16 %v193
      %v230 = vunpack.c.l.bf16 %v194
      %v231 = vunpack.c.l.bf16 %v195
      %v232 = vunpack.c.l.bf16 %v196
      %v233 = vunpack.c.l.bf16 %v197
      %v234 = vunpack.c.l.bf16 %v198
      %v235 = vunpack.c.l.bf16 %v199
      %v236 = vunpack.c.l.bf16 %v200
      %v237 = vunpack.c.l.bf16 %v201
      %v238 = vunpack.c.l.bf16 %v202
      %v239 = vunpack.c.l.bf16 %v203
      %v240 = vunpack.c.l.bf16 %v204
      %v241 = vunpack.c.l.bf16 %v205
      %v242 = vunpack.c.l.bf16 %v206
      %v243 = vld [vmem:[%s1] sm:$0x1]
      %v245 = vlaneseq
      %v246 = vshrl.u32 %v245, 7
      %v247 = vsub.s32 0, %v246
      %v248 = vrot.slane %v243, %v247
      %v250 = vmul.f32 %v207, %v248
      %v251 = vmul.f32 %v208, %v248
      %v252 = vmul.f32 %v209, %v248
      %v253 = vmul.f32 %v210, %v248
      %v254 = vmul.f32 %v211, %v248
      %v255 = vmul.f32 %v212, %v248
      %v256 = vmul.f32 %v213, %v248
      %v257 = vmul.f32 %v214, %v248
      %v258 = vmul.f32 %v215, %v248
      %v259 = vmul.f32 %v216, %v248
      %v260 = vmul.f32 %v217, %v248
      %v261 = vmul.f32 %v218, %v248
      %v262 = vmul.f32 %v219, %v248
      %v263 = vmul.f32 %v220, %v248
      %v264 = vmul.f32 %v221, %v248
      %v265 = vmul.f32 %v222, %v248
      %v266 = vmul.f32 %v223, %v248
      %v267 = vmul.f32 %v224, %v248
      %v268 = vmul.f32 %v225, %v248
      %v269 = vmul.f32 %v226, %v248
      %v270 = vmul.f32 %v227, %v248
      %v271 = vmul.f32 %v228, %v248
      %v272 = vmul.f32 %v229, %v248
      %v273 = vmul.f32 %v230, %v248
      %v274 = vmul.f32 %v231, %v248
      %v275 = vmul.f32 %v232, %v248
      %v276 = vmul.f32 %v233, %v248
      %v277 = vmul.f32 %v234, %v248
      %v278 = vmul.f32 %v235, %v248
      %v279 = vmul.f32 %v236, %v248
      %v280 = vmul.f32 %v237, %v248
      %v281 = vmul.f32 %v238, %v248
      %v282 = vmul.f32 %v239, %v248
      %v283 = vmul.f32 %v240, %v248
      %v284 = vmul.f32 %v241, %v248
      %v285 = vmul.f32 %v242, %v248
      %v286 = vld [vmem:[%s2] sm:$0x1]
      %v288 = vlaneseq
      %v289 = vshrl.u32 %v288, 7
      %v290 = vsub.s32 0, %v289
      %v291 = vrot.slane %v286, %v290
      %v293 = vadd.f32 %v250, %v291
      %v294 = vadd.f32 %v251, %v291
      %v295 = vadd.f32 %v252, %v291
      %v296 = vadd.f32 %v253, %v291
      %v297 = vadd.f32 %v254, %v291
      %v298 = vadd.f32 %v255, %v291
      %v299 = vadd.f32 %v256, %v291
      %v300 = vadd.f32 %v257, %v291
      %v301 = vadd.f32 %v258, %v291
      %v302 = vadd.f32 %v259, %v291
      %v303 = vadd.f32 %v260, %v291
      %v304 = vadd.f32 %v261, %v291
      %v305 = vadd.f32 %v262, %v291
      %v306 = vadd.f32 %v263, %v291
      %v307 = vadd.f32 %v264, %v291
      %v308 = vadd.f32 %v265, %v291
      %v309 = vadd.f32 %v266, %v291
      %v310 = vadd.f32 %v267, %v291
      %v311 = vadd.f32 %v268, %v291
      %v312 = vadd.f32 %v269, %v291
      %v313 = vadd.f32 %v270, %v291
      %v314 = vadd.f32 %v271, %v291
      %v315 = vadd.f32 %v272, %v291
      %v316 = vadd.f32 %v273, %v291
      %v317 = vadd.f32 %v274, %v291
      %v318 = vadd.f32 %v275, %v291
      %v319 = vadd.f32 %v276, %v291
      %v320 = vadd.f32 %v277, %v291
      %v321 = vadd.f32 %v278, %v291
      %v322 = vadd.f32 %v279, %v291
      %v323 = vadd.f32 %v280, %v291
      %v324 = vadd.f32 %v281, %v291
      %v325 = vadd.f32 %v282, %v291
      %v326 = vadd.f32 %v283, %v291
      %v327 = vadd.f32 %v284, %v291
      %v328 = vadd.f32 %v285, %v291
      %v329 = vxor.u32 %v293, 2147483648
      %v330 = vxor.u32 %v294, 2147483648
      %v331 = vxor.u32 %v295, 2147483648
      %v332 = vxor.u32 %v296, 2147483648
      %v333 = vxor.u32 %v297, 2147483648
      %v334 = vxor.u32 %v298, 2147483648
      %v335 = vxor.u32 %v299, 2147483648
      %v336 = vxor.u32 %v300, 2147483648
      %v337 = vxor.u32 %v301, 2147483648
      %v338 = vxor.u32 %v302, 2147483648
      %v339 = vxor.u32 %v303, 2147483648
      %v340 = vxor.u32 %v304, 2147483648
      %v341 = vxor.u32 %v305, 2147483648
      %v342 = vxor.u32 %v306, 2147483648
      %v343 = vxor.u32 %v307, 2147483648
      %v344 = vxor.u32 %v308, 2147483648
      %v345 = vxor.u32 %v309, 2147483648
      %v346 = vxor.u32 %v310, 2147483648
      %v347 = vxor.u32 %v311, 2147483648
      %v348 = vxor.u32 %v312, 2147483648
      %v349 = vxor.u32 %v313, 2147483648
      %v350 = vxor.u32 %v314, 2147483648
      %v351 = vxor.u32 %v315, 2147483648
      %v352 = vxor.u32 %v316, 2147483648
      %v353 = vxor.u32 %v317, 2147483648
      %v354 = vxor.u32 %v318, 2147483648
      %v355 = vxor.u32 %v319, 2147483648
      %v356 = vxor.u32 %v320, 2147483648
      %v357 = vxor.u32 %v321, 2147483648
      %v358 = vxor.u32 %v322, 2147483648
      %v359 = vxor.u32 %v323, 2147483648
      %v360 = vxor.u32 %v324, 2147483648
      %v361 = vxor.u32 %v325, 2147483648
      %v362 = vxor.u32 %v326, 2147483648
      %v363 = vxor.u32 %v327, 2147483648
      %v364 = vxor.u32 %v328, 2147483648
      %v365 = vmul.f32 %v329, 1.442695
      %v366 = vpow.pop %v365
      %v367 = vmul.f32 %v330, 1.442695
      %v368 = vpow.pop %v367
      %v369 = vmul.f32 %v331, 1.442695
      %v370 = vpow.pop %v369
      %v371 = vmul.f32 %v332, 1.442695
      %v372 = vpow.pop %v371
      %v373 = vmul.f32 %v333, 1.442695
      %v374 = vpow.pop %v373
      %v375 = vmul.f32 %v334, 1.442695
      %v376 = vpow.pop %v375
      %v377 = vmul.f32 %v335, 1.442695
      %v378 = vpow.pop %v377
      %v379 = vmul.f32 %v336, 1.442695
      %v380 = vpow.pop %v379
      %v381 = vmul.f32 %v337, 1.442695
      %v382 = vpow.pop %v381
      %v383 = vmul.f32 %v338, 1.442695
      %v384 = vpow.pop %v383
      %v385 = vmul.f32 %v339, 1.442695
      %v386 = vpow.pop %v385
      %v387 = vmul.f32 %v340, 1.442695
      %v388 = vpow.pop %v387
      %v389 = vmul.f32 %v341, 1.442695
      %v390 = vpow.pop %v389
      %v391 = vmul.f32 %v342, 1.442695
      %v392 = vpow.pop %v391
      %v393 = vmul.f32 %v343, 1.442695
      %v394 = vpow.pop %v393
      %v395 = vmul.f32 %v344, 1.442695
      %v396 = vpow.pop %v395
      %v397 = vmul.f32 %v345, 1.442695
      %v398 = vpow.pop %v397
      %v399 = vmul.f32 %v346, 1.442695
      %v400 = vpow.pop %v399
      %v401 = vmul.f32 %v347, 1.442695
      %v402 = vpow.pop %v401
      %v403 = vmul.f32 %v348, 1.442695
      %v404 = vpow.pop %v403
      %v405 = vmul.f32 %v349, 1.442695
      %v406 = vpow.pop %v405
      %v407 = vmul.f32 %v350, 1.442695
      %v408 = vpow.pop %v407
      %v409 = vmul.f32 %v351, 1.442695
      %v410 = vpow.pop %v409
      %v411 = vmul.f32 %v352, 1.442695
      %v412 = vpow.pop %v411
      %v413 = vmul.f32 %v353, 1.442695
      %v414 = vpow.pop %v413
      %v415 = vmul.f32 %v354, 1.442695
      %v416 = vpow.pop %v415
      %v417 = vmul.f32 %v355, 1.442695
      %v418 = vpow.pop %v417
      %v419 = vmul.f32 %v356, 1.442695
      %v420 = vpow.pop %v419
      %v421 = vmul.f32 %v357, 1.442695
      %v422 = vpow.pop %v421
      %v423 = vmul.f32 %v358, 1.442695
      %v424 = vpow.pop %v423
      %v425 = vmul.f32 %v359, 1.442695
      %v426 = vpow.pop %v425
      %v427 = vmul.f32 %v360, 1.442695
      %v428 = vpow.pop %v427
      %v429 = vmul.f32 %v361, 1.442695
      %v430 = vpow.pop %v429
      %v431 = vmul.f32 %v362, 1.442695
      %v432 = vpow.pop %v431
      %v433 = vmul.f32 %v363, 1.442695
      %v434 = vpow.pop %v433
      %v435 = vmul.f32 %v364, 1.442695
      %v436 = vpow.pop %v435
      %v437 = vadd.f32 %v366, 1.0
      %v438 = vadd.f32 %v368, 1.0
      %v439 = vadd.f32 %v370, 1.0
      %v440 = vadd.f32 %v372, 1.0
      %v441 = vadd.f32 %v374, 1.0
      %v442 = vadd.f32 %v376, 1.0
      %v443 = vadd.f32 %v378, 1.0
      %v444 = vadd.f32 %v380, 1.0
      %v445 = vadd.f32 %v382, 1.0
      %v446 = vadd.f32 %v384, 1.0
      %v447 = vadd.f32 %v386, 1.0
      %v448 = vadd.f32 %v388, 1.0
      %v449 = vadd.f32 %v390, 1.0
      %v450 = vadd.f32 %v392, 1.0
      %v451 = vadd.f32 %v394, 1.0
      %v452 = vadd.f32 %v396, 1.0
      %v453 = vadd.f32 %v398, 1.0
      %v454 = vadd.f32 %v400, 1.0
      %v455 = vadd.f32 %v402, 1.0
      %v456 = vadd.f32 %v404, 1.0
      %v457 = vadd.f32 %v406, 1.0
      %v458 = vadd.f32 %v408, 1.0
      %v459 = vadd.f32 %v410, 1.0
      %v460 = vadd.f32 %v412, 1.0
      %v461 = vadd.f32 %v414, 1.0
      %v462 = vadd.f32 %v416, 1.0
      %v463 = vadd.f32 %v418, 1.0
      %v464 = vadd.f32 %v420, 1.0
      %v465 = vadd.f32 %v422, 1.0
      %v466 = vadd.f32 %v424, 1.0
      %v467 = vadd.f32 %v426, 1.0
      %v468 = vadd.f32 %v428, 1.0
      %v469 = vadd.f32 %v430, 1.0
      %v470 = vadd.f32 %v432, 1.0
      %v471 = vadd.f32 %v434, 1.0
      %v472 = vadd.f32 %v436, 1.0
      %v473 = vrcp.pop %v437
      %v474 = vmul.f32 1.0, %v473
      %v475 = vrcp.pop %v438
      %v476 = vmul.f32 1.0, %v475
      %v477 = vrcp.pop %v439
      %v478 = vmul.f32 1.0, %v477
      %v479 = vrcp.pop %v440
      %v480 = vmul.f32 1.0, %v479
      %v481 = vrcp.pop %v441
      %v482 = vmul.f32 1.0, %v481
      %v483 = vrcp.pop %v442
      %v484 = vmul.f32 1.0, %v483
      %v485 = vrcp.pop %v443
      %v486 = vmul.f32 1.0, %v485
      %v487 = vrcp.pop %v444
      %v488 = vmul.f32 1.0, %v487
      %v489 = vrcp.pop %v445
      %v490 = vmul.f32 1.0, %v489
      %v491 = vrcp.pop %v446
      %v492 = vmul.f32 1.0, %v491
      %v493 = vrcp.pop %v447
      %v494 = vmul.f32 1.0, %v493
      %v495 = vrcp.pop %v448
      %v496 = vmul.f32 1.0, %v495
      %v497 = vrcp.pop %v449
      %v498 = vmul.f32 1.0, %v497
      %v499 = vrcp.pop %v450
      %v500 = vmul.f32 1.0, %v499
      %v501 = vrcp.pop %v451
      %v502 = vmul.f32 1.0, %v501
      %v503 = vrcp.pop %v452
      %v504 = vmul.f32 1.0, %v503
      %v505 = vrcp.pop %v453
      %v506 = vmul.f32 1.0, %v505
      %v507 = vrcp.pop %v454
      %v508 = vmul.f32 1.0, %v507
      %v509 = vrcp.pop %v455
      %v510 = vmul.f32 1.0, %v509
      %v511 = vrcp.pop %v456
      %v512 = vmul.f32 1.0, %v511
      %v513 = vrcp.pop %v457
      %v514 = vmul.f32 1.0, %v513
      %v515 = vrcp.pop %v458
      %v516 = vmul.f32 1.0, %v515
      %v517 = vrcp.pop %v459
      %v518 = vmul.f32 1.0, %v517
      %v519 = vrcp.pop %v460
      %v520 = vmul.f32 1.0, %v519
      %v521 = vrcp.pop %v461
      %v522 = vmul.f32 1.0, %v521
      %v523 = vrcp.pop %v462
      %v524 = vmul.f32 1.0, %v523
      %v525 = vrcp.pop %v463
      %v526 = vmul.f32 1.0, %v525
      %v527 = vrcp.pop %v464
      %v528 = vmul.f32 1.0, %v527
      %v529 = vrcp.pop %v465
      %v530 = vmul.f32 1.0, %v529
      %v531 = vrcp.pop %v466
      %v532 = vmul.f32 1.0, %v531
      %v533 = vrcp.pop %v467
      %v534 = vmul.f32 1.0, %v533
      %v535 = vrcp.pop %v468
      %v536 = vmul.f32 1.0, %v535
      %v537 = vrcp.pop %v469
      %v538 = vmul.f32 1.0, %v537
      %v539 = vrcp.pop %v470
      %v540 = vmul.f32 1.0, %v539
      %v541 = vrcp.pop %v471
      %v542 = vmul.f32 1.0, %v541
      %v543 = vrcp.pop %v472
      %v544 = vmul.f32 1.0, %v543
      %v545 = vmul.f32 %v293, %v474
      %v546 = vmul.f32 %v294, %v476
      %v547 = vmul.f32 %v295, %v478
      %v548 = vmul.f32 %v296, %v480
      %v549 = vmul.f32 %v297, %v482
      %v550 = vmul.f32 %v298, %v484
      %v551 = vmul.f32 %v299, %v486
      %v552 = vmul.f32 %v300, %v488
      %v553 = vmul.f32 %v301, %v490
      %v554 = vmul.f32 %v302, %v492
      %v555 = vmul.f32 %v303, %v494
      %v556 = vmul.f32 %v304, %v496
      %v557 = vmul.f32 %v305, %v498
      %v558 = vmul.f32 %v306, %v500
      %v559 = vmul.f32 %v307, %v502
      %v560 = vmul.f32 %v308, %v504
      %v561 = vmul.f32 %v309, %v506
      %v562 = vmul.f32 %v310, %v508
      %v563 = vmul.f32 %v311, %v510
      %v564 = vmul.f32 %v312, %v512
      %v565 = vmul.f32 %v313, %v514
      %v566 = vmul.f32 %v314, %v516
      %v567 = vmul.f32 %v315, %v518
      %v568 = vmul.f32 %v316, %v520
      %v569 = vmul.f32 %v317, %v522
      %v570 = vmul.f32 %v318, %v524
      %v571 = vmul.f32 %v319, %v526
      %v572 = vmul.f32 %v320, %v528
      %v573 = vmul.f32 %v321, %v530
      %v574 = vmul.f32 %v322, %v532
      %v575 = vmul.f32 %v323, %v534
      %v576 = vmul.f32 %v324, %v536
      %v577 = vmul.f32 %v325, %v538
      %v578 = vmul.f32 %v326, %v540
      %v579 = vmul.f32 %v327, %v542
      %v580 = vmul.f32 %v328, %v544
      %vm581 = vcmask 64512
      %582 = vst.msk [vmem:[%s170] sm:$0xff] %vm581, %v545
      %583 = vst.msk [vmem:[%s170 + $0x8] sm:$0xff] %vm581, %v546
      %s584 = scalar_lea.vmem %s170, 16
      %vm585 = vcmask 64514
      %586 = vst.msk [vmem:[%s584 - $0x2] sm:$0xfc] %vm585, %v547
      %587 = vst.msk [vmem:[%s584 + $0x6] sm:$0xff] %vm581, %v548
      %vm588 = vcmask 58368
      %589 = vst.msk [vmem:[%s584 + $0xe] sm:$0x3] %vm588, %v549
      %s590 = scalar_lea.vmem %s170, 32
      %vm591 = vcmask 64516
      %592 = vst.msk [vmem:[%s590 - $0x4] sm:$0xf0] %vm591, %v549
      %593 = vst.msk [vmem:[%s590 + $0x4] sm:$0xff] %vm581, %v550
      %vm594 = vcmask 60416
      %595 = vst.msk [vmem:[%s590 + $0xc] sm:$0xf] %vm594, %v551
      %s596 = scalar_lea.vmem %s170, 48
      %vm597 = vcmask 64518
      %598 = vst.msk [vmem:[%s596 - $0x6] sm:$0xc0] %vm597, %v551
      %599 = vst.msk [vmem:[%s596 + $0x2] sm:$0xff] %vm581, %v552
      %vm600 = vcmask 62464
      %601 = vst.msk [vmem:[%s596 + $0xa] sm:$0x3f] %vm600, %v553
      %s602 = scalar_lea.vmem %s170, 64
      %603 = vst.msk [vmem:[%s602] sm:$0xff] %vm581, %v554
      %604 = vst.msk [vmem:[%s602 + $0x8] sm:$0xff] %vm581, %v555
      %s605 = scalar_lea.vmem %s170, 80
      %606 = vst.msk [vmem:[%s605 - $0x2] sm:$0xfc] %vm585, %v556
      %607 = vst.msk [vmem:[%s605 + $0x6] sm:$0xff] %vm581, %v557
      %608 = vst.msk [vmem:[%s605 + $0xe] sm:$0x3] %vm588, %v558
      %s609 = scalar_lea.vmem %s170, 96
      %610 = vst.msk [vmem:[%s609 - $0x4] sm:$0xf0] %vm591, %v558
      %611 = vst.msk [vmem:[%s609 + $0x4] sm:$0xff] %vm581, %v559
      %612 = vst.msk [vmem:[%s609 + $0xc] sm:$0xf] %vm594, %v560
      %s613 = scalar_lea.vmem %s170, 112
      %614 = vst.msk [vmem:[%s613 - $0x6] sm:$0xc0] %vm597, %v560
      %615 = vst.msk [vmem:[%s613 + $0x2] sm:$0xff] %vm581, %v561
      %616 = vst.msk [vmem:[%s613 + $0xa] sm:$0x3f] %vm600, %v562
      %s617 = scalar_lea.vmem %s170, 128
      %618 = vst.msk [vmem:[%s617] sm:$0xff] %vm581, %v563
      %619 = vst.msk [vmem:[%s617 + $0x8] sm:$0xff] %vm581, %v564
      %s620 = scalar_lea.vmem %s170, 144
      %621 = vst.msk [vmem:[%s620 - $0x2] sm:$0xfc] %vm585, %v565
      %622 = vst.msk [vmem:[%s620 + $0x6] sm:$0xff] %vm581, %v566
      %623 = vst.msk [vmem:[%s620 + $0xe] sm:$0x3] %vm588, %v567
      %s624 = scalar_lea.vmem %s170, 160
      %625 = vst.msk [vmem:[%s624 - $0x4] sm:$0xf0] %vm591, %v567
      %626 = vst.msk [vmem:[%s624 + $0x4] sm:$0xff] %vm581, %v568
      %627 = vst.msk [vmem:[%s624 + $0xc] sm:$0xf] %vm594, %v569
      %s628 = scalar_lea.vmem %s170, 176
      %629 = vst.msk [vmem:[%s628 - $0x6] sm:$0xc0] %vm597, %v569
      %630 = vst.msk [vmem:[%s628 + $0x2] sm:$0xff] %vm581, %v570
      %631 = vst.msk [vmem:[%s628 + $0xa] sm:$0x3f] %vm600, %v571
      %s632 = scalar_lea.vmem %s170, 192
      %633 = vst.msk [vmem:[%s632] sm:$0xff] %vm581, %v572
      %634 = vst.msk [vmem:[%s632 + $0x8] sm:$0xff] %vm581, %v573
      %s635 = scalar_lea.vmem %s170, 208
      %636 = vst.msk [vmem:[%s635 - $0x2] sm:$0xfc] %vm585, %v574
      %637 = vst.msk [vmem:[%s635 + $0x6] sm:$0xff] %vm581, %v575
      %638 = vst.msk [vmem:[%s635 + $0xe] sm:$0x3] %vm588, %v576
      %s639 = scalar_lea.vmem %s170, 224
      %640 = vst.msk [vmem:[%s639 - $0x4] sm:$0xf0] %vm591, %v576
      %641 = vst.msk [vmem:[%s639 + $0x4] sm:$0xff] %vm581, %v577
      %642 = vst.msk [vmem:[%s639 + $0xc] sm:$0xf] %vm594, %v578
      %s643 = scalar_lea.vmem %s170, 240
      %644 = vst.msk [vmem:[%s643 - $0x6] sm:$0xc0] %vm597, %v578
      %645 = vst.msk [vmem:[%s643 + $0x2] sm:$0xff] %vm581, %v579
      %646 = vst.msk [vmem:[%s643 + $0xa] sm:$0x3f] %vm600, %v580
      %p647 = scmp.lt.s32.totalorder %s14, 1
      %s648 = scalar_select %p647, %s14, 1
      %s649 = smul.addr %s648, 32
      %s650 = smul.addr %s649, 8
      %s651 = scalar_lea.vmem %s3, %s650
      // Predicated region
      $region33: #{convblock_forward.3} parent=31 // pred_check
        %p652 = pneg %p100
      $region34: #{convblock_forward.3} parent=31 // pred_check_branch
        %654 = sbr.rel (%p652) target = $region36
      $region35: #{convblock_forward.3} parent=31 // pred_region
        _
      $region36: #{convblock_forward.3} parent=31 // pred_fallthru
        _
    $region32: #{convblock_forward.3} parent=5 // pred_fallthru
      _
    %p655 = scmp.le.s32.totalorder 2, %s9
    // Predicated region
    $region37: #{convblock_forward.3} parent=5 // pred_check
      %p656 = pneg %p655
    $region38: #{convblock_forward.3} parent=5 // pred_check_branch
      %658 = sbr.rel (%p656) target = $region40
    $region39: #{convblock_forward.3} parent=5 // pred_region
      %s659 = ssub.s32 %s9, 2
      // Predicated region
      $region41: #{convblock_forward.3} parent=39 // pred_check
        %p660 = pneg %p106
      $region42: #{convblock_forward.3} parent=39 // pred_check_branch
        %662 = sbr.rel (%p660) target = $region44
      $region43: #{convblock_forward.3} parent=39 // pred_region
        %p663 = scmp.lt.s32.totalorder %s15, 1
        %s664 = scalar_select %p663, %s15, 1
        %s665 = smul.addr %s664, 32
        %s666 = smul.addr %s665, 8
        %s667 = scalar_lea.vmem %s3, %s666
      $region44: #{convblock_forward.3} parent=39 // pred_fallthru
        _
    $region40: #{convblock_forward.3} parent=5 // pred_fallthru
      _
  $region6: #{convblock_forward.3} parent=0 // loop_footer
    %s13 = sadd.s32 1, %s9
  $region7: #{convblock_forward.3} parent=0 // loop_footer_branch
    %8 = sbr.rel target = $region3
  $region8: #{convblock_forward.3} parent=0 // loop_exit
    _

// kernel: convblock_forward.2
$region0: #{convblock_forward.2}
  #allocation0 [shape = 'u32[]', space=smem, size = 0x4, offset = 0x4, fixed_abs, tag = 'smem constant byte address 0x4 - core index']
  #allocation1 [shape = 'u32[144,128]{1,0:T(1,128)}', space=vmem, size = 0x12000, scoped, tag = 'internal scratch']
  %s0 = inlined_call_operand.vmem [shape: bf16[2,326,4], index: 0, kind: input, shape index: {}]
  %s1 = inlined_call_operand.vmem [shape: bf16[9,4,8], index: 1, kind: input, shape index: {}]
  %s2 = inlined_call_operand.vmem [shape: f32[288,1], index: 2, kind: input, shape index: {}]
  %s3 = inlined_call_operand.vmem [shape: bf16[2,288,8], index: 3, kind: output, shape index: {0}]
  %s4 = inlined_call_operand.vmem [shape: f32[2,1,8], index: 4, kind: output, shape index: {1}]
  %s5 = inlined_call_operand.vmem [shape: f32[2,1,8], index: 5, kind: output, shape index: {2}]
  %6 = xla_tuple %s3, %s4, %s5
  %s7 = sld [smem:[#allocation0]]
  $region61: #{convblock_forward.2} parent=0
    _
  %s9 = ssub.s32 1, %s7
  %s10 = scalar_select 0, %s9, %s7
  loop: start=0, step=1, limit=4
  $region2: #{convblock_forward.2} parent=0 // loop_pre_header
    _
  $region3: #{convblock_forward.2} parent=0 // loop_header
    %s12 = sphi 0, %s16
    %p13 = scmp.ge.s32.totalorder %s12, 4
    %s22 = sphi 0, %s24
    %s25 = sphi 0, %s22
    %s26 = sphi 0, %s25
    %s42 = sphi 0, %s26
    %s46 = sphi 0, %s46
    %s48 = sphi 0, %s46
    %s49 = sphi 0, %s48
    %s63 = sphi 0, %s49
    %s67 = sphi 0, %s67
    %s69 = sphi 0, %s67
    %s70 = sphi 0, %s69
    %s84 = sphi 0, %s70
    %s90 = sphi 0, %s92
    %s93 = sphi 0, %s90
    %s94 = sphi 0, %s93
    %s110 = sphi 0, %s94
    %s116 = sphi 0, %s118
    %s119 = sphi 0, %s116
    %s120 = sphi 0, %s119
    %s136 = sphi 0, %s120
    %s142 = sphi 0, %s144
    %s145 = sphi 0, %s142
    %s146 = sphi 0, %s145
    %s162 = sphi 0, %s146
  $region4: #{convblock_forward.2} parent=0 // loop_header_branch
    %15 = sbr.rel (%p13) target = $region8
  $region5: #{convblock_forward.2} parent=0 // loop_body
    %s17 = ssub.s32 %s12, 1
    %s18 = ssub.s32 %s12, 2
    %s19 = sadd.s32 %s12, 1
    %s20 = ssub.s32 %s12, %s19
    %p21 = scmp.eq.s32.totalorder %s20, 0
    %s23 = sadd.s32 %s22, 1
    %s24 = scalar_select %p21, %s22, %s23
    %p27 = pneg %p21
    %p28 = scmp.eq.s32.totalorder %s12, 1
    %p29 = por %p27, %p28
    %p30 = scmp.ne.s32.totalorder %s22, %s25
    %p31 = scmp.eq.s32.totalorder %s12, 0
    %p32 = por %p30, %p31
    %p33 = scmp.ne.s32.totalorder %s22, %s25
    %p34 = scmp.eq.s32.totalorder %s17, 1
    %p35 = por %p33, %p34
    %p36 = scmp.ne.s32.totalorder %s25, %s26
    %p37 = scmp.eq.s32.totalorder %s17, 0
    %p38 = por %p36, %p37
    %p39 = scmp.ne.s32.totalorder %s25, %s26
    %p40 = scmp.eq.s32.totalorder %s18, 1
    %p41 = por %p39, %p40
    %p43 = scmp.ne.s32.totalorder %s26, %s42
    %p44 = scmp.eq.s32.totalorder %s18, 0
    %p45 = por %p43, %p44
    %s47 = sadd.s32 %s46, 1
    %p50 = scmp.eq.s32.totalorder %s12, 1
    %p51 = scmp.ne.s32.totalorder %s46, %s48
    %p52 = scmp.eq.s32.totalorder %s12, 0
    %p53 = por %p51, %p52
    %p54 = scmp.ne.s32.totalorder %s46, %s48
    %p55 = scmp.eq.s32.totalorder %s17, 1
    %p56 = por %p54, %p55
    %p57 = scmp.ne.s32.totalorder %s48, %s49
    %p58 = scmp.eq.s32.totalorder %s17, 0
    %p59 = por %p57, %p58
    %p60 = scmp.ne.s32.totalorder %s48, %s49
    %p61 = scmp.eq.s32.totalorder %s18, 1
    %p62 = por %p60, %p61
    %p64 = scmp.ne.s32.totalorder %s49, %s63
    %p65 = scmp.eq.s32.totalorder %s18, 0
    %p66 = por %p64, %p65
    %s68 = sadd.s32 %s67, 1
    %p71 = scmp.eq.s32.totalorder %s12, 1
    %p72 = scmp.ne.s32.totalorder %s67, %s69
    %p73 = scmp.eq.s32.totalorder %s12, 0
    %p74 = por %p72, %p73
    %p75 = scmp.ne.s32.totalorder %s67, %s69
    %p76 = scmp.eq.s32.totalorder %s17, 1
    %p77 = por %p75, %p76
    %p78 = scmp.ne.s32.totalorder %s69, %s70
    %p79 = scmp.eq.s32.totalorder %s17, 0
    %p80 = por %p78, %p79
    %p81 = scmp.ne.s32.totalorder %s69, %s70
    %p82 = scmp.eq.s32.totalorder %s18, 1
    %p83 = por %p81, %p82
    %p85 = scmp.ne.s32.totalorder %s70, %s84
    %p86 = scmp.eq.s32.totalorder %s18, 0
    %p87 = por %p85, %p86
    %s88 = ssub.s32 %s12, %s19
    %p89 = scmp.eq.s32.totalorder %s88, 0
    %s91 = sadd.s32 %s90, 1
    %s92 = scalar_select %p89, %s90, %s91
    %p95 = pneg %p89
    %p96 = scmp.eq.s32.totalorder %s12, 1
    %p97 = por %p95, %p96
    %p98 = scmp.ne.s32.totalorder %s90, %s93
    %p99 = scmp.eq.s32.totalorder %s12, 0
    %p100 = por %p98, %p99
    %p101 = scmp.ne.s32.totalorder %s90, %s93
    %p102 = scmp.eq.s32.totalorder %s17, 1
    %p103 = por %p101, %p102
    %p104 = scmp.ne.s32.totalorder %s93, %s94
    %p105 = scmp.eq.s32.totalorder %s17, 0
    %p106 = por %p104, %p105
    %p107 = scmp.ne.s32.totalorder %s93, %s94
    %p108 = scmp.eq.s32.totalorder %s18, 1
    %p109 = por %p107, %p108
    %p111 = scmp.ne.s32.totalorder %s94, %s110
    %p112 = scmp.eq.s32.totalorder %s18, 0
    %p113 = por %p111, %p112
    %s114 = ssub.s32 %s12, %s19
    %p115 = scmp.eq.s32.totalorder %s114, 0
    %s117 = sadd.s32 %s116, 1
    %s118 = scalar_select %p115, %s116, %s117
    %p121 = pneg %p115
    %p122 = scmp.eq.s32.totalorder %s12, 1
    %p123 = por %p121, %p122
    %p124 = scmp.ne.s32.totalorder %s116, %s119
    %p125 = scmp.eq.s32.totalorder %s12, 0
    %p126 = por %p124, %p125
    %p127 = scmp.ne.s32.totalorder %s116, %s119
    %p128 = scmp.eq.s32.totalorder %s17, 1
    %p129 = por %p127, %p128
    %p130 = scmp.ne.s32.totalorder %s119, %s120
    %p131 = scmp.eq.s32.totalorder %s17, 0
    %p132 = por %p130, %p131
    %p133 = scmp.ne.s32.totalorder %s119, %s120
    %p134 = scmp.eq.s32.totalorder %s18, 1
    %p135 = por %p133, %p134
    %p137 = scmp.ne.s32.totalorder %s120, %s136
    %p138 = scmp.eq.s32.totalorder %s18, 0
    %p139 = por %p137, %p138
    %s140 = ssub.s32 %s12, %s19
    %p141 = scmp.eq.s32.totalorder %s140, 0
    %s143 = sadd.s32 %s142, 1
    %s144 = scalar_select %p141, %s142, %s143
    %p147 = pneg %p141
    %p148 = scmp.eq.s32.totalorder %s12, 1
    %p149 = por %p147, %p148
    %p150 = scmp.ne.s32.totalorder %s142, %s145
    %p151 = scmp.eq.s32.totalorder %s12, 0
    %p152 = por %p150, %p151
    %p153 = scmp.ne.s32.totalorder %s142, %s145
    %p154 = scmp.eq.s32.totalorder %s17, 1
    %p155 = por %p153, %p154
    %p156 = scmp.ne.s32.totalorder %s145, %s146
    %p157 = scmp.eq.s32.totalorder %s17, 0
    %p158 = por %p156, %p157
    %p159 = scmp.ne.s32.totalorder %s145, %s146
    %p160 = scmp.eq.s32.totalorder %s18, 1
    %p161 = por %p159, %p160
    %p163 = scmp.ne.s32.totalorder %s146, %s162
    %p164 = scmp.eq.s32.totalorder %s18, 0
    %p165 = por %p163, %p164
    %p166 = scmp.le.s32.totalorder 1, %s12
    %p167 = scmp.lt.s32.totalorder %s12, 3
    %p168 = pnand %p166, %p167
    %p169 = pneg %p168
    // Predicated region
    $region9: #{convblock_forward.2} parent=5 // pred_check
      _
    $region10: #{convblock_forward.2} parent=5 // pred_check_branch
      %171 = sbr.rel (%p168) target = $region12
    $region11: #{convblock_forward.2} parent=5 // pred_region
      %s172 = ssub.s32 %s12, 1
      // Predicated region
      $region13: #{convblock_forward.2} parent=11 // pred_check
        %p173 = pneg %p59
      $region14: #{convblock_forward.2} parent=11 // pred_check_branch
        %175 = sbr.rel (%p173) target = $region16
      $region15: #{convblock_forward.2} parent=11 // pred_region
        _
      $region16: #{convblock_forward.2} parent=11 // pred_fallthru
        _
      // Predicated region
      $region17: #{convblock_forward.2} parent=11 // pred_check
        %p176 = pneg %p80
      $region18: #{convblock_forward.2} parent=11 // pred_check_branch
        %178 = sbr.rel (%p176) target = $region20
      $region19: #{convblock_forward.2} parent=11 // pred_region
        _
      $region20: #{convblock_forward.2} parent=11 // pred_fallthru
        _
    $region12: #{convblock_forward.2} parent=5 // pred_fallthru
      _
    %p179 = scmp.lt.s32.totalorder %s12, 2
    // Predicated region
    $region21: #{convblock_forward.2} parent=5 // pred_check
      %p180 = pneg %p179
    $region22: #{convblock_forward.2} parent=5 // pred_check_branch
      %182 = sbr.rel (%p180) target = $region24
    $region23: #{convblock_forward.2} parent=5 // pred_region
      // Predicated region
      $region25: #{convblock_forward.2} parent=23 // pred_check
        %p183 = pneg %p32
      $region26: #{convblock_forward.2} parent=23 // pred_check_branch
        %185 = sbr.rel (%p183) target = $region28
      $region27: #{convblock_forward.2} parent=23 // pred_region
        %p186 = scmp.lt.s32.totalorder %s12, 1
        %s187 = scalar_select %p186, %s12, 1
        %s188 = smul.addr %s187, 41
        %s189 = smul.addr %s188, 4
        %s190 = scalar_lea.vmem %s0, %s189
      $region28: #{convblock_forward.2} parent=23 // pred_fallthru
        _
    $region24: #{convblock_forward.2} parent=5 // pred_fallthru
      _
    %p191 = scmp.le.s32.totalorder 1, %s12
    %p192 = scmp.lt.s32.totalorder %s12, 3
    %p193 = pnand %p191, %p192
    %p194 = pneg %p193
    // Predicated region
    $region29: #{convblock_forward.2} parent=5 // pred_check
      _
    $region30: #{convblock_forward.2} parent=5 // pred_check_branch
      %196 = sbr.rel (%p193) target = $region32
    $region31: #{convblock_forward.2} parent=5 // pred_region
      %s197 = ssub.s32 %s12, 1
      %p198 = scmp.lt.s32.totalorder %s17, 1
      %s199 = scalar_select %p198, %s17, 1
      %s200 = smul.addr %s199, 41
      %s201 = smul.addr %s200, 4
      %s202 = scalar_lea.vmem %s0, %s201
      %p203 = pneg %p38
      %p204 = pneg %p35
      %p205 = pneg %p59
      %p206 = pneg %p56
      %p207 = pneg %p80
      %p208 = pneg %p77
      %p209 = pneg %p106
      %p210 = pneg %p103
      %p211 = scmp.lt.s32.totalorder %s17, 1
      %s212 = scalar_select %p211, %s17, 1
      %s213 = smul.addr %s212, 36
      %s214 = smul.addr %s213, 4
      %s215 = scalar_lea.vmem %s3, %s214
      %p216 = pneg %p132
      %p217 = pneg %p129
      %p218 = scmp.lt.s32.totalorder %s17, 1
      %s219 = scalar_select %p218, %s17, 1
      %s220 = scalar_lea.vmem %s4, %s219
      %p221 = pneg %p158
      %p222 = pneg %p155
      %p223 = scmp.lt.s32.totalorder %s17, 1
      %s224 = scalar_select %p223, %s17, 1
      %s225 = scalar_lea.vmem %s5, %s224
      %p226 = scmp.lt.s32.totalorder %s17, 1
      %s227 = scalar_select %p226, %s17, 1
      %s228 = smul.addr %s227, 41
      %s229 = smul.addr %s228, 4
      %s230 = scalar_lea.vmem %s0, %s229
      %p231 = scmp.lt.s32.totalorder %s17, 1
      %s232 = scalar_select %p231, %s17, 1
      %s233 = smul.addr %s232, 36
      %s234 = smul.addr %s233, 4
      %s235 = scalar_lea.vmem %s3, %s234
      %p236 = scmp.lt.s32.totalorder %s17, 1
      %s237 = scalar_select %p236, %s17, 1
      %s238 = scalar_lea.vmem %s4, %s237
      %p239 = scmp.lt.s32.totalorder %s17, 1
      %s240 = scalar_select %p239, %s17, 1
      %s241 = scalar_lea.vmem %s5, %s240
      %v243 = vld [vmem:[%s230] sm:$0xf]
      %v244 = vld [vmem:[%s230 + $0x4] sm:$0xf]
      %v245 = vld [vmem:[%s230 + $0x8] sm:$0xf]
      %v246 = vld [vmem:[%s230 + $0xc] sm:$0xf]
      %v247 = vld [vmem:[%s230 + $0x10] sm:$0xf]
      %v248 = vld [vmem:[%s230 + $0x14] sm:$0xf]
      %v249 = vld [vmem:[%s230 + $0x18] sm:$0xf]
      %v250 = vld [vmem:[%s230 + $0x1c] sm:$0xf]
      %v251 = vld [vmem:[%s230 + $0x20] sm:$0xf]
      %v252 = vld [vmem:[%s230 + $0x24] sm:$0xf]
      %v253 = vld [vmem:[%s230 + $0x28] sm:$0xf]
      %v254 = vld [vmem:[%s230 + $0x2c] sm:$0xf]
      %v255 = vld [vmem:[%s230 + $0x30] sm:$0xf]
      %v256 = vld [vmem:[%s230 + $0x34] sm:$0xf]
      %v257 = vld [vmem:[%s230 + $0x38] sm:$0xf]
      %v258 = vld [vmem:[%s230 + $0x3c] sm:$0xf]
      %v259 = vld [vmem:[%s230 + $0x40] sm:$0xf]
      %v260 = vld [vmem:[%s230 + $0x44] sm:$0xf]
      %v261 = vld [vmem:[%s230 + $0x48] sm:$0xf]
      %v262 = vld [vmem:[%s230 + $0x4c] sm:$0xf]
      %v263 = vld [vmem:[%s230 + $0x50] sm:$0xf]
      %v264 = vld [vmem:[%s230 + $0x54] sm:$0xf]
      %v265 = vld [vmem:[%s230 + $0x58] sm:$0xf]
      %v266 = vld [vmem:[%s230 + $0x5c] sm:$0xf]
      %v267 = vld [vmem:[%s230 + $0x60] sm:$0xf]
      %v268 = vld [vmem:[%s230 + $0x64] sm:$0xf]
      %v269 = vld [vmem:[%s230 + $0x68] sm:$0xf]
      %v270 = vld [vmem:[%s230 + $0x6c] sm:$0xf]
      %v271 = vld [vmem:[%s230 + $0x70] sm:$0xf]
      %v272 = vld [vmem:[%s230 + $0x74] sm:$0xf]
      %v273 = vld [vmem:[%s230 + $0x78] sm:$0xf]
      %v274 = vld [vmem:[%s230 + $0x7c] sm:$0xf]
      %v275 = vld [vmem:[%s230 + $0x80] sm:$0xf]
      %v276 = vld [vmem:[%s230 + $0x84] sm:$0xf]
      %v277 = vld [vmem:[%s230 + $0x88] sm:$0xf]
      %v278 = vld [vmem:[%s230 + $0x8c] sm:$0xf]
      %v279 = vld [vmem:[%s1] sm:$0x3]
      %v280 = vld [vmem:[%s230 + $0x90] sm:$0x1]
      %s281 = scalar_lea.vmem %s1, 2
      %v282 = vld [vmem:[%s281] sm:$0x3]
      %v320 = vunpack.c.l.b16 %v243
      %v321 = vunpack.c.l.b16 %v244
      %v322 = vunpack.c.l.b16 %v245
      %v323 = vunpack.c.l.b16 %v246
      %v324 = vunpack.c.l.b16 %v247
      %v325 = vunpack.c.l.b16 %v248
      %v326 = vunpack.c.l.b16 %v249
      %v327 = vunpack.c.l.b16 %v250
      %v328 = vunpack.c.l.b16 %v251
      %v329 = vunpack.c.l.b16 %v252
      %v330 = vunpack.c.l.b16 %v253
      %v331 = vunpack.c.l.b16 %v254
      %v332 = vunpack.c.l.b16 %v255
      %v333 = vunpack.c.l.b16 %v256
      %v334 = vunpack.c.l.b16 %v257
      %v335 = vunpack.c.l.b16 %v258
      %v336 = vunpack.c.l.b16 %v259
      %v337 = vunpack.c.l.b16 %v260
      %v338 = vunpack.c.l.b16 %v261
      %v339 = vunpack.c.l.b16 %v262
      %v340 = vunpack.c.l.b16 %v263
      %v341 = vunpack.c.l.b16 %v264
      %v342 = vunpack.c.l.b16 %v265
      %v343 = vunpack.c.l.b16 %v266
      %v344 = vunpack.c.l.b16 %v267
      %v345 = vunpack.c.l.b16 %v268
      %v346 = vunpack.c.l.b16 %v269
      %v347 = vunpack.c.l.b16 %v270
      %v348 = vunpack.c.l.b16 %v271
      %v349 = vunpack.c.l.b16 %v272
      %v350 = vunpack.c.l.b16 %v273
      %v351 = vunpack.c.l.b16 %v274
      %v352 = vunpack.c.l.b16 %v275
      %v353 = vunpack.c.l.b16 %v276
      %v354 = vunpack.c.l.b16 %v277
      %v355 = vunpack.c.l.b16 %v278
      %v356 = vunpack.c.l.b16 %v280
      %v357 = vpack.c.b16 %v321, %v320
      %v358 = vpack.c.b16 %v323, %v322
      %v359 = vpack.c.b16 %v325, %v324
      %v360 = vpack.c.b16 %v327, %v326
      %v361 = vpack.c.b16 %v329, %v328
      %v362 = vpack.c.b16 %v331, %v330
      %v363 = vpack.c.b16 %v333, %v332
      %v364 = vpack.c.b16 %v335, %v334
      %v365 = vpack.c.b16 %v337, %v336
      %v366 = vpack.c.b16 %v339, %v338
      %v367 = vpack.c.b16 %v341, %v340
      %v368 = vpack.c.b16 %v343, %v342
      %v369 = vpack.c.b16 %v345, %v344
      %v370 = vpack.c.b16 %v347, %v346
      %v371 = vpack.c.b16 %v349, %v348
      %v372 = vpack.c.b16 %v351, %v350
      %v373 = vpack.c.b16 %v353, %v352
      %v374 = vpack.c.b16 %v355, %v354
      %v375 = vpack.c.b16 %v356, %v356
      %vm376 = vsmask.f32 7424
      %v378 = vshrl.u32 %v357, 16
      %v380 = vshll.u32 %v357, 16
      %v382 = vrot.slane %v380, 1
      %v383 = vor.u32 %v378, %v382
      %v385 = vshll.u32 %v358, 16
      %v387 = vrot.slane %v385, 1
      %v388 = vsel %vm376, %v383, %v387
      %v389 = vshrl.u32 %v358, 16
      %v391 = vor.u32 %v389, %v387
      %v393 = vshll.u32 %v359, 16
      %v395 = vrot.slane %v393, 1
      %v396 = vsel %vm376, %v391, %v395
      %v397 = vshrl.u32 %v359, 16
      %v399 = vor.u32 %v397, %v395
      %v401 = vshll.u32 %v360, 16
      %v403 = vrot.slane %v401, 1
      %v404 = vsel %vm376, %v399, %v403
      %v405 = vshrl.u32 %v360, 16
      %v407 = vor.u32 %v405, %v403
      %v409 = vshll.u32 %v361, 16
      %v411 = vrot.slane %v409, 1
      %v412 = vsel %vm376, %v407, %v411
      %v413 = vshrl.u32 %v361, 16
      %v415 = vor.u32 %v413, %v411
      %v417 = vshll.u32 %v362, 16
      %v419 = vrot.slane %v417, 1
      %v420 = vsel %vm376, %v415, %v419
      %v421 = vshrl.u32 %v362, 16
      %v423 = vor.u32 %v421, %v419
      %v425 = vshll.u32 %v363, 16
      %v427 = vrot.slane %v425, 1
      %v428 = vsel %vm376, %v423, %v427
      %v429 = vshrl.u32 %v363, 16
      %v431 = vor.u32 %v429, %v427
      %v433 = vshll.u32 %v364, 16
      %v435 = vrot.slane %v433, 1
      %v436 = vsel %vm376, %v431, %v435
      %v437 = vshrl.u32 %v364, 16
      %v439 = vor.u32 %v437, %v435
      %v441 = vshll.u32 %v365, 16
      %v443 = vrot.slane %v441, 1
      %v444 = vsel %vm376, %v439, %v443
      %v445 = vshrl.u32 %v365, 16
      %v447 = vor.u32 %v445, %v443
      %v449 = vshll.u32 %v366, 16
      %v451 = vrot.slane %v449, 1
      %v452 = vsel %vm376, %v447, %v451
      %v453 = vshrl.u32 %v366, 16
      %v455 = vor.u32 %v453, %v451
      %v457 = vshll.u32 %v367, 16
      %v459 = vrot.slane %v457, 1
      %v460 = vsel %vm376, %v455, %v459
      %v461 = vshrl.u32 %v367, 16
      %v463 = vor.u32 %v461, %v459
      %v465 = vshll.u32 %v368, 16
      %v467 = vrot.slane %v465, 1
      %v468 = vsel %vm376, %v463, %v467
      %v469 = vshrl.u32 %v368, 16
      %v471 = vor.u32 %v469, %v467
      %v473 = vshll.u32 %v369, 16
      %v475 = vrot.slane %v473, 1
      %v476 = vsel %vm376, %v471, %v475
      %v477 = vshrl.u32 %v369, 16
      %v479 = vor.u32 %v477, %v475
      %v481 = vshll.u32 %v370, 16
      %v483 = vrot.slane %v481, 1
      %v484 = vsel %vm376, %v479, %v483
      %v485 = vshrl.u32 %v370, 16
      %v487 = vor.u32 %v485, %v483
      %v489 = vshll.u32 %v371, 16
      %v491 = vrot.slane %v489, 1
      %v492 = vsel %vm376, %v487, %v491
      %v493 = vshrl.u32 %v371, 16
      %v495 = vor.u32 %v493, %v491
      %v497 = vshll.u32 %v372, 16
      %v499 = vrot.slane %v497, 1
      %v500 = vsel %vm376, %v495, %v499
      %v501 = vshrl.u32 %v372, 16
      %v503 = vor.u32 %v501, %v499
      %v505 = vshll.u32 %v373, 16
      %v507 = vrot.slane %v505, 1
      %v508 = vsel %vm376, %v503, %v507
      %v509 = vshrl.u32 %v373, 16
      %v511 = vor.u32 %v509, %v507
      %v513 = vshll.u32 %v374, 16
      %v515 = vrot.slane %v513, 1
      %v516 = vsel %vm376, %v511, %v515
      %v517 = vshrl.u32 %v374, 16
      %v519 = vor.u32 %v517, %v515
      %v521 = vshll.u32 %v375, 16
      %v523 = vrot.slane %v521, 1
      %v524 = vsel %vm376, %v519, %v523
      %vm525 = vcmask 31744
      %v527 = vsel %vm525, %v388, 0
      %v530 = vsel %vm525, %v396, 0
      %v533 = vsel %vm525, %v404, 0
      %v536 = vsel %vm525, %v412, 0
      %v539 = vsel %vm525, %v420, 0
      %v542 = vsel %vm525, %v428, 0
      %v545 = vsel %vm525, %v436, 0
      %v548 = vsel %vm525, %v444, 0
      %v551 = vsel %vm525, %v452, 0
      %v554 = vsel %vm525, %v460, 0
      %v557 = vsel %vm525, %v468, 0
      %v560 = vsel %vm525, %v476, 0
      %v563 = vsel %vm525, %v484, 0
      %v566 = vsel %vm525, %v492, 0
      %v569 = vsel %vm525, %v500, 0
      %v572 = vsel %vm525, %v508, 0
      %v575 = vsel %vm525, %v516, 0
      %v578 = vsel %vm525, %v524, 0
      %vm580 = vcmask 1041408
      %v582 = vsel %vm580, %v282, 0
      %584 = vmatprep.subr.bf16.mxu0 0
      %585 = vmatpush1.bf16.msra.mxu0 0
      %586 = vmatprep.subr.bf16.mxu0 0
      %587 = vmatpush1.bf16.msra.mxu0 0
      %588 = vmatprep.subr.bf16.mxu0 0
      %589 = vmatpush1.bf16.msra.mxu0 0
      %590 = vmatprep.subr.bf16.mxu0 0
      %591 = vmatpush1.bf16.msra.mxu0 0
      %592 = vmatprep.subr.bf16.mxu0 0
      %593 = vmatpush1.bf16.msra.mxu0 0
      %594 = vmatprep.subr.bf16.mxu0 0
      %595 = vmatpush1.bf16.msra.mxu0 0
      %596 = vmatprep.subr.bf16.mxu0 0
      %597 = vmatpush1.bf16.msra.mxu0 0
      %598 = vmatprep.subr.bf16.mxu0 0
      %599 = vmatpush1.bf16.msra.mxu0 %v582
      %600 = vmatprep.subr.bf16.mxu0 0
      %601 = vmatpush2.bf16.msra.mxu0 0
      %602 = vmatprep.subr.bf16.mxu0 0
      %603 = vmatpush2.bf16.msra.mxu0 0
      %604 = vmatprep.subr.bf16.mxu0 0
      %605 = vmatpush2.bf16.msra.mxu0 0
      %606 = vmatprep.subr.bf16.mxu0 0
      %607 = vmatpush2.bf16.msra.mxu0 0
      %608 = vmatprep.subr.bf16.mxu0 0
      %609 = vmatpush2.bf16.msra.mxu0 0
      %610 = vmatprep.subr.bf16.mxu0 0
      %611 = vmatpush2.bf16.msra.mxu0 0
      %612 = vmatprep.subr.bf16.mxu0 0
      %613 = vmatpush2.bf16.msra.mxu0 0
      %614 = vmatprep.subr.bf16.mxu0 0
      %615 = vmatpush2.bf16.msra.mxu0 0
      %616 = vmatprep.mubr.bf16.mxu0 0
      %617 = vmatmul.mubr.bf16.gmra.mxu0 %v527
      %v618 = vpop.f32.mrf.mxu0
      %v619 = vadd.f32 0.0, %v618
      %v620 = vpop.f32.mrf.mxu0
      %v621 = vpop.f32.mrf.mxu0
      %v622 = vadd.f32 0.0, %v621
      %v623 = vpop.f32.mrf.mxu0
      %624 = vmatprep.mubr.bf16.mxu0 0
      %625 = vmatmul.mubr.bf16.gmra.mxu0 %v530
      %v626 = vpop.f32.mrf.mxu0
      %v627 = vadd.f32 0.0, %v626
      %v628 = vpop.f32.mrf.mxu0
      %v629 = vpop.f32.mrf.mxu0
      %v630 = vadd.f32 0.0, %v629
      %v631 = vpop.f32.mrf.mxu0
      %632 = vmatprep.mubr.bf16.mxu0 0
      %633 = vmatmul.mubr.bf16.gmra.mxu0 %v533
      %v634 = vpop.f32.mrf.mxu0
      %v635 = vadd.f32 0.0, %v634
      %v636 = vpop.f32.mrf.mxu0
      %v637 = vpop.f32.mrf.mxu0
      %v638 = vadd.f32 0.0, %v637
      %v639 = vpop.f32.mrf.mxu0
      %640 = vmatprep.mubr.bf16.mxu0 0
      %641 = vmatmul.mubr.bf16.gmra.mxu0 %v536
      %v642 = vpop.f32.mrf.mxu0
      %v643 = vadd.f32 0.0, %v642
      %v644 = vpop.f32.mrf.mxu0
      %v645 = vpop.f32.mrf.mxu0
      %v646 = vadd.f32 0.0, %v645
      %v647 = vpop.f32.mrf.mxu0
      %648 = vmatprep.mubr.bf16.mxu0 0
      %649 = vmatmul.mubr.bf16.gmra.mxu0 %v539
      %v650 = vpop.f32.mrf.mxu0
      %v651 = vadd.f32 0.0, %v650
      %v652 = vpop.f32.mrf.mxu0
      %v653 = vpop.f32.mrf.mxu0
      %v654 = vadd.f32 0.0, %v653
      %v655 = vpop.f32.mrf.mxu0
      %656 = vmatprep.mubr.bf16.mxu0 0
      %657 = vmatmul.mubr.bf16.gmra.mxu0 %v542
      %v658 = vpop.f32.mrf.mxu0
      %v659 = vadd.f32 0.0, %v658
      %v660 = vpop.f32.mrf.mxu0
      %v661 = vpop.f32.mrf.mxu0
      %v662 = vadd.f32 0.0, %v661
      %v663 = vpop.f32.mrf.mxu0
      %664 = vmatprep.mubr.bf16.mxu0 0
      %665 = vmatmul.mubr.bf16.gmra.mxu0 %v545
      %v666 = vpop.f32.mrf.mxu0
      %v667 = vadd.f32 0.0, %v666
      %v668 = vpop.f32.mrf.mxu0
      %v669 = vpop.f32.mrf.mxu0
      %v670 = vadd.f32 0.0, %v669
      %v671 = vpop.f32.mrf.mxu0
      %672 = vmatprep.mubr.bf16.mxu0 0
      %673 = vmatmul.mubr.bf16.gmra.mxu0 %v548
      %v674 = vpop.f32.mrf.mxu0
      %v675 = vadd.f32 0.0, %v674
      %v676 = vpop.f32.mrf.mxu0
      %v677 = vpop.f32.mrf.mxu0
      %v678 = vadd.f32 0.0, %v677
      %v679 = vpop.f32.mrf.mxu0
      %680 = vmatprep.mubr.bf16.mxu0 0
      %681 = vmatmul.mubr.bf16.gmra.mxu0 %v551
      %v682 = vpop.f32.mrf.mxu0
      %v683 = vadd.f32 0.0, %v682
      %v684 = vpop.f32.mrf.mxu0
      %v685 = vpop.f32.mrf.mxu0
      %v686 = vadd.f32 0.0, %v685
      %v687 = vpop.f32.mrf.mxu0
      %688 = vmatprep.mubr.bf16.mxu0 0
      %689 = vmatmul.mubr.bf16.gmra.mxu0 %v554
      %v690 = vpop.f32.mrf.mxu0
      %v691 = vadd.f32 0.0, %v690
      %v692 = vpop.f32.mrf.mxu0
      %v693 = vpop.f32.mrf.mxu0
      %v694 = vadd.f32 0.0, %v693
      %v695 = vpop.f32.mrf.mxu0
      %696 = vmatprep.mubr.bf16.mxu0 0
      %697 = vmatmul.mubr.bf16.gmra.mxu0 %v557
      %v698 = vpop.f32.mrf.mxu0
      %v699 = vadd.f32 0.0, %v698
      %v700 = vpop.f32.mrf.mxu0
      %v701 = vpop.f32.mrf.mxu0
      %v702 = vadd.f32 0.0, %v701
      %v703 = vpop.f32.mrf.mxu0
      %704 = vmatprep.mubr.bf16.mxu0 0
      %705 = vmatmul.mubr.bf16.gmra.mxu0 %v560
      %v706 = vpop.f32.mrf.mxu0
      %v707 = vadd.f32 0.0, %v706
      %v708 = vpop.f32.mrf.mxu0
      %v709 = vpop.f32.mrf.mxu0
      %v710 = vadd.f32 0.0, %v709
      %v711 = vpop.f32.mrf.mxu0
      %712 = vmatprep.mubr.bf16.mxu0 0
      %713 = vmatmul.mubr.bf16.gmra.mxu0 %v563
      %v714 = vpop.f32.mrf.mxu0
      %v715 = vadd.f32 0.0, %v714
      %v716 = vpop.f32.mrf.mxu0
      %v717 = vpop.f32.mrf.mxu0
      %v718 = vadd.f32 0.0, %v717
      %v719 = vpop.f32.mrf.mxu0
      %720 = vmatprep.mubr.bf16.mxu0 0
      %721 = vmatmul.mubr.bf16.gmra.mxu0 %v566
      %v722 = vpop.f32.mrf.mxu0
      %v723 = vadd.f32 0.0, %v722
      %v724 = vpop.f32.mrf.mxu0
      %v725 = vpop.f32.mrf.mxu0
      %v726 = vadd.f32 0.0, %v725
      %v727 = vpop.f32.mrf.mxu0
      %728 = vmatprep.mubr.bf16.mxu0 0
      %729 = vmatmul.mubr.bf16.gmra.mxu0 %v569
      %v730 = vpop.f32.mrf.mxu0
      %v731 = vadd.f32 0.0, %v730
      %v732 = vpop.f32.mrf.mxu0
      %v733 = vpop.f32.mrf.mxu0
      %v734 = vadd.f32 0.0, %v733
      %v735 = vpop.f32.mrf.mxu0
      %736 = vmatprep.mubr.bf16.mxu0 0
      %737 = vmatmul.mubr.bf16.gmra.mxu0 %v572
      %v738 = vpop.f32.mrf.mxu0
      %v739 = vadd.f32 0.0, %v738
      %v740 = vpop.f32.mrf.mxu0
      %v741 = vpop.f32.mrf.mxu0
      %v742 = vadd.f32 0.0, %v741
      %v743 = vpop.f32.mrf.mxu0
      %744 = vmatprep.mubr.bf16.mxu0 0
      %745 = vmatmul.mubr.bf16.gmra.mxu0 %v575
      %v746 = vpop.f32.mrf.mxu0
      %v747 = vadd.f32 0.0, %v746
      %v748 = vpop.f32.mrf.mxu0
      %v749 = vpop.f32.mrf.mxu0
      %v750 = vadd.f32 0.0, %v749
      %v751 = vpop.f32.mrf.mxu0
      %752 = vmatprep.mubr.bf16.mxu0 0
      %753 = vmatmul.mubr.bf16.gmra.mxu0 %v578
      %v754 = vpop.f32.mrf.mxu0
      %v755 = vadd.f32 0.0, %v754
      %v756 = vpop.f32.mrf.mxu0
      %v757 = vpop.f32.mrf.mxu0
      %v758 = vadd.f32 0.0, %v757
      %v759 = vpop.f32.mrf.mxu0
      %760 = vdwg.mxu0
      %v761 = vsel %vm525, %v357, 0
      %v763 = vsel %vm525, %v358, 0
      %v765 = vsel %vm525, %v359, 0
      %v767 = vsel %vm525, %v360, 0
      %v769 = vsel %vm525, %v361, 0
      %v771 = vsel %vm525, %v362, 0
      %v773 = vsel %vm525, %v363, 0
      %v775 = vsel %vm525, %v364, 0
      %v777 = vsel %vm525, %v365, 0
      %v779 = vsel %vm525, %v366, 0
      %v781 = vsel %vm525, %v367, 0
      %v783 = vsel %vm525, %v368, 0
      %v785 = vsel %vm525, %v369, 0
      %v787 = vsel %vm525, %v370, 0
      %v789 = vsel %vm525, %v371, 0
      %v791 = vsel %vm525, %v372, 0
      %v793 = vsel %vm525, %v373, 0
      %v795 = vsel %vm525, %v374, 0
      %v798 = vsel %vm580, %v279, 0
      %800 = vmatprep.subr.bf16.mxu0 0
      %801 = vmatpush1.bf16.msra.mxu0 0
      %802 = vmatprep.subr.bf16.mxu0 0
      %803 = vmatpush1.bf16.msra.mxu0 0
      %804 = vmatprep.subr.bf16.mxu0 0
      %805 = vmatpush1.bf16.msra.mxu0 0
      %806 = vmatprep.subr.bf16.mxu0 0
      %807 = vmatpush1.bf16.msra.mxu0 0
      %808 = vmatprep.subr.bf16.mxu0 0
      %809 = vmatpush1.bf16.msra.mxu0 0
      %810 = vmatprep.subr.bf16.mxu0 0
      %811 = vmatpush1.bf16.msra.mxu0 0
      %812 = vmatprep.subr.bf16.mxu0 0
      %813 = vmatpush1.bf16.msra.mxu0 0
      %814 = vmatprep.subr.bf16.mxu0 0
      %815 = vmatpush1.bf16.msra.mxu0 %v798
      %816 = vmatprep.subr.bf16.mxu0 0
      %817 = vmatpush2.bf16.msra.mxu0 0
      %818 = vmatprep.subr.bf16.mxu0 0
      %819 = vmatpush2.bf16.msra.mxu0 0
      %820 = vmatprep.subr.bf16.mxu0 0
      %821 = vmatpush2.bf16.msra.mxu0 0
      %822 = vmatprep.subr.bf16.mxu0 0
      %823 = vmatpush2.bf16.msra.mxu0 0
      %824 = vmatprep.subr.bf16.mxu0 0
      %825 = vmatpush2.bf16.msra.mxu0 0
      %826 = vmatprep.subr.bf16.mxu0 0
      %827 = vmatpush2.bf16.msra.mxu0 0
      %828 = vmatprep.subr.bf16.mxu0 0
      %829 = vmatpush2.bf16.msra.mxu0 0
      %830 = vmatprep.subr.bf16.mxu0 0
      %831 = vmatpush2.bf16.msra.mxu0 0
      %832 = vmatprep.mubr.bf16.mxu0 0
      %833 = vmatmul.mubr.bf16.gmra.mxu0 %v761
      %v834 = vpop.f32.mrf.mxu0
      %v835 = vadd.f32 %v619, %v834
      %v836 = vpop.f32.mrf.mxu0
      %v837 = vpop.f32.mrf.mxu0
      %v838 = vadd.f32 %v622, %v837
      %v839 = vpop.f32.mrf.mxu0
      %840 = vmatprep.mubr.bf16.mxu0 0
      %841 = vmatmul.mubr.bf16.gmra.mxu0 %v763
      %v842 = vpop.f32.mrf.mxu0
      %v843 = vadd.f32 %v627, %v842
      %v844 = vpop.f32.mrf.mxu0
      %v845 = vpop.f32.mrf.mxu0
      %v846 = vadd.f32 %v630, %v845
      %v847 = vpop.f32.mrf.mxu0
      %848 = vmatprep.mubr.bf16.mxu0 0
      %849 = vmatmul.mubr.bf16.gmra.mxu0 %v765
      %v850 = vpop.f32.mrf.mxu0
      %v851 = vadd.f32 %v635, %v850
      %v852 = vpop.f32.mrf.mxu0
      %v853 = vpop.f32.mrf.mxu0
      %v854 = vadd.f32 %v638, %v853
      %v855 = vpop.f32.mrf.mxu0
      %856 = vmatprep.mubr.bf16.mxu0 0
      %857 = vmatmul.mubr.bf16.gmra.mxu0 %v767
      %v858 = vpop.f32.mrf.mxu0
      %v859 = vadd.f32 %v643, %v858
      %v860 = vpop.f32.mrf.mxu0
      %v861 = vpop.f32.mrf.mxu0
      %v862 = vadd.f32 %v646, %v861
      %v863 = vpop.f32.mrf.mxu0
      %864 = vmatprep.mubr.bf16.mxu0 0
      %865 = vmatmul.mubr.bf16.gmra.mxu0 %v769
      %v866 = vpop.f32.mrf.mxu0
      %v867 = vadd.f32 %v651, %v866
      %v868 = vpop.f32.mrf.mxu0
      %v869 = vpop.f32.mrf.mxu0
      %v870 = vadd.f32 %v654, %v869
      %v871 = vpop.f32.mrf.mxu0
      %872 = vmatprep.mubr.bf16.mxu0 0
      %873 = vmatmul.mubr.bf16.gmra.mxu0 %v771
      %v874 = vpop.f32.mrf.mxu0
      %v875 = vadd.f32 %v659, %v874
      %v876 = vpop.f32.mrf.mxu0
      %v877 = vpop.f32.mrf.mxu0
      %v878 = vadd.f32 %v662, %v877
      %v879 = vpop.f32.mrf.mxu0
      %880 = vmatprep.mubr.bf16.mxu0 0
      %881 = vmatmul.mubr.bf16.gmra.mxu0 %v773
      %v882 = vpop.f32.mrf.mxu0
      %v883 = vadd.f32 %v667, %v882
      %v884 = vpop.f32.mrf.mxu0
      %v885 = vpop.f32.mrf.mxu0
      %v886 = vadd.f32 %v670, %v885
      %v887 = vpop.f32.mrf.mxu0
      %888 = vmatprep.mubr.bf16.mxu0 0
      %889 = vmatmul.mubr.bf16.gmra.mxu0 %v775
      %v890 = vpop.f32.mrf.mxu0
      %v891 = vadd.f32 %v675, %v890
      %v892 = vpop.f32.mrf.mxu0
      %v893 = vpop.f32.mrf.mxu0
      %v894 = vadd.f32 %v678, %v893
      %v895 = vpop.f32.mrf.mxu0
      %896 = vmatprep.mubr.bf16.mxu0 0
      %897 = vmatmul.mubr.bf16.gmra.mxu0 %v777
      %v898 = vpop.f32.mrf.mxu0
      %v899 = vadd.f32 %v683, %v898
      %v900 = vpop.f32.mrf.mxu0
      %v901 = vpop.f32.mrf.mxu0
      %v902 = vadd.f32 %v686, %v901
      %v903 = vpop.f32.mrf.mxu0
      %904 = vmatprep.mubr.bf16.mxu0 0
      %905 = vmatmul.mubr.bf16.gmra.mxu0 %v779
      %v906 = vpop.f32.mrf.mxu0
      %v907 = vadd.f32 %v691, %v906
      %v908 = vpop.f32.mrf.mxu0
      %v909 = vpop.f32.mrf.mxu0
      %v910 = vadd.f32 %v694, %v909
      %v911 = vpop.f32.mrf.mxu0
      %912 = vmatprep.mubr.bf16.mxu0 0
      %913 = vmatmul.mubr.bf16.gmra.mxu0 %v781
      %v914 = vpop.f32.mrf.mxu0
      %v915 = vadd.f32 %v699, %v914
      %v916 = vpop.f32.mrf.mxu0
      %v917 = vpop.f32.mrf.mxu0
      %v918 = vadd.f32 %v702, %v917
      %v919 = vpop.f32.mrf.mxu0
      %920 = vmatprep.mubr.bf16.mxu0 0
      %921 = vmatmul.mubr.bf16.gmra.mxu0 %v783
      %v922 = vpop.f32.mrf.mxu0
      %v923 = vadd.f32 %v707, %v922
      %v924 = vpop.f32.mrf.mxu0
      %v925 = vpop.f32.mrf.mxu0
      %v926 = vadd.f32 %v710, %v925
      %v927 = vpop.f32.mrf.mxu0
      %928 = vmatprep.mubr.bf16.mxu0 0
      %929 = vmatmul.mubr.bf16.gmra.mxu0 %v785
      %v930 = vpop.f32.mrf.mxu0
      %v931 = vadd.f32 %v715, %v930
      %v932 = vpop.f32.mrf.mxu0
      %v933 = vpop.f32.mrf.mxu0
      %v934 = vadd.f32 %v718, %v933
      %v935 = vpop.f32.mrf.mxu0
      %936 = vmatprep.mubr.bf16.mxu0 0
      %937 = vmatmul.mubr.bf16.gmra.mxu0 %v787
      %v938 = vpop.f32.mrf.mxu0
      %v939 = vadd.f32 %v723, %v938
      %v940 = vpop.f32.mrf.mxu0
      %v941 = vpop.f32.mrf.mxu0
      %v942 = vadd.f32 %v726, %v941
      %v943 = vpop.f32.mrf.mxu0
      %944 = vmatprep.mubr.bf16.mxu0 0
      %945 = vmatmul.mubr.bf16.gmra.mxu0 %v789
      %v946 = vpop.f32.mrf.mxu0
      %v947 = vadd.f32 %v731, %v946
      %v948 = vpop.f32.mrf.mxu0
      %v949 = vpop.f32.mrf.mxu0
      %v950 = vadd.f32 %v734, %v949
      %v951 = vpop.f32.mrf.mxu0
      %952 = vmatprep.mubr.bf16.mxu0 0
      %953 = vmatmul.mubr.bf16.gmra.mxu0 %v791
      %v954 = vpop.f32.mrf.mxu0
      %v955 = vadd.f32 %v739, %v954
      %v956 = vpop.f32.mrf.mxu0
      %v957 = vpop.f32.mrf.mxu0
      %v958 = vadd.f32 %v742, %v957
      %v959 = vpop.f32.mrf.mxu0
      %960 = vmatprep.mubr.bf16.mxu0 0
      %961 = vmatmul.mubr.bf16.gmra.mxu0 %v793
      %v962 = vpop.f32.mrf.mxu0
      %v963 = vadd.f32 %v747, %v962
      %v964 = vpop.f32.mrf.mxu0
      %v965 = vpop.f32.mrf.mxu0
      %v966 = vadd.f32 %v750, %v965
      %v967 = vpop.f32.mrf.mxu0
      %968 = vmatprep.mubr.bf16.mxu0 0
      %969 = vmatmul.mubr.bf16.gmra.mxu0 %v795
      %v970 = vpop.f32.mrf.mxu0
      %v971 = vadd.f32 %v755, %v970
      %v972 = vpop.f32.mrf.mxu0
      %v973 = vpop.f32.mrf.mxu0
      %v974 = vadd.f32 %v758, %v973
      %v975 = vpop.f32.mrf.mxu0
      %976 = vdwg.mxu0
      %v977 = vld [vmem:[%s230] sm:$0xe]
      %s978 = scalar_lea.vmem %s1, 4
      %v979 = vld [vmem:[%s978] sm:$0x3]
      %v981 = vunpack.c.l.b16 %v977
      %v982 = vpack.c.b16 %v321, %v981
      %vm983 = vcmask 1046528
      %v984 = vrot.slane %v982, 1
      %v985 = vrot.slane %v358, 1
      %v986 = vsel %vm983, %v984, %v985
      %v987 = vrot.slane %v359, 1
      %v988 = vsel %vm983, %v985, %v987
      %v989 = vrot.slane %v360, 1
      %v990 = vsel %vm983, %v987, %v989
      %v991 = vrot.slane %v361, 1
      %v992 = vsel %vm983, %v989, %v991
      %v993 = vrot.slane %v362, 1
      %v994 = vsel %vm983, %v991, %v993
      %v995 = vrot.slane %v363, 1
      %v996 = vsel %vm983, %v993, %v995
      %v997 = vrot.slane %v364, 1
      %v998 = vsel %vm983, %v995, %v997
      %v999 = vrot.slane %v365, 1
      %v1000 = vsel %vm983, %v997, %v999
      %v1001 = vrot.slane %v366, 1
      %v1002 = vsel %vm983, %v999, %v1001
      %v1003 = vrot.slane %v367, 1
      %v1004 = vsel %vm983, %v1001, %v1003
      %v1005 = vrot.slane %v368, 1
      %v1006 = vsel %vm983, %v1003, %v1005
      %v1007 = vrot.slane %v369, 1
      %v1008 = vsel %vm983, %v1005, %v1007
      %v1009 = vrot.slane %v370, 1
      %v1010 = vsel %vm983, %v1007, %v1009
      %v1011 = vrot.slane %v371, 1
      %v1012 = vsel %vm983, %v1009, %v1011
      %v1013 = vrot.slane %v372, 1
      %v1014 = vsel %vm983, %v1011, %v1013
      %v1015 = vrot.slane %v373, 1
      %v1016 = vsel %vm983, %v1013, %v1015
      %v1017 = vrot.slane %v374, 1
      %v1018 = vsel %vm983, %v1015, %v1017
      %v1019 = vrot.slane %v375, 1
      %v1020 = vsel %vm983, %v1017, %v1019
      %v1022 = vsel %vm525, %v986, 0
      %v1025 = vsel %vm525, %v988, 0
      %v1028 = vsel %vm525, %v990, 0
      %v1031 = vsel %vm525, %v992, 0
      %v1034 = vsel %vm525, %v994, 0
      %v1037 = vsel %vm525, %v996, 0
      %v1040 = vsel %vm525, %v998, 0
      %v1043 = vsel %vm525, %v1000, 0
      %v1046 = vsel %vm525, %v1002, 0
      %v1049 = vsel %vm525, %v1004, 0
      %v1052 = vsel %vm525, %v1006, 0
      %v1055 = vsel %vm525, %v1008, 0
      %v1058 = vsel %vm525, %v1010, 0
      %v1061 = vsel %vm525, %v1012, 0
      %v1064 = vsel %vm525, %v1014, 0
      %v1067 = vsel %vm525, %v1016, 0
      %v1070 = vsel %vm525, %v1018, 0
      %v1073 = vsel %vm525, %v1020, 0
      %v1076 = vsel %vm580, %v979, 0
      %1078 = vmatprep.subr.bf16.mxu0 0
      %1079 = vmatpush1.bf16.msra.mxu0 0
      %1080 = vmatprep.subr.bf16.mxu0 0
      %1081 = vmatpush1.bf16.msra.mxu0 0
      %1082 = vmatprep.subr.bf16.mxu0 0
      %1083 = vmatpush1.bf16.msra.mxu0 0
      %1084 = vmatprep.subr.bf16.mxu0 0
      %1085 = vmatpush1.bf16.msra.mxu0 0
      %1086 = vmatprep.subr.bf16.mxu0 0
      %1087 = vmatpush1.bf16.msra.mxu0 0
      %1088 = vmatprep.subr.bf16.mxu0 0
      %1089 = vmatpush1.bf16.msra.mxu0 0
      %1090 = vmatprep.subr.bf16.mxu0 0
      %1091 = vmatpush1.bf16.msra.mxu0 0
      %1092 = vmatprep.subr.bf16.mxu0 0
      %1093 = vmatpush1.bf16.msra.mxu0 %v1076
      %1094 = vmatprep.subr.bf16.mxu0 0
      %1095 = vmatpush2.bf16.msra.mxu0 0
      %1096 = vmatprep.subr.bf16.mxu0 0
      %1097 = vmatpush2.bf16.msra.mxu0 0
      %1098 = vmatprep.subr.bf16.mxu0 0
      %1099 = vmatpush2.bf16.msra.mxu0 0
      %1100 = vmatprep.subr.bf16.mxu0 0
      %1101 = vmatpush2.bf16.msra.mxu0 0
      %1102 = vmatprep.subr.bf16.mxu0 0
      %1103 = vmatpush2.bf16.msra.mxu0 0
      %1104 = vmatprep.subr.bf16.mxu0 0
      %1105 = vmatpush2.bf16.msra.mxu0 0
      %1106 = vmatprep.subr.bf16.mxu0 0
      %1107 = vmatpush2.bf16.msra.mxu0 0
      %1108 = vmatprep.subr.bf16.mxu0 0
      %1109 = vmatpush2.bf16.msra.mxu0 0
      %1110 = vmatprep.mubr.bf16.mxu0 0
      %1111 = vmatmul.mubr.bf16.gmra.mxu0 %v1022
      %v1112 = vpop.f32.mrf.mxu0
      %v1113 = vadd.f32 0.0, %v1112
      %v1114 = vpop.f32.mrf.mxu0
      %v1115 = vpop.f32.mrf.mxu0
      %v1116 = vadd.f32 0.0, %v1115
      %v1117 = vpop.f32.mrf.mxu0
      %1118 = vmatprep.mubr.bf16.mxu0 0
      %1119 = vmatmul.mubr.bf16.gmra.mxu0 %v1025
      %v1120 = vpop.f32.mrf.mxu0
      %v1121 = vadd.f32 0.0, %v1120
      %v1122 = vpop.f32.mrf.mxu0
      %v1123 = vpop.f32.mrf.mxu0
      %v1124 = vadd.f32 0.0, %v1123
      %v1125 = vpop.f32.mrf.mxu0
      %1126 = vmatprep.mubr.bf16.mxu0 0
      %1127 = vmatmul.mubr.bf16.gmra.mxu0 %v1028
      %v1128 = vpop.f32.mrf.mxu0
      %v1129 = vadd.f32 0.0, %v1128
      %v1130 = vpop.f32.mrf.mxu0
      %v1131 = vpop.f32.mrf.mxu0
      %v1132 = vadd.f32 0.0, %v1131
      %v1133 = vpop.f32.mrf.mxu0
      %1134 = vmatprep.mubr.bf16.mxu0 0
      %1135 = vmatmul.mubr.bf16.gmra.mxu0 %v1031
      %v1136 = vpop.f32.mrf.mxu0
      %v1137 = vadd.f32 0.0, %v1136
      %v1138 = vpop.f32.mrf.mxu0
      %v1139 = vpop.f32.mrf.mxu0
      %v1140 = vadd.f32 0.0, %v1139
      %v1141 = vpop.f32.mrf.mxu0
      %1142 = vmatprep.mubr.bf16.mxu0 0
      %1143 = vmatmul.mubr.bf16.gmra.mxu0 %v1034
      %v1144 = vpop.f32.mrf.mxu0
      %v1145 = vadd.f32 0.0, %v1144
      %v1146 = vpop.f32.mrf.mxu0
      %v1147 = vpop.f32.mrf.mxu0
      %v1148 = vadd.f32 0.0, %v1147
      %v1149 = vpop.f32.mrf.mxu0
      %1150 = vmatprep.mubr.bf16.mxu0 0
      %1151 = vmatmul.mubr.bf16.gmra.mxu0 %v1037
      %v1152 = vpop.f32.mrf.mxu0
      %v1153 = vadd.f32 0.0, %v1152
      %v1154 = vpop.f32.mrf.mxu0
      %v1155 = vpop.f32.mrf.mxu0
      %v1156 = vadd.f32 0.0, %v1155
      %v1157 = vpop.f32.mrf.mxu0
      %1158 = vmatprep.mubr.bf16.mxu0 0
      %1159 = vmatmul.mubr.bf16.gmra.mxu0 %v1040
      %v1160 = vpop.f32.mrf.mxu0
      %v1161 = vadd.f32 0.0, %v1160
      %v1162 = vpop.f32.mrf.mxu0
      %v1163 = vpop.f32.mrf.mxu0
      %v1164 = vadd.f32 0.0, %v1163
      %v1165 = vpop.f32.mrf.mxu0
      %1166 = vmatprep.mubr.bf16.mxu0 0
      %1167 = vmatmul.mubr.bf16.gmra.mxu0 %v1043
      %v1168 = vpop.f32.mrf.mxu0
      %v1169 = vadd.f32 0.0, %v1168
      %v1170 = vpop.f32.mrf.mxu0
      %v1171 = vpop.f32.mrf.mxu0
      %v1172 = vadd.f32 0.0, %v1171
      %v1173 = vpop.f32.mrf.mxu0
      %1174 = vmatprep.mubr.bf16.mxu0 0
      %1175 = vmatmul.mubr.bf16.gmra.mxu0 %v1046
      %v1176 = vpop.f32.mrf.mxu0
      %v1177 = vadd.f32 0.0, %v1176
      %v1178 = vpop.f32.mrf.mxu0
      %v1179 = vpop.f32.mrf.mxu0
      %v1180 = vadd.f32 0.0, %v1179
      %v1181 = vpop.f32.mrf.mxu0
      %1182 = vmatprep.mubr.bf16.mxu0 0
      %1183 = vmatmul.mubr.bf16.gmra.mxu0 %v1049
      %v1184 = vpop.f32.mrf.mxu0
      %v1185 = vadd.f32 0.0, %v1184
      %v1186 = vpop.f32.mrf.mxu0
      %v1187 = vpop.f32.mrf.mxu0
      %v1188 = vadd.f32 0.0, %v1187
      %v1189 = vpop.f32.mrf.mxu0
      %1190 = vmatprep.mubr.bf16.mxu0 0
      %1191 = vmatmul.mubr.bf16.gmra.mxu0 %v1052
      %v1192 = vpop.f32.mrf.mxu0
      %v1193 = vadd.f32 0.0, %v1192
      %v1194 = vpop.f32.mrf.mxu0
      %v1195 = vpop.f32.mrf.mxu0
      %v1196 = vadd.f32 0.0, %v1195
      %v1197 = vpop.f32.mrf.mxu0
      %1198 = vmatprep.mubr.bf16.mxu0 0
      %1199 = vmatmul.mubr.bf16.gmra.mxu0 %v1055
      %v1200 = vpop.f32.mrf.mxu0
      %v1201 = vadd.f32 0.0, %v1200
      %v1202 = vpop.f32.mrf.mxu0
      %v1203 = vpop.f32.mrf.mxu0
      %v1204 = vadd.f32 0.0, %v1203
      %v1205 = vpop.f32.mrf.mxu0
      %1206 = vmatprep.mubr.bf16.mxu0 0
      %1207 = vmatmul.mubr.bf16.gmra.mxu0 %v1058
      %v1208 = vpop.f32.mrf.mxu0
      %v1209 = vadd.f32 0.0, %v1208
      %v1210 = vpop.f32.mrf.mxu0
      %v1211 = vpop.f32.mrf.mxu0
      %v1212 = vadd.f32 0.0, %v1211
      %v1213 = vpop.f32.mrf.mxu0
      %1214 = vmatprep.mubr.bf16.mxu0 0
      %1215 = vmatmul.mubr.bf16.gmra.mxu0 %v1061
      %v1216 = vpop.f32.mrf.mxu0
      %v1217 = vadd.f32 0.0, %v1216
      %v1218 = vpop.f32.mrf.mxu0
      %v1219 = vpop.f32.mrf.mxu0
      %v1220 = vadd.f32 0.0, %v1219
      %v1221 = vpop.f32.mrf.mxu0
      %1222 = vmatprep.mubr.bf16.mxu0 0
      %1223 = vmatmul.mubr.bf16.gmra.mxu0 %v1064
      %v1224 = vpop.f32.mrf.mxu0
      %v1225 = vadd.f32 0.0, %v1224
      %v1226 = vpop.f32.mrf.mxu0
      %v1227 = vpop.f32.mrf.mxu0
      %v1228 = vadd.f32 0.0, %v1227
      %v1229 = vpop.f32.mrf.mxu0
      %1230 = vmatprep.mubr.bf16.mxu0 0
      %1231 = vmatmul.mubr.bf16.gmra.mxu0 %v1067
      %v1232 = vpop.f32.mrf.mxu0
      %v1233 = vadd.f32 0.0, %v1232
      %v1234 = vpop.f32.mrf.mxu0
      %v1235 = vpop.f32.mrf.mxu0
      %v1236 = vadd.f32 0.0, %v1235
      %v1237 = vpop.f32.mrf.mxu0
      %1238 = vmatprep.mubr.bf16.mxu0 0
      %1239 = vmatmul.mubr.bf16.gmra.mxu0 %v1070
      %v1240 = vpop.f32.mrf.mxu0
      %v1241 = vadd.f32 0.0, %v1240
      %v1242 = vpop.f32.mrf.mxu0
      %v1243 = vpop.f32.mrf.mxu0
      %v1244 = vadd.f32 0.0, %v1243
      %v1245 = vpop.f32.mrf.mxu0
      %1246 = vmatprep.mubr.bf16.mxu0 0
      %1247 = vmatmul.mubr.bf16.gmra.mxu0 %v1073
      %v1248 = vpop.f32.mrf.mxu0
      %v1249 = vadd.f32 0.0, %v1248
      %v1250 = vpop.f32.mrf.mxu0
      %v1251 = vpop.f32.mrf.mxu0
      %v1252 = vadd.f32 0.0, %v1251
      %v1253 = vpop.f32.mrf.mxu0
      %1254 = vdwg.mxu0
      %v1255 = vadd.f32 %v835, %v1113
      %v1256 = vadd.f32 %v838, %v1116
      %v1257 = vadd.f32 %v843, %v1121
      %v1258 = vadd.f32 %v846, %v1124
      %v1259 = vadd.f32 %v851, %v1129
      %v1260 = vadd.f32 %v854, %v1132
      %v1261 = vadd.f32 %v859, %v1137
      %v1262 = vadd.f32 %v862, %v1140
      %v1263 = vadd.f32 %v867, %v1145
      %v1264 = vadd.f32 %v870, %v1148
      %v1265 = vadd.f32 %v875, %v1153
      %v1266 = vadd.f32 %v878, %v1156
      %v1267 = vadd.f32 %v883, %v1161
      %v1268 = vadd.f32 %v886, %v1164
      %v1269 = vadd.f32 %v891, %v1169
      %v1270 = vadd.f32 %v894, %v1172
      %v1271 = vadd.f32 %v899, %v1177
      %v1272 = vadd.f32 %v902, %v1180
      %v1273 = vadd.f32 %v907, %v1185
      %v1274 = vadd.f32 %v910, %v1188
      %v1275 = vadd.f32 %v915, %v1193
      %v1276 = vadd.f32 %v918, %v1196
      %v1277 = vadd.f32 %v923, %v1201
      %v1278 = vadd.f32 %v926, %v1204
      %v1279 = vadd.f32 %v931, %v1209
      %v1280 = vadd.f32 %v934, %v1212
      %v1281 = vadd.f32 %v939, %v1217
      %v1282 = vadd.f32 %v942, %v1220
      %v1283 = vadd.f32 %v947, %v1225
      %v1284 = vadd.f32 %v950, %v1228
      %v1285 = vadd.f32 %v955, %v1233
      %v1286 = vadd.f32 %v958, %v1236
      %v1287 = vadd.f32 %v963, %v1241
      %v1288 = vadd.f32 %v966, %v1244
      %v1289 = vadd.f32 %v971, %v1249
      %v1290 = vadd.f32 %v974, %v1252
      %v1291 = vld [vmem:[%s230 + $0x8] sm:$0xe]
      %v1292 = vld [vmem:[%s230 + $0xc] sm:$0xf]
      %v1293 = vld [vmem:[%s230 + $0x10] sm:$0xf]
      %v1294 = vld [vmem:[%s230 + $0x14] sm:$0xf]
      %v1295 = vld [vmem:[%s230 + $0x18] sm:$0xf]
      %v1296 = vld [vmem:[%s230 + $0x1c] sm:$0xf]
      %v1297 = vld [vmem:[%s230 + $0x20] sm:$0xf]
      %v1298 = vld [vmem:[%s230 + $0x24] sm:$0xf]
      %v1299 = vld [vmem:[%s230 + $0x28] sm:$0xf]
      %v1300 = vld [vmem:[%s230 + $0x2c] sm:$0xf]
      %v1301 = vld [vmem:[%s230 + $0x30] sm:$0xf]
      %v1302 = vld [vmem:[%s230 + $0x34] sm:$0xf]
      %v1303 = vld [vmem:[%s230 + $0x38] sm:$0xf]
      %v1304 = vld [vmem:[%s230 + $0x3c] sm:$0xf]
      %v1305 = vld [vmem:[%s230 + $0x40] sm:$0xf]
      %v1306 = vld [vmem:[%s230 + $0x44] sm:$0xf]
      %v1307 = vld [vmem:[%s230 + $0x48] sm:$0xf]
      %v1308 = vld [vmem:[%s230 + $0x4c] sm:$0xf]
      %v1309 = vld [vmem:[%s230 + $0x50] sm:$0xf]
      %v1310 = vld [vmem:[%s230 + $0x54] sm:$0xf]
      %v1311 = vld [vmem:[%s230 + $0x58] sm:$0xf]
      %v1312 = vld [vmem:[%s230 + $0x5c] sm:$0xf]
      %v1313 = vld [vmem:[%s230 + $0x60] sm:$0xf]
      %v1314 = vld [vmem:[%s230 + $0x64] sm:$0xf]
      %v1315 = vld [vmem:[%s230 + $0x68] sm:$0xf]
      %v1316 = vld [vmem:[%s230 + $0x6c] sm:$0xf]
      %v1317 = vld [vmem:[%s230 + $0x70] sm:$0xf]
      %v1318 = vld [vmem:[%s230 + $0x74] sm:$0xf]
      %v1319 = vld [vmem:[%s230 + $0x78] sm:$0xf]
      %v1320 = vld [vmem:[%s230 + $0x7c] sm:$0xf]
      %v1321 = vld [vmem:[%s230 + $0x80] sm:$0xf]
      %v1322 = vld [vmem:[%s230 + $0x84] sm:$0xf]
      %v1323 = vld [vmem:[%s230 + $0x88] sm:$0xf]
      %v1324 = vld [vmem:[%s230 + $0x8c] sm:$0xf]
      %v1325 = vld [vmem:[%s230 + $0x90] sm:$0xf]
      %v1326 = vld [vmem:[%s230 + $0x94] sm:$0xf]
      %v1327 = vld [vmem:[%s230 + $0x98] sm:$0x1]
      %s1328 = scalar_lea.vmem %s1, 6
      %v1329 = vld [vmem:[%s1328] sm:$0x3]
      %v1367 = vunpack.c.l.b16 %v1291
      %v1368 = vunpack.c.l.b16 %v1292
      %v1369 = vunpack.c.l.b16 %v1293
      %v1370 = vunpack.c.l.b16 %v1294
      %v1371 = vunpack.c.l.b16 %v1295
      %v1372 = vunpack.c.l.b16 %v1296
      %v1373 = vunpack.c.l.b16 %v1297
      %v1374 = vunpack.c.l.b16 %v1298
      %v1375 = vunpack.c.l.b16 %v1299
      %v1376 = vunpack.c.l.b16 %v1300
      %v1377 = vunpack.c.l.b16 %v1301
      %v1378 = vunpack.c.l.b16 %v1302
      %v1379 = vunpack.c.l.b16 %v1303
      %v1380 = vunpack.c.l.b16 %v1304
      %v1381 = vunpack.c.l.b16 %v1305
      %v1382 = vunpack.c.l.b16 %v1306
      %v1383 = vunpack.c.l.b16 %v1307
      %v1384 = vunpack.c.l.b16 %v1308
      %v1385 = vunpack.c.l.b16 %v1309
      %v1386 = vunpack.c.l.b16 %v1310
      %v1387 = vunpack.c.l.b16 %v1311
      %v1388 = vunpack.c.l.b16 %v1312
      %v1389 = vunpack.c.l.b16 %v1313
      %v1390 = vunpack.c.l.b16 %v1314
      %v1391 = vunpack.c.l.b16 %v1315
      %v1392 = vunpack.c.l.b16 %v1316
      %v1393 = vunpack.c.l.b16 %v1317
      %v1394 = vunpack.c.l.b16 %v1318
      %v1395 = vunpack.c.l.b16 %v1319
      %v1396 = vunpack.c.l.b16 %v1320
      %v1397 = vunpack.c.l.b16 %v1321
      %v1398 = vunpack.c.l.b16 %v1322
      %v1399 = vunpack.c.l.b16 %v1323
      %v1400 = vunpack.c.l.b16 %v1324
      %v1401 = vunpack.c.l.b16 %v1325
      %v1402 = vunpack.c.l.b16 %v1326
      %v1403 = vunpack.c.l.b16 %v1327
      %v1404 = vpack.c.b16 %v1368, %v1367
      %v1405 = vpack.c.b16 %v1370, %v1369
      %v1406 = vpack.c.b16 %v1372, %v1371
      %v1407 = vpack.c.b16 %v1374, %v1373
      %v1408 = vpack.c.b16 %v1376, %v1375
      %v1409 = vpack.c.b16 %v1378, %v1377
      %v1410 = vpack.c.b16 %v1380, %v1379
      %v1411 = vpack.c.b16 %v1382, %v1381
      %v1412 = vpack.c.b16 %v1384, %v1383
      %v1413 = vpack.c.b16 %v1386, %v1385
      %v1414 = vpack.c.b16 %v1388, %v1387
      %v1415 = vpack.c.b16 %v1390, %v1389
      %v1416 = vpack.c.b16 %v1392, %v1391
      %v1417 = vpack.c.b16 %v1394, %v1393
      %v1418 = vpack.c.b16 %v1396, %v1395
      %v1419 = vpack.c.b16 %v1398, %v1397
      %v1420 = vpack.c.b16 %v1400, %v1399
      %v1421 = vpack.c.b16 %v1402, %v1401
      %v1422 = vpack.c.b16 %v1403, %v1403
      %v1423 = vrot.slane %v1404, 1
      %v1424 = vrot.slane %v1405, 1
      %v1425 = vsel %vm983, %v1423, %v1424
      %v1426 = vrot.slane %v1406, 1
      %v1427 = vsel %vm983, %v1424, %v1426
      %v1428 = vrot.slane %v1407, 1
      %v1429 = vsel %vm983, %v1426, %v1428
      %v1430 = vrot.slane %v1408, 1
      %v1431 = vsel %vm983, %v1428, %v1430
      %v1432 = vrot.slane %v1409, 1
      %v1433 = vsel %vm983, %v1430, %v1432
      %v1434 = vrot.slane %v1410, 1
      %v1435 = vsel %vm983, %v1432, %v1434
      %v1436 = vrot.slane %v1411, 1
      %v1437 = vsel %vm983, %v1434, %v1436
      %v1438 = vrot.slane %v1412, 1
      %v1439 = vsel %vm983, %v1436, %v1438
      %v1440 = vrot.slane %v1413, 1
      %v1441 = vsel %vm983, %v1438, %v1440
      %v1442 = vrot.slane %v1414, 1
      %v1443 = vsel %vm983, %v1440, %v1442
      %v1444 = vrot.slane %v1415, 1
      %v1445 = vsel %vm983, %v1442, %v1444
      %v1446 = vrot.slane %v1416, 1
      %v1447 = vsel %vm983, %v1444, %v1446
      %v1448 = vrot.slane %v1417, 1
      %v1449 = vsel %vm983, %v1446, %v1448
      %v1450 = vrot.slane %v1418, 1
      %v1451 = vsel %vm983, %v1448, %v1450
      %v1452 = vrot.slane %v1419, 1
      %v1453 = vsel %vm983, %v1450, %v1452
      %v1454 = vrot.slane %v1420, 1
      %v1455 = vsel %vm983, %v1452, %v1454
      %v1456 = vrot.slane %v1421, 1
      %v1457 = vsel %vm983, %v1454, %v1456
      %v1458 = vrot.slane %v1422, 1
      %v1459 = vsel %vm983, %v1456, %v1458
      %v1461 = vsel %vm525, %v1425, 0
      %v1464 = vsel %vm525, %v1427, 0
      %v1467 = vsel %vm525, %v1429, 0
      %v1470 = vsel %vm525, %v1431, 0
      %v1473 = vsel %vm525, %v1433, 0
      %v1476 = vsel %vm525, %v1435, 0
      %v1479 = vsel %vm525, %v1437, 0
      %v1482 = vsel %vm525, %v1439, 0
      %v1485 = vsel %vm525, %v1441, 0
      %v1488 = vsel %vm525, %v1443, 0
      %v1491 = vsel %vm525, %v1445, 0
      %v1494 = vsel %vm525, %v1447, 0
      %v1497 = vsel %vm525, %v1449, 0
      %v1500 = vsel %vm525, %v1451, 0
      %v1503 = vsel %vm525, %v1453, 0
      %v1506 = vsel %vm525, %v1455, 0
      %v1509 = vsel %vm525, %v1457, 0
      %v1512 = vsel %vm525, %v1459, 0
      %v1515 = vsel %vm580, %v1329, 0
      %1517 = vmatprep.subr.bf16.mxu0 0
      %1518 = vmatpush1.bf16.msra.mxu0 0
      %1519 = vmatprep.subr.bf16.mxu0 0
      %1520 = vmatpush1.bf16.msra.mxu0 0
      %1521 = vmatprep.subr.bf16.mxu0 0
      %1522 = vmatpush1.bf16.msra.mxu0 0
      %1523 = vmatprep.subr.bf16.mxu0 0
      %1524 = vmatpush1.bf16.msra.mxu0 0
      %1525 = vmatprep.subr.bf16.mxu0 0
      %1526 = vmatpush1.bf16.msra.mxu0 0
      %1527 = vmatprep.subr.bf16.mxu0 0
      %1528 = vmatpush1.bf16.msra.mxu0 0
      %1529 = vmatprep.subr.bf16.mxu0 0
      %1530 = vmatpush1.bf16.msra.mxu0 0
      %1531 = vmatprep.subr.bf16.mxu0 0
      %1532 = vmatpush1.bf16.msra.mxu0 %v1515
      %1533 = vmatprep.subr.bf16.mxu0 0
      %1534 = vmatpush2.bf16.msra.mxu0 0
      %1535 = vmatprep.subr.bf16.mxu0 0
      %1536 = vmatpush2.bf16.msra.mxu0 0
      %1537 = vmatprep.subr.bf16.mxu0 0
      %1538 = vmatpush2.bf16.msra.mxu0 0
      %1539 = vmatprep.subr.bf16.mxu0 0
      %1540 = vmatpush2.bf16.msra.mxu0 0
      %1541 = vmatprep.subr.bf16.mxu0 0
      %1542 = vmatpush2.bf16.msra.mxu0 0
      %1543 = vmatprep.subr.bf16.mxu0 0
      %1544 = vmatpush2.bf16.msra.mxu0 0
      %1545 = vmatprep.subr.bf16.mxu0 0
      %1546 = vmatpush2.bf16.msra.mxu0 0
      %1547 = vmatprep.subr.bf16.mxu0 0
      %1548 = vmatpush2.bf16.msra.mxu0 0
      %1549 = vmatprep.mubr.bf16.mxu0 0
      %1550 = vmatmul.mubr.bf16.gmra.mxu0 %v1461
      %v1551 = vpop.f32.mrf.mxu0
      %v1552 = vadd.f32 0.0, %v1551
      %v1553 = vpop.f32.mrf.mxu0
      %v1554 = vpop.f32.mrf.mxu0
      %v1555 = vadd.f32 0.0, %v1554
      %v1556 = vpop.f32.mrf.mxu0
      %1557 = vmatprep.mubr.bf16.mxu0 0
      %1558 = vmatmul.mubr.bf16.gmra.mxu0 %v1464
      %v1559 = vpop.f32.mrf.mxu0
      %v1560 = vadd.f32 0.0, %v1559
      %v1561 = vpop.f32.mrf.mxu0
      %v1562 = vpop.f32.mrf.mxu0
      %v1563 = vadd.f32 0.0, %v1562
      %v1564 = vpop.f32.mrf.mxu0
      %1565 = vmatprep.mubr.bf16.mxu0 0
      %1566 = vmatmul.mubr.bf16.gmra.mxu0 %v1467
      %v1567 = vpop.f32.mrf.mxu0
      %v1568 = vadd.f32 0.0, %v1567
      %v1569 = vpop.f32.mrf.mxu0
      %v1570 = vpop.f32.mrf.mxu0
      %v1571 = vadd.f32 0.0, %v1570
      %v1572 = vpop.f32.mrf.mxu0
      %1573 = vmatprep.mubr.bf16.mxu0 0
      %1574 = vmatmul.mubr.bf16.gmra.mxu0 %v1470
      %v1575 = vpop.f32.mrf.mxu0
      %v1576 = vadd.f32 0.0, %v1575
      %v1577 = vpop.f32.mrf.mxu0
      %v1578 = vpop.f32.mrf.mxu0
      %v1579 = vadd.f32 0.0, %v1578
      %v1580 = vpop.f32.mrf.mxu0
      %1581 = vmatprep.mubr.bf16.mxu0 0
      %1582 = vmatmul.mubr.bf16.gmra.mxu0 %v1473
      %v1583 = vpop.f32.mrf.mxu0
      %v1584 = vadd.f32 0.0, %v1583
      %v1585 = vpop.f32.mrf.mxu0
      %v1586 = vpop.f32.mrf.mxu0
      %v1587 = vadd.f32 0.0, %v1586
      %v1588 = vpop.f32.mrf.mxu0
      %1589 = vmatprep.mubr.bf16.mxu0 0
      %1590 = vmatmul.mubr.bf16.gmra.mxu0 %v1476
      %v1591 = vpop.f32.mrf.mxu0
      %v1592 = vadd.f32 0.0, %v1591
      %v1593 = vpop.f32.mrf.mxu0
      %v1594 = vpop.f32.mrf.mxu0
      %v1595 = vadd.f32 0.0, %v1594
      %v1596 = vpop.f32.mrf.mxu0
      %1597 = vmatprep.mubr.bf16.mxu0 0
      %1598 = vmatmul.mubr.bf16.gmra.mxu0 %v1479
      %v1599 = vpop.f32.mrf.mxu0
      %v1600 = vadd.f32 0.0, %v1599
      %v1601 = vpop.f32.mrf.mxu0
      %v1602 = vpop.f32.mrf.mxu0
      %v1603 = vadd.f32 0.0, %v1602
      %v1604 = vpop.f32.mrf.mxu0
      %1605 = vmatprep.mubr.bf16.mxu0 0
      %1606 = vmatmul.mubr.bf16.gmra.mxu0 %v1482
      %v1607 = vpop.f32.mrf.mxu0
      %v1608 = vadd.f32 0.0, %v1607
      %v1609 = vpop.f32.mrf.mxu0
      %v1610 = vpop.f32.mrf.mxu0
      %v1611 = vadd.f32 0.0, %v1610
      %v1612 = vpop.f32.mrf.mxu0
      %1613 = vmatprep.mubr.bf16.mxu0 0
      %1614 = vmatmul.mubr.bf16.gmra.mxu0 %v1485
      %v1615 = vpop.f32.mrf.mxu0
      %v1616 = vadd.f32 0.0, %v1615
      %v1617 = vpop.f32.mrf.mxu0
      %v1618 = vpop.f32.mrf.mxu0
      %v1619 = vadd.f32 0.0, %v1618
      %v1620 = vpop.f32.mrf.mxu0
      %1621 = vmatprep.mubr.bf16.mxu0 0
      %1622 = vmatmul.mubr.bf16.gmra.mxu0 %v1488
      %v1623 = vpop.f32.mrf.mxu0
      %v1624 = vadd.f32 0.0, %v1623
      %v1625 = vpop.f32.mrf.mxu0
      %v1626 = vpop.f32.mrf.mxu0
      %v1627 = vadd.f32 0.0, %v1626
      %v1628 = vpop.f32.mrf.mxu0
      %1629 = vmatprep.mubr.bf16.mxu0 0
      %1630 = vmatmul.mubr.bf16.gmra.mxu0 %v1491
      %v1631 = vpop.f32.mrf.mxu0
      %v1632 = vadd.f32 0.0, %v1631
      %v1633 = vpop.f32.mrf.mxu0
      %v1634 = vpop.f32.mrf.mxu0
      %v1635 = vadd.f32 0.0, %v1634
      %v1636 = vpop.f32.mrf.mxu0
      %1637 = vmatprep.mubr.bf16.mxu0 0
      %1638 = vmatmul.mubr.bf16.gmra.mxu0 %v1494
      %v1639 = vpop.f32.mrf.mxu0
      %v1640 = vadd.f32 0.0, %v1639
      %v1641 = vpop.f32.mrf.mxu0
      %v1642 = vpop.f32.mrf.mxu0
      %v1643 = vadd.f32 0.0, %v1642
      %v1644 = vpop.f32.mrf.mxu0
      %1645 = vmatprep.mubr.bf16.mxu0 0
      %1646 = vmatmul.mubr.bf16.gmra.mxu0 %v1497
      %v1647 = vpop.f32.mrf.mxu0
      %v1648 = vadd.f32 0.0, %v1647
      %v1649 = vpop.f32.mrf.mxu0
      %v1650 = vpop.f32.mrf.mxu0
      %v1651 = vadd.f32 0.0, %v1650
      %v1652 = vpop.f32.mrf.mxu0
      %1653 = vmatprep.mubr.bf16.mxu0 0
      %1654 = vmatmul.mubr.bf16.gmra.mxu0 %v1500
      %v1655 = vpop.f32.mrf.mxu0
      %v1656 = vadd.f32 0.0, %v1655
      %v1657 = vpop.f32.mrf.mxu0
      %v1658 = vpop.f32.mrf.mxu0
      %v1659 = vadd.f32 0.0, %v1658
      %v1660 = vpop.f32.mrf.mxu0
      %1661 = vmatprep.mubr.bf16.mxu0 0
      %1662 = vmatmul.mubr.bf16.gmra.mxu0 %v1503
      %v1663 = vpop.f32.mrf.mxu0
      %v1664 = vadd.f32 0.0, %v1663
      %v1665 = vpop.f32.mrf.mxu0
      %v1666 = vpop.f32.mrf.mxu0
      %v1667 = vadd.f32 0.0, %v1666
      %v1668 = vpop.f32.mrf.mxu0
      %1669 = vmatprep.mubr.bf16.mxu0 0
      %1670 = vmatmul.mubr.bf16.gmra.mxu0 %v1506
      %v1671 = vpop.f32.mrf.mxu0
      %v1672 = vadd.f32 0.0, %v1671
      %v1673 = vpop.f32.mrf.mxu0
      %v1674 = vpop.f32.mrf.mxu0
      %v1675 = vadd.f32 0.0, %v1674
      %v1676 = vpop.f32.mrf.mxu0
      %1677 = vmatprep.mubr.bf16.mxu0 0
      %1678 = vmatmul.mubr.bf16.gmra.mxu0 %v1509
      %v1679 = vpop.f32.mrf.mxu0
      %v1680 = vadd.f32 0.0, %v1679
      %v1681 = vpop.f32.mrf.mxu0
      %v1682 = vpop.f32.mrf.mxu0
      %v1683 = vadd.f32 0.0, %v1682
      %v1684 = vpop.f32.mrf.mxu0
      %1685 = vmatprep.mubr.bf16.mxu0 0
      %1686 = vmatmul.mubr.bf16.gmra.mxu0 %v1512
      %v1687 = vpop.f32.mrf.mxu0
      %v1688 = vadd.f32 0.0, %v1687
      %v1689 = vpop.f32.mrf.mxu0
      %v1690 = vpop.f32.mrf.mxu0
      %v1691 = vadd.f32 0.0, %v1690
      %v1692 = vpop.f32.mrf.mxu0
      %1693 = vdwg.mxu0
      %v1694 = vadd.f32 %v1255, %v1552
      %v1695 = vadd.f32 %v1256, %v1555
      %v1696 = vadd.f32 %v1257, %v1560
      %v1697 = vadd.f32 %v1258, %v1563
      %v1698 = vadd.f32 %v1259, %v1568
      %v1699 = vadd.f32 %v1260, %v1571
      %v1700 = vadd.f32 %v1261, %v1576
      %v1701 = vadd.f32 %v1262, %v1579
      %v1702 = vadd.f32 %v1263, %v1584
      %v1703 = vadd.f32 %v1264, %v1587
      %v1704 = vadd.f32 %v1265, %v1592
      %v1705 = vadd.f32 %v1266, %v1595
      %v1706 = vadd.f32 %v1267, %v1600
      %v1707 = vadd.f32 %v1268, %v1603
      %v1708 = vadd.f32 %v1269, %v1608
      %v1709 = vadd.f32 %v1270, %v1611
      %v1710 = vadd.f32 %v1271, %v1616
      %v1711 = vadd.f32 %v1272, %v1619
      %v1712 = vadd.f32 %v1273, %v1624
      %v1713 = vadd.f32 %v1274, %v1627
      %v1714 = vadd.f32 %v1275, %v1632
      %v1715 = vadd.f32 %v1276, %v1635
      %v1716 = vadd.f32 %v1277, %v1640
      %v1717 = vadd.f32 %v1278, %v1643
      %v1718 = vadd.f32 %v1279, %v1648
      %v1719 = vadd.f32 %v1280, %v1651
      %v1720 = vadd.f32 %v1281, %v1656
      %v1721 = vadd.f32 %v1282, %v1659
      %v1722 = vadd.f32 %v1283, %v1664
      %v1723 = vadd.f32 %v1284, %v1667
      %v1724 = vadd.f32 %v1285, %v1672
      %v1725 = vadd.f32 %v1286, %v1675
      %v1726 = vadd.f32 %v1287, %v1680
      %v1727 = vadd.f32 %v1288, %v1683
      %v1728 = vadd.f32 %v1289, %v1688
      %v1729 = vadd.f32 %v1290, %v1691
      %v1730 = vld [vmem:[%s230 + $0x98] sm:$0x3]
      %s1731 = scalar_lea.vmem %s1, 8
      %v1732 = vld [vmem:[%s1731] sm:$0x3]
      %v1734 = vunpack.c.l.b16 %v1730
      %v1735 = vpack.c.b16 %v1734, %v1734
      %vm1736 = vsmask.f32 6400
      %v1738 = vshrl.u32 %v1404, 16
      %v1740 = vrot.slane %v1738, 1
      %v1741 = vshll.u32 %v1404, 16
      %v1743 = vrot.slane %v1741, 2
      %v1744 = vor.u32 %v1740, %v1743
      %v1746 = vshrl.u32 %v1405, 16
      %v1748 = vrot.slane %v1746, 1
      %v1749 = vshll.u32 %v1405, 16
      %v1751 = vrot.slane %v1749, 2
      %v1752 = vor.u32 %v1748, %v1751
      %v1753 = vsel %vm1736, %v1744, %v1752
      %v1755 = vshrl.u32 %v1406, 16
      %v1757 = vrot.slane %v1755, 1
      %v1758 = vshll.u32 %v1406, 16
      %v1760 = vrot.slane %v1758, 2
      %v1761 = vor.u32 %v1757, %v1760
      %v1762 = vsel %vm1736, %v1752, %v1761
      %v1764 = vshrl.u32 %v1407, 16
      %v1766 = vrot.slane %v1764, 1
      %v1767 = vshll.u32 %v1407, 16
      %v1769 = vrot.slane %v1767, 2
      %v1770 = vor.u32 %v1766, %v1769
      %v1771 = vsel %vm1736, %v1761, %v1770
      %v1773 = vshrl.u32 %v1408, 16
      %v1775 = vrot.slane %v1773, 1
      %v1776 = vshll.u32 %v1408, 16
      %v1778 = vrot.slane %v1776, 2
      %v1779 = vor.u32 %v1775, %v1778
      %v1780 = vsel %vm1736, %v1770, %v1779
      %v1782 = vshrl.u32 %v1409, 16
      %v1784 = vrot.slane %v1782, 1
      %v1785 = vshll.u32 %v1409, 16
      %v1787 = vrot.slane %v1785, 2
      %v1788 = vor.u32 %v1784, %v1787
      %v1789 = vsel %vm1736, %v1779, %v1788
      %v1791 = vshrl.u32 %v1410, 16
      %v1793 = vrot.slane %v1791, 1
      %v1794 = vshll.u32 %v1410, 16
      %v1796 = vrot.slane %v1794, 2
      %v1797 = vor.u32 %v1793, %v1796
      %v1798 = vsel %vm1736, %v1788, %v1797
      %v1800 = vshrl.u32 %v1411, 16
      %v1802 = vrot.slane %v1800, 1
      %v1803 = vshll.u32 %v1411, 16
      %v1805 = vrot.slane %v1803, 2
      %v1806 = vor.u32 %v1802, %v1805
      %v1807 = vsel %vm1736, %v1797, %v1806
      %v1809 = vshrl.u32 %v1412, 16
      %v1811 = vrot.slane %v1809, 1
      %v1812 = vshll.u32 %v1412, 16
      %v1814 = vrot.slane %v1812, 2
      %v1815 = vor.u32 %v1811, %v1814
      %v1816 = vsel %vm1736, %v1806, %v1815
      %v1818 = vshrl.u32 %v1413, 16
      %v1820 = vrot.slane %v1818, 1
      %v1821 = vshll.u32 %v1413, 16
      %v1823 = vrot.slane %v1821, 2
      %v1824 = vor.u32 %v1820, %v1823
      %v1825 = vsel %vm1736, %v1815, %v1824
      %v1827 = vshrl.u32 %v1414, 16
      %v1829 = vrot.slane %v1827, 1
      %v1830 = vshll.u32 %v1414, 16
      %v1832 = vrot.slane %v1830, 2
      %v1833 = vor.u32 %v1829, %v1832
      %v1834 = vsel %vm1736, %v1824, %v1833
      %v1836 = vshrl.u32 %v1415, 16
      %v1838 = vrot.slane %v1836, 1
      %v1839 = vshll.u32 %v1415, 16
      %v1841 = vrot.slane %v1839, 2
      %v1842 = vor.u32 %v1838, %v1841
      %v1843 = vsel %vm1736, %v1833, %v1842
      %v1845 = vshrl.u32 %v1416, 16
      %v1847 = vrot.slane %v1845, 1
      %v1848 = vshll.u32 %v1416, 16
      %v1850 = vrot.slane %v1848, 2
      %v1851 = vor.u32 %v1847, %v1850
      %v1852 = vsel %vm1736, %v1842, %v1851
      %v1854 = vshrl.u32 %v1417, 16
      %v1856 = vrot.slane %v1854, 1
      %v1857 = vshll.u32 %v1417, 16
      %v1859 = vrot.slane %v1857, 2
      %v1860 = vor.u32 %v1856, %v1859
      %v1861 = vsel %vm1736, %v1851, %v1860
      %v1863 = vshrl.u32 %v1418, 16
      %v1865 = vrot.slane %v1863, 1
      %v1866 = vshll.u32 %v1418, 16
      %v1868 = vrot.slane %v1866, 2
      %v1869 = vor.u32 %v1865, %v1868
      %v1870 = vsel %vm1736, %v1860, %v1869
      %v1872 = vshrl.u32 %v1419, 16
      %v1874 = vrot.slane %v1872, 1
      %v1875 = vshll.u32 %v1419, 16
      %v1877 = vrot.slane %v1875, 2
      %v1878 = vor.u32 %v1874, %v1877
      %v1879 = vsel %vm1736, %v1869, %v1878
      %v1881 = vshrl.u32 %v1420, 16
      %v1883 = vrot.slane %v1881, 1
      %v1884 = vshll.u32 %v1420, 16
      %v1886 = vrot.slane %v1884, 2
      %v1887 = vor.u32 %v1883, %v1886
      %v1888 = vsel %vm1736, %v1878, %v1887
      %v1890 = vshrl.u32 %v1421, 16
      %v1892 = vrot.slane %v1890, 1
      %v1893 = vshll.u32 %v1421, 16
      %v1895 = vrot.slane %v1893, 2
      %v1896 = vor.u32 %v1892, %v1895
      %v1897 = vsel %vm1736, %v1887, %v1896
      %v1899 = vshrl.u32 %v1735, 16
      %v1901 = vrot.slane %v1899, 1
      %v1902 = vshll.u32 %v1735, 16
      %v1904 = vrot.slane %v1902, 2
      %v1905 = vor.u32 %v1901, %v1904
      %v1906 = vsel %vm1736, %v1896, %v1905
      %v1908 = vsel %vm525, %v1753, 0
      %v1911 = vsel %vm525, %v1762, 0
      %v1914 = vsel %vm525, %v1771, 0
      %v1917 = vsel %vm525, %v1780, 0
      %v1920 = vsel %vm525, %v1789, 0
      %v1923 = vsel %vm525, %v1798, 0
      %v1926 = vsel %vm525, %v1807, 0
      %v1929 = vsel %vm525, %v1816, 0
      %v1932 = vsel %vm525, %v1825, 0
      %v1935 = vsel %vm525, %v1834, 0
      %v1938 = vsel %vm525, %v1843, 0
      %v1941 = vsel %vm525, %v1852, 0
      %v1944 = vsel %vm525, %v1861, 0
      %v1947 = vsel %vm525, %v1870, 0
      %v1950 = vsel %vm525, %v1879, 0
      %v1953 = vsel %vm525, %v1888, 0
      %v1956 = vsel %vm525, %v1897, 0
      %v1959 = vsel %vm525, %v1906, 0
      %v1962 = vsel %vm580, %v1732, 0
      %1964 = vmatprep.subr.bf16.mxu0 0
      %1965 = vmatpush1.bf16.msra.mxu0 0
      %1966 = vmatprep.subr.bf16.mxu0 0
      %1967 = vmatpush1.bf16.msra.mxu0 0
      %1968 = vmatprep.subr.bf16.mxu0 0
      %1969 = vmatpush1.bf16.msra.mxu0 0
      %1970 = vmatprep.subr.bf16.mxu0 0
      %1971 = vmatpush1.bf16.msra.mxu0 0
      %1972 = vmatprep.subr.bf16.mxu0 0
      %1973 = vmatpush1.bf16.msra.mxu0 0
      %1974 = vmatprep.subr.bf16.mxu0 0
      %1975 = vmatpush1.bf16.msra.mxu0 0
      %1976 = vmatprep.subr.bf16.mxu0 0
      %1977 = vmatpush1.bf16.msra.mxu0 0
      %1978 = vmatprep.subr.bf16.mxu0 0
      %1979 = vmatpush1.bf16.msra.mxu0 %v1962
      %1980 = vmatprep.subr.bf16.mxu0 0
      %1981 = vmatpush2.bf16.msra.mxu0 0
      %1982 = vmatprep.subr.bf16.mxu0 0
      %1983 = vmatpush2.bf16.msra.mxu0 0
      %1984 = vmatprep.subr.bf16.mxu0 0
      %1985 = vmatpush2.bf16.msra.mxu0 0
      %1986 = vmatprep.subr.bf16.mxu0 0
      %1987 = vmatpush2.bf16.msra.mxu0 0
      %1988 = vmatprep.subr.bf16.mxu0 0
      %1989 = vmatpush2.bf16.msra.mxu0 0
      %1990 = vmatprep.subr.bf16.mxu0 0
      %1991 = vmatpush2.bf16.msra.mxu0 0
      %1992 = vmatprep.subr.bf16.mxu0 0
      %1993 = vmatpush2.bf16.msra.mxu0 0
      %1994 = vmatprep.subr.bf16.mxu0 0
      %1995 = vmatpush2.bf16.msra.mxu0 0
      %1996 = vmatprep.mubr.bf16.mxu0 0
      %1997 = vmatmul.mubr.bf16.gmra.mxu0 %v1908
      %v1998 = vpop.f32.mrf.mxu0
      %v1999 = vadd.f32 0.0, %v1998
      %v2000 = vpop.f32.mrf.mxu0
      %v2001 = vpop.f32.mrf.mxu0
      %v2002 = vadd.f32 0.0, %v2001
      %v2003 = vpop.f32.mrf.mxu0
      %2004 = vmatprep.mubr.bf16.mxu0 0
      %2005 = vmatmul.mubr.bf16.gmra.mxu0 %v1911
      %v2006 = vpop.f32.mrf.mxu0
      %v2007 = vadd.f32 0.0, %v2006
      %v2008 = vpop.f32.mrf.mxu0
      %v2009 = vpop.f32.mrf.mxu0
      %v2010 = vadd.f32 0.0, %v2009
      %v2011 = vpop.f32.mrf.mxu0
      %2012 = vmatprep.mubr.bf16.mxu0 0
      %2013 = vmatmul.mubr.bf16.gmra.mxu0 %v1914
      %v2014 = vpop.f32.mrf.mxu0
      %v2015 = vadd.f32 0.0, %v2014
      %v2016 = vpop.f32.mrf.mxu0
      %v2017 = vpop.f32.mrf.mxu0
      %v2018 = vadd.f32 0.0, %v2017
      %v2019 = vpop.f32.mrf.mxu0
      %2020 = vmatprep.mubr.bf16.mxu0 0
      %2021 = vmatmul.mubr.bf16.gmra.mxu0 %v1917
      %v2022 = vpop.f32.mrf.mxu0
      %v2023 = vadd.f32 0.0, %v2022
      %v2024 = vpop.f32.mrf.mxu0
      %v2025 = vpop.f32.mrf.mxu0
      %v2026 = vadd.f32 0.0, %v2025
      %v2027 = vpop.f32.mrf.mxu0
      %2028 = vmatprep.mubr.bf16.mxu0 0
      %2029 = vmatmul.mubr.bf16.gmra.mxu0 %v1920
      %v2030 = vpop.f32.mrf.mxu0
      %v2031 = vadd.f32 0.0, %v2030
      %v2032 = vpop.f32.mrf.mxu0
      %v2033 = vpop.f32.mrf.mxu0
      %v2034 = vadd.f32 0.0, %v2033
      %v2035 = vpop.f32.mrf.mxu0
      %2036 = vmatprep.mubr.bf16.mxu0 0
      %2037 = vmatmul.mubr.bf16.gmra.mxu0 %v1923
      %v2038 = vpop.f32.mrf.mxu0
      %v2039 = vadd.f32 0.0, %v2038
      %v2040 = vpop.f32.mrf.mxu0
      %v2041 = vpop.f32.mrf.mxu0
      %v2042 = vadd.f32 0.0, %v2041
      %v2043 = vpop.f32.mrf.mxu0
      %2044 = vmatprep.mubr.bf16.mxu0 0
      %2045 = vmatmul.mubr.bf16.gmra.mxu0 %v1926
      %v2046 = vpop.f32.mrf.mxu0
      %v2047 = vadd.f32 0.0, %v2046
      %v2048 = vpop.f32.mrf.mxu0
      %v2049 = vpop.f32.mrf.mxu0
      %v2050 = vadd.f32 0.0, %v2049
      %v2051 = vpop.f32.mrf.mxu0
      %2052 = vmatprep.mubr.bf16.mxu0 0
      %2053 = vmatmul.mubr.bf16.gmra.mxu0 %v1929
      %v2054 = vpop.f32.mrf.mxu0
      %v2055 = vadd.f32 0.0, %v2054
      %v2056 = vpop.f32.mrf.mxu0
      %v2057 = vpop.f32.mrf.mxu0
      %v2058 = vadd.f32 0.0, %v2057
      %v2059 = vpop.f32.mrf.mxu0
      %2060 = vmatprep.mubr.bf16.mxu0 0
      %2061 = vmatmul.mubr.bf16.gmra.mxu0 %v1932
      %v2062 = vpop.f32.mrf.mxu0
      %v2063 = vadd.f32 0.0, %v2062
      %v2064 = vpop.f32.mrf.mxu0
      %v2065 = vpop.f32.mrf.mxu0
      %v2066 = vadd.f32 0.0, %v2065
      %v2067 = vpop.f32.mrf.mxu0
      %2068 = vmatprep.mubr.bf16.mxu0 0
      %2069 = vmatmul.mubr.bf16.gmra.mxu0 %v1935
      %v2070 = vpop.f32.mrf.mxu0
      %v2071 = vadd.f32 0.0, %v2070
      %v2072 = vpop.f32.mrf.mxu0
      %v2073 = vpop.f32.mrf.mxu0
      %v2074 = vadd.f32 0.0, %v2073
      %v2075 = vpop.f32.mrf.mxu0
      %2076 = vmatprep.mubr.bf16.mxu0 0
      %2077 = vmatmul.mubr.bf16.gmra.mxu0 %v1938
      %v2078 = vpop.f32.mrf.mxu0
      %v2079 = vadd.f32 0.0, %v2078
      %v2080 = vpop.f32.mrf.mxu0
      %v2081 = vpop.f32.mrf.mxu0
      %v2082 = vadd.f32 0.0, %v2081
      %v2083 = vpop.f32.mrf.mxu0
      %2084 = vmatprep.mubr.bf16.mxu0 0
      %2085 = vmatmul.mubr.bf16.gmra.mxu0 %v1941
      %v2086 = vpop.f32.mrf.mxu0
      %v2087 = vadd.f32 0.0, %v2086
      %v2088 = vpop.f32.mrf.mxu0
      %v2089 = vpop.f32.mrf.mxu0
      %v2090 = vadd.f32 0.0, %v2089
      %v2091 = vpop.f32.mrf.mxu0
      %2092 = vmatprep.mubr.bf16.mxu0 0
      %2093 = vmatmul.mubr.bf16.gmra.mxu0 %v1944
      %v2094 = vpop.f32.mrf.mxu0
      %v2095 = vadd.f32 0.0, %v2094
      %v2096 = vpop.f32.mrf.mxu0
      %v2097 = vpop.f32.mrf.mxu0
      %v2098 = vadd.f32 0.0, %v2097
      %v2099 = vpop.f32.mrf.mxu0
      %2100 = vmatprep.mubr.bf16.mxu0 0
      %2101 = vmatmul.mubr.bf16.gmra.mxu0 %v1947
      %v2102 = vpop.f32.mrf.mxu0
      %v2103 = vadd.f32 0.0, %v2102
      %v2104 = vpop.f32.mrf.mxu0
      %v2105 = vpop.f32.mrf.mxu0
      %v2106 = vadd.f32 0.0, %v2105
      %v2107 = vpop.f32.mrf.mxu0
      %2108 = vmatprep.mubr.bf16.mxu0 0
      %2109 = vmatmul.mubr.bf16.gmra.mxu0 %v1950
      %v2110 = vpop.f32.mrf.mxu0
      %v2111 = vadd.f32 0.0, %v2110
      %v2112 = vpop.f32.mrf.mxu0
      %v2113 = vpop.f32.mrf.mxu0
      %v2114 = vadd.f32 0.0, %v2113
      %v2115 = vpop.f32.mrf.mxu0
      %2116 = vmatprep.mubr.bf16.mxu0 0
      %2117 = vmatmul.mubr.bf16.gmra.mxu0 %v1953
      %v2118 = vpop.f32.mrf.mxu0
      %v2119 = vadd.f32 0.0, %v2118
      %v2120 = vpop.f32.mrf.mxu0
      %v2121 = vpop.f32.mrf.mxu0
      %v2122 = vadd.f32 0.0, %v2121
      %v2123 = vpop.f32.mrf.mxu0
      %2124 = vmatprep.mubr.bf16.mxu0 0
      %2125 = vmatmul.mubr.bf16.gmra.mxu0 %v1956
      %v2126 = vpop.f32.mrf.mxu0
      %v2127 = vadd.f32 0.0, %v2126
      %v2128 = vpop.f32.mrf.mxu0
      %v2129 = vpop.f32.mrf.mxu0
      %v2130 = vadd.f32 0.0, %v2129
      %v2131 = vpop.f32.mrf.mxu0
      %2132 = vmatprep.mubr.bf16.mxu0 0
      %2133 = vmatmul.mubr.bf16.gmra.mxu0 %v1959
      %v2134 = vpop.f32.mrf.mxu0
      %v2135 = vadd.f32 0.0, %v2134
      %v2136 = vpop.f32.mrf.mxu0
      %v2137 = vpop.f32.mrf.mxu0
      %v2138 = vadd.f32 0.0, %v2137
      %v2139 = vpop.f32.mrf.mxu0
      %2140 = vdwg.mxu0
      %v2141 = vadd.f32 %v1694, %v1999
      %v2142 = vadd.f32 %v1695, %v2002
      %v2143 = vadd.f32 %v1696, %v2007
      %v2144 = vadd.f32 %v1697, %v2010
      %v2145 = vadd.f32 %v1698, %v2015
      %v2146 = vadd.f32 %v1699, %v2018
      %v2147 = vadd.f32 %v1700, %v2023
      %v2148 = vadd.f32 %v1701, %v2026
      %v2149 = vadd.f32 %v1702, %v2031
      %v2150 = vadd.f32 %v1703, %v2034
      %v2151 = vadd.f32 %v1704, %v2039
      %v2152 = vadd.f32 %v1705, %v2042
      %v2153 = vadd.f32 %v1706, %v2047
      %v2154 = vadd.f32 %v1707, %v2050
      %v2155 = vadd.f32 %v1708, %v2055
      %v2156 = vadd.f32 %v1709, %v2058
      %v2157 = vadd.f32 %v1710, %v2063
      %v2158 = vadd.f32 %v1711, %v2066
      %v2159 = vadd.f32 %v1712, %v2071
      %v2160 = vadd.f32 %v1713, %v2074
      %v2161 = vadd.f32 %v1714, %v2079
      %v2162 = vadd.f32 %v1715, %v2082
      %v2163 = vadd.f32 %v1716, %v2087
      %v2164 = vadd.f32 %v1717, %v2090
      %v2165 = vadd.f32 %v1718, %v2095
      %v2166 = vadd.f32 %v1719, %v2098
      %v2167 = vadd.f32 %v1720, %v2103
      %v2168 = vadd.f32 %v1721, %v2106
      %v2169 = vadd.f32 %v1722, %v2111
      %v2170 = vadd.f32 %v1723, %v2114
      %v2171 = vadd.f32 %v1724, %v2119
      %v2172 = vadd.f32 %v1725, %v2122
      %v2173 = vadd.f32 %v1726, %v2127
      %v2174 = vadd.f32 %v1727, %v2130
      %v2175 = vadd.f32 %v1728, %v2135
      %v2176 = vadd.f32 %v1729, %v2138
      %v2177 = vld [vmem:[%s230 + $0x8] sm:$0xc]
      %s2178 = scalar_lea.vmem %s1, 10
      %v2179 = vld [vmem:[%s2178] sm:$0x3]
      %v2181 = vunpack.c.l.b16 %v2177
      %v2182 = vpack.c.b16 %v1368, %v2181
      %vm2183 = vcmask 1045504
      %v2184 = vrot.slane %v2182, 2
      %v2185 = vrot.slane %v1405, 2
      %v2186 = vsel %vm2183, %v2184, %v2185
      %v2187 = vrot.slane %v1406, 2
      %v2188 = vsel %vm2183, %v2185, %v2187
      %v2189 = vrot.slane %v1407, 2
      %v2190 = vsel %vm2183, %v2187, %v2189
      %v2191 = vrot.slane %v1408, 2
      %v2192 = vsel %vm2183, %v2189, %v2191
      %v2193 = vrot.slane %v1409, 2
      %v2194 = vsel %vm2183, %v2191, %v2193
      %v2195 = vrot.slane %v1410, 2
      %v2196 = vsel %vm2183, %v2193, %v2195
      %v2197 = vrot.slane %v1411, 2
      %v2198 = vsel %vm2183, %v2195, %v2197
      %v2199 = vrot.slane %v1412, 2
      %v2200 = vsel %vm2183, %v2197, %v2199
      %v2201 = vrot.slane %v1413, 2
      %v2202 = vsel %vm2183, %v2199, %v2201
      %v2203 = vrot.slane %v1414, 2
      %v2204 = vsel %vm2183, %v2201, %v2203
      %v2205 = vrot.slane %v1415, 2
      %v2206 = vsel %vm2183, %v2203, %v2205
      %v2207 = vrot.slane %v1416, 2
      %v2208 = vsel %vm2183, %v2205, %v2207
      %v2209 = vrot.slane %v1417, 2
      %v2210 = vsel %vm2183, %v2207, %v2209
      %v2211 = vrot.slane %v1418, 2
      %v2212 = vsel %vm2183, %v2209, %v2211
      %v2213 = vrot.slane %v1419, 2
      %v2214 = vsel %vm2183, %v2211, %v2213
      %v2215 = vrot.slane %v1420, 2
      %v2216 = vsel %vm2183, %v2213, %v2215
      %v2217 = vrot.slane %v1421, 2
      %v2218 = vsel %vm2183, %v2215, %v2217
      %v2219 = vrot.slane %v1735, 2
      %v2220 = vsel %vm2183, %v2217, %v2219
      %v2222 = vsel %vm525, %v2186, 0
      %v2225 = vsel %vm525, %v2188, 0
      %v2228 = vsel %vm525, %v2190, 0
      %v2231 = vsel %vm525, %v2192, 0
      %v2234 = vsel %vm525, %v2194, 0
      %v2237 = vsel %vm525, %v2196, 0
      %v2240 = vsel %vm525, %v2198, 0
      %v2243 = vsel %vm525, %v2200, 0
      %v2246 = vsel %vm525, %v2202, 0
      %v2249 = vsel %vm525, %v2204, 0
      %v2252 = vsel %vm525, %v2206, 0
      %v2255 = vsel %vm525, %v2208, 0
      %v2258 = vsel %vm525, %v2210, 0
      %v2261 = vsel %vm525, %v2212, 0
      %v2264 = vsel %vm525, %v2214, 0
      %v2267 = vsel %vm525, %v2216, 0
      %v2270 = vsel %vm525, %v2218, 0
      %v2273 = vsel %vm525, %v2220, 0
      %v2276 = vsel %vm580, %v2179, 0
      %2278 = vmatprep.subr.bf16.mxu0 0
      %2279 = vmatpush1.bf16.msra.mxu0 0
      %2280 = vmatprep.subr.bf16.mxu0 0
      %2281 = vmatpush1.bf16.msra.mxu0 0
      %2282 = vmatprep.subr.bf16.mxu0 0
      %2283 = vmatpush1.bf16.msra.mxu0 0
      %2284 = vmatprep.subr.bf16.mxu0 0
      %2285 = vmatpush1.bf16.msra.mxu0 0
      %2286 = vmatprep.subr.bf16.mxu0 0
      %2287 = vmatpush1.bf16.msra.mxu0 0
      %2288 = vmatprep.subr.bf16.mxu0 0
      %2289 = vmatpush1.bf16.msra.mxu0 0
      %2290 = vmatprep.subr.bf16.mxu0 0
      %2291 = vmatpush1.bf16.msra.mxu0 0
      %2292 = vmatprep.subr.bf16.mxu0 0
      %2293 = vmatpush1.bf16.msra.mxu0 %v2276
      %2294 = vmatprep.subr.bf16.mxu0 0
      %2295 = vmatpush2.bf16.msra.mxu0 0
      %2296 = vmatprep.subr.bf16.mxu0 0
      %2297 = vmatpush2.bf16.msra.mxu0 0
      %2298 = vmatprep.subr.bf16.mxu0 0
      %2299 = vmatpush2.bf16.msra.mxu0 0
      %2300 = vmatprep.subr.bf16.mxu0 0
      %2301 = vmatpush2.bf16.msra.mxu0 0
      %2302 = vmatprep.subr.bf16.mxu0 0
      %2303 = vmatpush2.bf16.msra.mxu0 0
      %2304 = vmatprep.subr.bf16.mxu0 0
      %2305 = vmatpush2.bf16.msra.mxu0 0
      %2306 = vmatprep.subr.bf16.mxu0 0
      %2307 = vmatpush2.bf16.msra.mxu0 0
      %2308 = vmatprep.subr.bf16.mxu0 0
      %2309 = vmatpush2.bf16.msra.mxu0 0
      %2310 = vmatprep.mubr.bf16.mxu0 0
      %2311 = vmatmul.mubr.bf16.gmra.mxu0 %v2222
      %v2312 = vpop.f32.mrf.mxu0
      %v2313 = vadd.f32 0.0, %v2312
      %v2314 = vpop.f32.mrf.mxu0
      %v2315 = vpop.f32.mrf.mxu0
      %v2316 = vadd.f32 0.0, %v2315
      %v2317 = vpop.f32.mrf.mxu0
      %2318 = vmatprep.mubr.bf16.mxu0 0
      %2319 = vmatmul.mubr.bf16.gmra.mxu0 %v2225
      %v2320 = vpop.f32.mrf.mxu0
      %v2321 = vadd.f32 0.0, %v2320
      %v2322 = vpop.f32.mrf.mxu0
      %v2323 = vpop.f32.mrf.mxu0
      %v2324 = vadd.f32 0.0, %v2323
      %v2325 = vpop.f32.mrf.mxu0
      %2326 = vmatprep.mubr.bf16.mxu0 0
      %2327 = vmatmul.mubr.bf16.gmra.mxu0 %v2228
      %v2328 = vpop.f32.mrf.mxu0
      %v2329 = vadd.f32 0.0, %v2328
      %v2330 = vpop.f32.mrf.mxu0
      %v2331 = vpop.f32.mrf.mxu0
      %v2332 = vadd.f32 0.0, %v2331
      %v2333 = vpop.f32.mrf.mxu0
      %2334 = vmatprep.mubr.bf16.mxu0 0
      %2335 = vmatmul.mubr.bf16.gmra.mxu0 %v2231
      %v2336 = vpop.f32.mrf.mxu0
      %v2337 = vadd.f32 0.0, %v2336
      %v2338 = vpop.f32.mrf.mxu0
      %v2339 = vpop.f32.mrf.mxu0
      %v2340 = vadd.f32 0.0, %v2339
      %v2341 = vpop.f32.mrf.mxu0
      %2342 = vmatprep.mubr.bf16.mxu0 0
      %2343 = vmatmul.mubr.bf16.gmra.mxu0 %v2234
      %v2344 = vpop.f32.mrf.mxu0
      %v2345 = vadd.f32 0.0, %v2344
      %v2346 = vpop.f32.mrf.mxu0
      %v2347 = vpop.f32.mrf.mxu0
      %v2348 = vadd.f32 0.0, %v2347
      %v2349 = vpop.f32.mrf.mxu0
      %2350 = vmatprep.mubr.bf16.mxu0 0
      %2351 = vmatmul.mubr.bf16.gmra.mxu0 %v2237
      %v2352 = vpop.f32.mrf.mxu0
      %v2353 = vadd.f32 0.0, %v2352
      %v2354 = vpop.f32.mrf.mxu0
      %v2355 = vpop.f32.mrf.mxu0
      %v2356 = vadd.f32 0.0, %v2355
      %v2357 = vpop.f32.mrf.mxu0
      %2358 = vmatprep.mubr.bf16.mxu0 0
      %2359 = vmatmul.mubr.bf16.gmra.mxu0 %v2240
      %v2360 = vpop.f32.mrf.mxu0
      %v2361 = vadd.f32 0.0, %v2360
      %v2362 = vpop.f32.mrf.mxu0
      %v2363 = vpop.f32.mrf.mxu0
      %v2364 = vadd.f32 0.0, %v2363
      %v2365 = vpop.f32.mrf.mxu0
      %2366 = vmatprep.mubr.bf16.mxu0 0
      %2367 = vmatmul.mubr.bf16.gmra.mxu0 %v2243
      %v2368 = vpop.f32.mrf.mxu0
      %v2369 = vadd.f32 0.0, %v2368
      %v2370 = vpop.f32.mrf.mxu0
      %v2371 = vpop.f32.mrf.mxu0
      %v2372 = vadd.f32 0.0, %v2371
      %v2373 = vpop.f32.mrf.mxu0
      %2374 = vmatprep.mubr.bf16.mxu0 0
      %2375 = vmatmul.mubr.bf16.gmra.mxu0 %v2246
      %v2376 = vpop.f32.mrf.mxu0
      %v2377 = vadd.f32 0.0, %v2376
      %v2378 = vpop.f32.mrf.mxu0
      %v2379 = vpop.f32.mrf.mxu0
      %v2380 = vadd.f32 0.0, %v2379
      %v2381 = vpop.f32.mrf.mxu0
      %2382 = vmatprep.mubr.bf16.mxu0 0
      %2383 = vmatmul.mubr.bf16.gmra.mxu0 %v2249
      %v2384 = vpop.f32.mrf.mxu0
      %v2385 = vadd.f32 0.0, %v2384
      %v2386 = vpop.f32.mrf.mxu0
      %v2387 = vpop.f32.mrf.mxu0
      %v2388 = vadd.f32 0.0, %v2387
      %v2389 = vpop.f32.mrf.mxu0
      %2390 = vmatprep.mubr.bf16.mxu0 0
      %2391 = vmatmul.mubr.bf16.gmra.mxu0 %v2252
      %v2392 = vpop.f32.mrf.mxu0
      %v2393 = vadd.f32 0.0, %v2392
      %v2394 = vpop.f32.mrf.mxu0
      %v2395 = vpop.f32.mrf.mxu0
      %v2396 = vadd.f32 0.0, %v2395
      %v2397 = vpop.f32.mrf.mxu0
      %2398 = vmatprep.mubr.bf16.mxu0 0
      %2399 = vmatmul.mubr.bf16.gmra.mxu0 %v2255
      %v2400 = vpop.f32.mrf.mxu0
      %v2401 = vadd.f32 0.0, %v2400
      %v2402 = vpop.f32.mrf.mxu0
      %v2403 = vpop.f32.mrf.mxu0
      %v2404 = vadd.f32 0.0, %v2403
      %v2405 = vpop.f32.mrf.mxu0
      %2406 = vmatprep.mubr.bf16.mxu0 0
      %2407 = vmatmul.mubr.bf16.gmra.mxu0 %v2258
      %v2408 = vpop.f32.mrf.mxu0
      %v2409 = vadd.f32 0.0, %v2408
      %v2410 = vpop.f32.mrf.mxu0
      %v2411 = vpop.f32.mrf.mxu0
      %v2412 = vadd.f32 0.0, %v2411
      %v2413 = vpop.f32.mrf.mxu0
      %2414 = vmatprep.mubr.bf16.mxu0 0
      %2415 = vmatmul.mubr.bf16.gmra.mxu0 %v2261
      %v2416 = vpop.f32.mrf.mxu0
      %v2417 = vadd.f32 0.0, %v2416
      %v2418 = vpop.f32.mrf.mxu0
      %v2419 = vpop.f32.mrf.mxu0
      %v2420 = vadd.f32 0.0, %v2419
      %v2421 = vpop.f32.mrf.mxu0
      %2422 = vmatprep.mubr.bf16.mxu0 0
      %2423 = vmatmul.mubr.bf16.gmra.mxu0 %v2264
      %v2424 = vpop.f32.mrf.mxu0
      %v2425 = vadd.f32 0.0, %v2424
      %v2426 = vpop.f32.mrf.mxu0
      %v2427 = vpop.f32.mrf.mxu0
      %v2428 = vadd.f32 0.0, %v2427
      %v2429 = vpop.f32.mrf.mxu0
      %2430 = vmatprep.mubr.bf16.mxu0 0
      %2431 = vmatmul.mubr.bf16.gmra.mxu0 %v2267
      %v2432 = vpop.f32.mrf.mxu0
      %v2433 = vadd.f32 0.0, %v2432
      %v2434 = vpop.f32.mrf.mxu0
      %v2435 = vpop.f32.mrf.mxu0
      %v2436 = vadd.f32 0.0, %v2435
      %v2437 = vpop.f32.mrf.mxu0
      %2438 = vmatprep.mubr.bf16.mxu0 0
      %2439 = vmatmul.mubr.bf16.gmra.mxu0 %v2270
      %v2440 = vpop.f32.mrf.mxu0
      %v2441 = vadd.f32 0.0, %v2440
      %v2442 = vpop.f32.mrf.mxu0
      %v2443 = vpop.f32.mrf.mxu0
      %v2444 = vadd.f32 0.0, %v2443
      %v2445 = vpop.f32.mrf.mxu0
      %2446 = vmatprep.mubr.bf16.mxu0 0
      %2447 = vmatmul.mubr.bf16.gmra.mxu0 %v2273
      %v2448 = vpop.f32.mrf.mxu0
      %v2449 = vadd.f32 0.0, %v2448
      %v2450 = vpop.f32.mrf.mxu0
      %v2451 = vpop.f32.mrf.mxu0
      %v2452 = vadd.f32 0.0, %v2451
      %v2453 = vpop.f32.mrf.mxu0
      %2454 = vdwg.mxu0
      %v2455 = vadd.f32 %v2141, %v2313
      %v2456 = vadd.f32 %v2142, %v2316
      %v2457 = vadd.f32 %v2143, %v2321
      %v2458 = vadd.f32 %v2144, %v2324
      %v2459 = vadd.f32 %v2145, %v2329
      %v2460 = vadd.f32 %v2146, %v2332
      %v2461 = vadd.f32 %v2147, %v2337
      %v2462 = vadd.f32 %v2148, %v2340
      %v2463 = vadd.f32 %v2149, %v2345
      %v2464 = vadd.f32 %v2150, %v2348
      %v2465 = vadd.f32 %v2151, %v2353
      %v2466 = vadd.f32 %v2152, %v2356
      %v2467 = vadd.f32 %v2153, %v2361
      %v2468 = vadd.f32 %v2154, %v2364
      %v2469 = vadd.f32 %v2155, %v2369
      %v2470 = vadd.f32 %v2156, %v2372
      %v2471 = vadd.f32 %v2157, %v2377
      %v2472 = vadd.f32 %v2158, %v2380
      %v2473 = vadd.f32 %v2159, %v2385
      %v2474 = vadd.f32 %v2160, %v2388
      %v2475 = vadd.f32 %v2161, %v2393
      %v2476 = vadd.f32 %v2162, %v2396
      %v2477 = vadd.f32 %v2163, %v2401
      %v2478 = vadd.f32 %v2164, %v2404
      %v2479 = vadd.f32 %v2165, %v2409
      %v2480 = vadd.f32 %v2166, %v2412
      %v2481 = vadd.f32 %v2167, %v2417
      %v2482 = vadd.f32 %v2168, %v2420
      %v2483 = vadd.f32 %v2169, %v2425
      %v2484 = vadd.f32 %v2170, %v2428
      %v2485 = vadd.f32 %v2171, %v2433
      %v2486 = vadd.f32 %v2172, %v2436
      %v2487 = vadd.f32 %v2173, %v2441
      %v2488 = vadd.f32 %v2174, %v2444
      %v2489 = vadd.f32 %v2175, %v2449
      %v2490 = vadd.f32 %v2176, %v2452
      %v2491 = vld [vmem:[%s230 + $0x10] sm:$0xc]
      %v2492 = vld [vmem:[%s230 + $0x14] sm:$0xf]
      %v2493 = vld [vmem:[%s230 + $0x18] sm:$0xf]
      %v2494 = vld [vmem:[%s230 + $0x1c] sm:$0xf]
      %v2495 = vld [vmem:[%s230 + $0x20] sm:$0xf]
      %v2496 = vld [vmem:[%s230 + $0x24] sm:$0xf]
      %v2497 = vld [vmem:[%s230 + $0x28] sm:$0xf]
      %v2498 = vld [vmem:[%s230 + $0x2c] sm:$0xf]
      %v2499 = vld [vmem:[%s230 + $0x30] sm:$0xf]
      %v2500 = vld [vmem:[%s230 + $0x34] sm:$0xf]
      %v2501 = vld [vmem:[%s230 + $0x38] sm:$0xf]
      %v2502 = vld [vmem:[%s230 + $0x3c] sm:$0xf]
      %v2503 = vld [vmem:[%s230 + $0x40] sm:$0xf]
      %v2504 = vld [vmem:[%s230 + $0x44] sm:$0xf]
      %v2505 = vld [vmem:[%s230 + $0x48] sm:$0xf]
      %v2506 = vld [vmem:[%s230 + $0x4c] sm:$0xf]
      %v2507 = vld [vmem:[%s230 + $0x50] sm:$0xf]
      %v2508 = vld [vmem:[%s230 + $0x54] sm:$0xf]
      %v2509 = vld [vmem:[%s230 + $0x58] sm:$0xf]
      %v2510 = vld [vmem:[%s230 + $0x5c] sm:$0xf]
      %v2511 = vld [vmem:[%s230 + $0x60] sm:$0xf]
      %v2512 = vld [vmem:[%s230 + $0x64] sm:$0xf]
      %v2513 = vld [vmem:[%s230 + $0x68] sm:$0xf]
      %v2514 = vld [vmem:[%s230 + $0x6c] sm:$0xf]
      %v2515 = vld [vmem:[%s230 + $0x70] sm:$0xf]
      %v2516 = vld [vmem:[%s230 + $0x74] sm:$0xf]
      %v2517 = vld [vmem:[%s230 + $0x78] sm:$0xf]
      %v2518 = vld [vmem:[%s230 + $0x7c] sm:$0xf]
      %v2519 = vld [vmem:[%s230 + $0x80] sm:$0xf]
      %v2520 = vld [vmem:[%s230 + $0x84] sm:$0xf]
      %v2521 = vld [vmem:[%s230 + $0x88] sm:$0xf]
      %v2522 = vld [vmem:[%s230 + $0x8c] sm:$0xf]
      %v2523 = vld [vmem:[%s230 + $0x90] sm:$0xf]
      %v2524 = vld [vmem:[%s230 + $0x94] sm:$0xf]
      %v2525 = vld [vmem:[%s230 + $0x98] sm:$0xf]
      %v2526 = vld [vmem:[%s230 + $0x9c] sm:$0xf]
      %v2527 = vld [vmem:[%s230 + $0xa0] sm:$0x3]
      %s2528 = scalar_lea.vmem %s1, 12
      %v2529 = vld [vmem:[%s2528] sm:$0x3]
      %v2567 = vunpack.c.l.b16 %v2491
      %v2568 = vunpack.c.l.b16 %v2492
      %v2569 = vunpack.c.l.b16 %v2493
      %v2570 = vunpack.c.l.b16 %v2494
      %v2571 = vunpack.c.l.b16 %v2495
      %v2572 = vunpack.c.l.b16 %v2496
      %v2573 = vunpack.c.l.b16 %v2497
      %v2574 = vunpack.c.l.b16 %v2498
      %v2575 = vunpack.c.l.b16 %v2499
      %v2576 = vunpack.c.l.b16 %v2500
      %v2577 = vunpack.c.l.b16 %v2501
      %v2578 = vunpack.c.l.b16 %v2502
      %v2579 = vunpack.c.l.b16 %v2503
      %v2580 = vunpack.c.l.b16 %v2504
      %v2581 = vunpack.c.l.b16 %v2505
      %v2582 = vunpack.c.l.b16 %v2506
      %v2583 = vunpack.c.l.b16 %v2507
      %v2584 = vunpack.c.l.b16 %v2508
      %v2585 = vunpack.c.l.b16 %v2509
      %v2586 = vunpack.c.l.b16 %v2510
      %v2587 = vunpack.c.l.b16 %v2511
      %v2588 = vunpack.c.l.b16 %v2512
      %v2589 = vunpack.c.l.b16 %v2513
      %v2590 = vunpack.c.l.b16 %v2514
      %v2591 = vunpack.c.l.b16 %v2515
      %v2592 = vunpack.c.l.b16 %v2516
      %v2593 = vunpack.c.l.b16 %v2517
      %v2594 = vunpack.c.l.b16 %v2518
      %v2595 = vunpack.c.l.b16 %v2519
      %v2596 = vunpack.c.l.b16 %v2520
      %v2597 = vunpack.c.l.b16 %v2521
      %v2598 = vunpack.c.l.b16 %v2522
      %v2599 = vunpack.c.l.b16 %v2523
      %v2600 = vunpack.c.l.b16 %v2524
      %v2601 = vunpack.c.l.b16 %v2525
      %v2602 = vunpack.c.l.b16 %v2526
      %v2603 = vunpack.c.l.b16 %v2527
      %v2604 = vpack.c.b16 %v2568, %v2567
      %v2605 = vpack.c.b16 %v2570, %v2569
      %v2606 = vpack.c.b16 %v2572, %v2571
      %v2607 = vpack.c.b16 %v2574, %v2573
      %v2608 = vpack.c.b16 %v2576, %v2575
      %v2609 = vpack.c.b16 %v2578, %v2577
      %v2610 = vpack.c.b16 %v2580, %v2579
      %v2611 = vpack.c.b16 %v2582, %v2581
      %v2612 = vpack.c.b16 %v2584, %v2583
      %v2613 = vpack.c.b16 %v2586, %v2585
      %v2614 = vpack.c.b16 %v2588, %v2587
      %v2615 = vpack.c.b16 %v2590, %v2589
      %v2616 = vpack.c.b16 %v2592, %v2591
      %v2617 = vpack.c.b16 %v2594, %v2593
      %v2618 = vpack.c.b16 %v2596, %v2595
      %v2619 = vpack.c.b16 %v2598, %v2597
      %v2620 = vpack.c.b16 %v2600, %v2599
      %v2621 = vpack.c.b16 %v2602, %v2601
      %v2622 = vpack.c.b16 %v2603, %v2603
      %v2623 = vrot.slane %v2604, 2
      %v2624 = vrot.slane %v2605, 2
      %v2625 = vsel %vm2183, %v2623, %v2624
      %v2626 = vrot.slane %v2606, 2
      %v2627 = vsel %vm2183, %v2624, %v2626
      %v2628 = vrot.slane %v2607, 2
      %v2629 = vsel %vm2183, %v2626, %v2628
      %v2630 = vrot.slane %v2608, 2
      %v2631 = vsel %vm2183, %v2628, %v2630
      %v2632 = vrot.slane %v2609, 2
      %v2633 = vsel %vm2183, %v2630, %v2632
      %v2634 = vrot.slane %v2610, 2
      %v2635 = vsel %vm2183, %v2632, %v2634
      %v2636 = vrot.slane %v2611, 2
      %v2637 = vsel %vm2183, %v2634, %v2636
      %v2638 = vrot.slane %v2612, 2
      %v2639 = vsel %vm2183, %v2636, %v2638
      %v2640 = vrot.slane %v2613, 2
      %v2641 = vsel %vm2183, %v2638, %v2640
      %v2642 = vrot.slane %v2614, 2
      %v2643 = vsel %vm2183, %v2640, %v2642
      %v2644 = vrot.slane %v2615, 2
      %v2645 = vsel %vm2183, %v2642, %v2644
      %v2646 = vrot.slane %v2616, 2
      %v2647 = vsel %vm2183, %v2644, %v2646
      %v2648 = vrot.slane %v2617, 2
      %v2649 = vsel %vm2183, %v2646, %v2648
      %v2650 = vrot.slane %v2618, 2
      %v2651 = vsel %vm2183, %v2648, %v2650
      %v2652 = vrot.slane %v2619, 2
      %v2653 = vsel %vm2183, %v2650, %v2652
      %v2654 = vrot.slane %v2620, 2
      %v2655 = vsel %vm2183, %v2652, %v2654
      %v2656 = vrot.slane %v2621, 2
      %v2657 = vsel %vm2183, %v2654, %v2656
      %v2658 = vrot.slane %v2622, 2
      %v2659 = vsel %vm2183, %v2656, %v2658
      %v2661 = vsel %vm525, %v2625, 0
      %v2664 = vsel %vm525, %v2627, 0
      %v2667 = vsel %vm525, %v2629, 0
      %v2670 = vsel %vm525, %v2631, 0
      %v2673 = vsel %vm525, %v2633, 0
      %v2676 = vsel %vm525, %v2635, 0
      %v2679 = vsel %vm525, %v2637, 0
      %v2682 = vsel %vm525, %v2639, 0
      %v2685 = vsel %vm525, %v2641, 0
      %v2688 = vsel %vm525, %v2643, 0
      %v2691 = vsel %vm525, %v2645, 0
      %v2694 = vsel %vm525, %v2647, 0
      %v2697 = vsel %vm525, %v2649, 0
      %v2700 = vsel %vm525, %v2651, 0
      %v2703 = vsel %vm525, %v2653, 0
      %v2706 = vsel %vm525, %v2655, 0
      %v2709 = vsel %vm525, %v2657, 0
      %v2712 = vsel %vm525, %v2659, 0
      %v2715 = vsel %vm580, %v2529, 0
      %2717 = vmatprep.subr.bf16.mxu0 0
      %2718 = vmatpush1.bf16.msra.mxu0 0
      %2719 = vmatprep.subr.bf16.mxu0 0
      %2720 = vmatpush1.bf16.msra.mxu0 0
      %2721 = vmatprep.subr.bf16.mxu0 0
      %2722 = vmatpush1.bf16.msra.mxu0 0
      %2723 = vmatprep.subr.bf16.mxu0 0
      %2724 = vmatpush1.bf16.msra.mxu0 0
      %2725 = vmatprep.subr.bf16.mxu0 0
      %2726 = vmatpush1.bf16.msra.mxu0 0
      %2727 = vmatprep.subr.bf16.mxu0 0
      %2728 = vmatpush1.bf16.msra.mxu0 0
      %2729 = vmatprep.subr.bf16.mxu0 0
      %2730 = vmatpush1.bf16.msra.mxu0 0
      %2731 = vmatprep.subr.bf16.mxu0 0
      %2732 = vmatpush1.bf16.msra.mxu0 %v2715
      %2733 = vmatprep.subr.bf16.mxu0 0
      %2734 = vmatpush2.bf16.msra.mxu0 0
      %2735 = vmatprep.subr.bf16.mxu0 0
      %2736 = vmatpush2.bf16.msra.mxu0 0
      %2737 = vmatprep.subr.bf16.mxu0 0
      %2738 = vmatpush2.bf16.msra.mxu0 0
      %2739 = vmatprep.subr.bf16.mxu0 0
      %2740 = vmatpush2.bf16.msra.mxu0 0
      %2741 = vmatprep.subr.bf16.mxu0 0
      %2742 = vmatpush2.bf16.msra.mxu0 0
      %2743 = vmatprep.subr.bf16.mxu0 0
      %2744 = vmatpush2.bf16.msra.mxu0 0
      %2745 = vmatprep.subr.bf16.mxu0 0
      %2746 = vmatpush2.bf16.msra.mxu0 0
      %2747 = vmatprep.subr.bf16.mxu0 0
      %2748 = vmatpush2.bf16.msra.mxu0 0
      %2749 = vmatprep.mubr.bf16.mxu0 0
      %2750 = vmatmul.mubr.bf16.gmra.mxu0 %v2661
      %v2751 = vpop.f32.mrf.mxu0
      %v2752 = vadd.f32 0.0, %v2751
      %v2753 = vpop.f32.mrf.mxu0
      %v2754 = vpop.f32.mrf.mxu0
      %v2755 = vadd.f32 0.0, %v2754
      %v2756 = vpop.f32.mrf.mxu0
      %2757 = vmatprep.mubr.bf16.mxu0 0
      %2758 = vmatmul.mubr.bf16.gmra.mxu0 %v2664
      %v2759 = vpop.f32.mrf.mxu0
      %v2760 = vadd.f32 0.0, %v2759
      %v2761 = vpop.f32.mrf.mxu0
      %v2762 = vpop.f32.mrf.mxu0
      %v2763 = vadd.f32 0.0, %v2762
      %v2764 = vpop.f32.mrf.mxu0
      %2765 = vmatprep.mubr.bf16.mxu0 0
      %2766 = vmatmul.mubr.bf16.gmra.mxu0 %v2667
      %v2767 = vpop.f32.mrf.mxu0
      %v2768 = vadd.f32 0.0, %v2767
      %v2769 = vpop.f32.mrf.mxu0
      %v2770 = vpop.f32.mrf.mxu0
      %v2771 = vadd.f32 0.0, %v2770
      %v2772 = vpop.f32.mrf.mxu0
      %2773 = vmatprep.mubr.bf16.mxu0 0
      %2774 = vmatmul.mubr.bf16.gmra.mxu0 %v2670
      %v2775 = vpop.f32.mrf.mxu0
      %v2776 = vadd.f32 0.0, %v2775
      %v2777 = vpop.f32.mrf.mxu0
      %v2778 = vpop.f32.mrf.mxu0
      %v2779 = vadd.f32 0.0, %v2778
      %v2780 = vpop.f32.mrf.mxu0
      %2781 = vmatprep.mubr.bf16.mxu0 0
      %2782 = vmatmul.mubr.bf16.gmra.mxu0 %v2673
      %v2783 = vpop.f32.mrf.mxu0
      %v2784 = vadd.f32 0.0, %v2783
      %v2785 = vpop.f32.mrf.mxu0
      %v2786 = vpop.f32.mrf.mxu0
      %v2787 = vadd.f32 0.0, %v2786
      %v2788 = vpop.f32.mrf.mxu0
      %2789 = vmatprep.mubr.bf16.mxu0 0
      %2790 = vmatmul.mubr.bf16.gmra.mxu0 %v2676
      %v2791 = vpop.f32.mrf.mxu0
      %v2792 = vadd.f32 0.0, %v2791
      %v2793 = vpop.f32.mrf.mxu0
      %v2794 = vpop.f32.mrf.mxu0
      %v2795 = vadd.f32 0.0, %v2794
      %v2796 = vpop.f32.mrf.mxu0
      %2797 = vmatprep.mubr.bf16.mxu0 0
      %2798 = vmatmul.mubr.bf16.gmra.mxu0 %v2679
      %v2799 = vpop.f32.mrf.mxu0
      %v2800 = vadd.f32 0.0, %v2799
      %v2801 = vpop.f32.mrf.mxu0
      %v2802 = vpop.f32.mrf.mxu0
      %v2803 = vadd.f32 0.0, %v2802
      %v2804 = vpop.f32.mrf.mxu0
      %2805 = vmatprep.mubr.bf16.mxu0 0
      %2806 = vmatmul.mubr.bf16.gmra.mxu0 %v2682
      %v2807 = vpop.f32.mrf.mxu0
      %v2808 = vadd.f32 0.0, %v2807
      %v2809 = vpop.f32.mrf.mxu0
      %v2810 = vpop.f32.mrf.mxu0
      %v2811 = vadd.f32 0.0, %v2810
      %v2812 = vpop.f32.mrf.mxu0
      %2813 = vmatprep.mubr.bf16.mxu0 0
      %2814 = vmatmul.mubr.bf16.gmra.mxu0 %v2685
      %v2815 = vpop.f32.mrf.mxu0
      %v2816 = vadd.f32 0.0, %v2815
      %v2817 = vpop.f32.mrf.mxu0
      %v2818 = vpop.f32.mrf.mxu0
      %v2819 = vadd.f32 0.0, %v2818
      %v2820 = vpop.f32.mrf.mxu0
      %2821 = vmatprep.mubr.bf16.mxu0 0
      %2822 = vmatmul.mubr.bf16.gmra.mxu0 %v2688
      %v2823 = vpop.f32.mrf.mxu0
      %v2824 = vadd.f32 0.0, %v2823
      %v2825 = vpop.f32.mrf.mxu0
      %v2826 = vpop.f32.mrf.mxu0
      %v2827 = vadd.f32 0.0, %v2826
      %v2828 = vpop.f32.mrf.mxu0
      %2829 = vmatprep.mubr.bf16.mxu0 0
      %2830 = vmatmul.mubr.bf16.gmra.mxu0 %v2691
      %v2831 = vpop.f32.mrf.mxu0
      %v2832 = vadd.f32 0.0, %v2831
      %v2833 = vpop.f32.mrf.mxu0
      %v2834 = vpop.f32.mrf.mxu0
      %v2835 = vadd.f32 0.0, %v2834
      %v2836 = vpop.f32.mrf.mxu0
      %2837 = vmatprep.mubr.bf16.mxu0 0
      %2838 = vmatmul.mubr.bf16.gmra.mxu0 %v2694
      %v2839 = vpop.f32.mrf.mxu0
      %v2840 = vadd.f32 0.0, %v2839
      %v2841 = vpop.f32.mrf.mxu0
      %v2842 = vpop.f32.mrf.mxu0
      %v2843 = vadd.f32 0.0, %v2842
      %v2844 = vpop.f32.mrf.mxu0
      %2845 = vmatprep.mubr.bf16.mxu0 0
      %2846 = vmatmul.mubr.bf16.gmra.mxu0 %v2697
      %v2847 = vpop.f32.mrf.mxu0
      %v2848 = vadd.f32 0.0, %v2847
      %v2849 = vpop.f32.mrf.mxu0
      %v2850 = vpop.f32.mrf.mxu0
      %v2851 = vadd.f32 0.0, %v2850
      %v2852 = vpop.f32.mrf.mxu0
      %2853 = vmatprep.mubr.bf16.mxu0 0
      %2854 = vmatmul.mubr.bf16.gmra.mxu0 %v2700
      %v2855 = vpop.f32.mrf.mxu0
      %v2856 = vadd.f32 0.0, %v2855
      %v2857 = vpop.f32.mrf.mxu0
      %v2858 = vpop.f32.mrf.mxu0
      %v2859 = vadd.f32 0.0, %v2858
      %v2860 = vpop.f32.mrf.mxu0
      %2861 = vmatprep.mubr.bf16.mxu0 0
      %2862 = vmatmul.mubr.bf16.gmra.mxu0 %v2703
      %v2863 = vpop.f32.mrf.mxu0
      %v2864 = vadd.f32 0.0, %v2863
      %v2865 = vpop.f32.mrf.mxu0
      %v2866 = vpop.f32.mrf.mxu0
      %v2867 = vadd.f32 0.0, %v2866
      %v2868 = vpop.f32.mrf.mxu0
      %2869 = vmatprep.mubr.bf16.mxu0 0
      %2870 = vmatmul.mubr.bf16.gmra.mxu0 %v2706
      %v2871 = vpop.f32.mrf.mxu0
      %v2872 = vadd.f32 0.0, %v2871
      %v2873 = vpop.f32.mrf.mxu0
      %v2874 = vpop.f32.mrf.mxu0
      %v2875 = vadd.f32 0.0, %v2874
      %v2876 = vpop.f32.mrf.mxu0
      %2877 = vmatprep.mubr.bf16.mxu0 0
      %2878 = vmatmul.mubr.bf16.gmra.mxu0 %v2709
      %v2879 = vpop.f32.mrf.mxu0
      %v2880 = vadd.f32 0.0, %v2879
      %v2881 = vpop.f32.mrf.mxu0
      %v2882 = vpop.f32.mrf.mxu0
      %v2883 = vadd.f32 0.0, %v2882
      %v2884 = vpop.f32.mrf.mxu0
      %2885 = vmatprep.mubr.bf16.mxu0 0
      %2886 = vmatmul.mubr.bf16.gmra.mxu0 %v2712
      %v2887 = vpop.f32.mrf.mxu0
      %v2888 = vadd.f32 0.0, %v2887
      %v2889 = vpop.f32.mrf.mxu0
      %v2890 = vpop.f32.mrf.mxu0
      %v2891 = vadd.f32 0.0, %v2890
      %v2892 = vpop.f32.mrf.mxu0
      %2893 = vdwg.mxu0
      %v2894 = vadd.f32 %v2455, %v2752
      %v2895 = vadd.f32 %v2456, %v2755
      %v2896 = vadd.f32 %v2457, %v2760
      %v2897 = vadd.f32 %v2458, %v2763
      %v2898 = vadd.f32 %v2459, %v2768
      %v2899 = vadd.f32 %v2460, %v2771
      %v2900 = vadd.f32 %v2461, %v2776
      %v2901 = vadd.f32 %v2462, %v2779
      %v2902 = vadd.f32 %v2463, %v2784
      %v2903 = vadd.f32 %v2464, %v2787
      %v2904 = vadd.f32 %v2465, %v2792
      %v2905 = vadd.f32 %v2466, %v2795
      %v2906 = vadd.f32 %v2467, %v2800
      %v2907 = vadd.f32 %v2468, %v2803
      %v2908 = vadd.f32 %v2469, %v2808
      %v2909 = vadd.f32 %v2470, %v2811
      %v2910 = vadd.f32 %v2471, %v2816
      %v2911 = vadd.f32 %v2472, %v2819
      %v2912 = vadd.f32 %v2473, %v2824
      %v2913 = vadd.f32 %v2474, %v2827
      %v2914 = vadd.f32 %v2475, %v2832
      %v2915 = vadd.f32 %v2476, %v2835
      %v2916 = vadd.f32 %v2477, %v2840
      %v2917 = vadd.f32 %v2478, %v2843
      %v2918 = vadd.f32 %v2479, %v2848
      %v2919 = vadd.f32 %v2480, %v2851
      %v2920 = vadd.f32 %v2481, %v2856
      %v2921 = vadd.f32 %v2482, %v2859
      %v2922 = vadd.f32 %v2483, %v2864
      %v2923 = vadd.f32 %v2484, %v2867
      %v2924 = vadd.f32 %v2485, %v2872
      %v2925 = vadd.f32 %v2486, %v2875
      %v2926 = vadd.f32 %v2487, %v2880
      %v2927 = vadd.f32 %v2488, %v2883
      %v2928 = vadd.f32 %v2489, %v2888
      %v2929 = vadd.f32 %v2490, %v2891
      %v2930 = vld [vmem:[%s230 + $0xa0] sm:$0x7]
      %s2931 = scalar_lea.vmem %s1, 14
      %v2932 = vld [vmem:[%s2931] sm:$0x3]
      %v2934 = vunpack.c.l.b16 %v2930
      %v2935 = vpack.c.b16 %v2934, %v2934
      %vm2936 = vsmask.f32 5376
      %v2938 = vshrl.u32 %v2604, 16
      %v2940 = vrot.slane %v2938, 2
      %v2941 = vshll.u32 %v2604, 16
      %v2943 = vrot.slane %v2941, 3
      %v2944 = vor.u32 %v2940, %v2943
      %v2946 = vshrl.u32 %v2605, 16
      %v2948 = vrot.slane %v2946, 2
      %v2949 = vshll.u32 %v2605, 16
      %v2951 = vrot.slane %v2949, 3
      %v2952 = vor.u32 %v2948, %v2951
      %v2953 = vsel %vm2936, %v2944, %v2952
      %v2955 = vshrl.u32 %v2606, 16
      %v2957 = vrot.slane %v2955, 2
      %v2958 = vshll.u32 %v2606, 16
      %v2960 = vrot.slane %v2958, 3
      %v2961 = vor.u32 %v2957, %v2960
      %v2962 = vsel %vm2936, %v2952, %v2961
      %v2964 = vshrl.u32 %v2607, 16
      %v2966 = vrot.slane %v2964, 2
      %v2967 = vshll.u32 %v2607, 16
      %v2969 = vrot.slane %v2967, 3
      %v2970 = vor.u32 %v2966, %v2969
      %v2971 = vsel %vm2936, %v2961, %v2970
      %v2973 = vshrl.u32 %v2608, 16
      %v2975 = vrot.slane %v2973, 2
      %v2976 = vshll.u32 %v2608, 16
      %v2978 = vrot.slane %v2976, 3
      %v2979 = vor.u32 %v2975, %v2978
      %v2980 = vsel %vm2936, %v2970, %v2979
      %v2982 = vshrl.u32 %v2609, 16
      %v2984 = vrot.slane %v2982, 2
      %v2985 = vshll.u32 %v2609, 16
      %v2987 = vrot.slane %v2985, 3
      %v2988 = vor.u32 %v2984, %v2987
      %v2989 = vsel %vm2936, %v2979, %v2988
      %v2991 = vshrl.u32 %v2610, 16
      %v2993 = vrot.slane %v2991, 2
      %v2994 = vshll.u32 %v2610, 16
      %v2996 = vrot.slane %v2994, 3
      %v2997 = vor.u32 %v2993, %v2996
      %v2998 = vsel %vm2936, %v2988, %v2997
      %v3000 = vshrl.u32 %v2611, 16
      %v3002 = vrot.slane %v3000, 2
      %v3003 = vshll.u32 %v2611, 16
      %v3005 = vrot.slane %v3003, 3
      %v3006 = vor.u32 %v3002, %v3005
      %v3007 = vsel %vm2936, %v2997, %v3006
      %v3009 = vshrl.u32 %v2612, 16
      %v3011 = vrot.slane %v3009, 2
      %v3012 = vshll.u32 %v2612, 16
      %v3014 = vrot.slane %v3012, 3
      %v3015 = vor.u32 %v3011, %v3014
      %v3016 = vsel %vm2936, %v3006, %v3015
      %v3018 = vshrl.u32 %v2613, 16
      %v3020 = vrot.slane %v3018, 2
      %v3021 = vshll.u32 %v2613, 16
      %v3023 = vrot.slane %v3021, 3
      %v3024 = vor.u32 %v3020, %v3023
      %v3025 = vsel %vm2936, %v3015, %v3024
      %v3027 = vshrl.u32 %v2614, 16
      %v3029 = vrot.slane %v3027, 2
      %v3030 = vshll.u32 %v2614, 16
      %v3032 = vrot.slane %v3030, 3
      %v3033 = vor.u32 %v3029, %v3032
      %v3034 = vsel %vm2936, %v3024, %v3033
      %v3036 = vshrl.u32 %v2615, 16
      %v3038 = vrot.slane %v3036, 2
      %v3039 = vshll.u32 %v2615, 16
      %v3041 = vrot.slane %v3039, 3
      %v3042 = vor.u32 %v3038, %v3041
      %v3043 = vsel %vm2936, %v3033, %v3042
      %v3045 = vshrl.u32 %v2616, 16
      %v3047 = vrot.slane %v3045, 2
      %v3048 = vshll.u32 %v2616, 16
      %v3050 = vrot.slane %v3048, 3
      %v3051 = vor.u32 %v3047, %v3050
      %v3052 = vsel %vm2936, %v3042, %v3051
      %v3054 = vshrl.u32 %v2617, 16
      %v3056 = vrot.slane %v3054, 2
      %v3057 = vshll.u32 %v2617, 16
      %v3059 = vrot.slane %v3057, 3
      %v3060 = vor.u32 %v3056, %v3059
      %v3061 = vsel %vm2936, %v3051, %v3060
      %v3063 = vshrl.u32 %v2618, 16
      %v3065 = vrot.slane %v3063, 2
      %v3066 = vshll.u32 %v2618, 16
      %v3068 = vrot.slane %v3066, 3
      %v3069 = vor.u32 %v3065, %v3068
      %v3070 = vsel %vm2936, %v3060, %v3069
      %v3072 = vshrl.u32 %v2619, 16
      %v3074 = vrot.slane %v3072, 2
      %v3075 = vshll.u32 %v2619, 16
      %v3077 = vrot.slane %v3075, 3
      %v3078 = vor.u32 %v3074, %v3077
      %v3079 = vsel %vm2936, %v3069, %v3078
      %v3081 = vshrl.u32 %v2620, 16
      %v3083 = vrot.slane %v3081, 2
      %v3084 = vshll.u32 %v2620, 16
      %v3086 = vrot.slane %v3084, 3
      %v3087 = vor.u32 %v3083, %v3086
      %v3088 = vsel %vm2936, %v3078, %v3087
      %v3090 = vshrl.u32 %v2621, 16
      %v3092 = vrot.slane %v3090, 2
      %v3093 = vshll.u32 %v2621, 16
      %v3095 = vrot.slane %v3093, 3
      %v3096 = vor.u32 %v3092, %v3095
      %v3097 = vsel %vm2936, %v3087, %v3096
      %v3099 = vshrl.u32 %v2935, 16
      %v3101 = vrot.slane %v3099, 2
      %v3102 = vshll.u32 %v2935, 16
      %v3104 = vrot.slane %v3102, 3
      %v3105 = vor.u32 %v3101, %v3104
      %v3106 = vsel %vm2936, %v3096, %v3105
      %v3108 = vsel %vm525, %v2953, 0
      %v3111 = vsel %vm525, %v2962, 0
      %v3114 = vsel %vm525, %v2971, 0
      %v3117 = vsel %vm525, %v2980, 0
      %v3120 = vsel %vm525, %v2989, 0
      %v3123 = vsel %vm525, %v2998, 0
      %v3126 = vsel %vm525, %v3007, 0
      %v3129 = vsel %vm525, %v3016, 0
      %v3132 = vsel %vm525, %v3025, 0
      %v3135 = vsel %vm525, %v3034, 0
      %v3138 = vsel %vm525, %v3043, 0
      %v3141 = vsel %vm525, %v3052, 0
      %v3144 = vsel %vm525, %v3061, 0
      %v3147 = vsel %vm525, %v3070, 0
      %v3150 = vsel %vm525, %v3079, 0
      %v3153 = vsel %vm525, %v3088, 0
      %v3156 = vsel %vm525, %v3097, 0
      %v3159 = vsel %vm525, %v3106, 0
      %v3162 = vsel %vm580, %v2932, 0
      %3164 = vmatprep.subr.bf16.mxu0 0
      %3165 = vmatpush1.bf16.msra.mxu0 0
      %3166 = vmatprep.subr.bf16.mxu0 0
      %3167 = vmatpush1.bf16.msra.mxu0 0
      %3168 = vmatprep.subr.bf16.mxu0 0
      %3169 = vmatpush1.bf16.msra.mxu0 0
      %3170 = vmatprep.subr.bf16.mxu0 0
      %3171 = vmatpush1.bf16.msra.mxu0 0
      %3172 = vmatprep.subr.bf16.mxu0 0
      %3173 = vmatpush1.bf16.msra.mxu0 0
      %3174 = vmatprep.subr.bf16.mxu0 0
      %3175 = vmatpush1.bf16.msra.mxu0 0
      %3176 = vmatprep.subr.bf16.mxu0 0
      %3177 = vmatpush1.bf16.msra.mxu0 0
      %3178 = vmatprep.subr.bf16.mxu0 0
      %3179 = vmatpush1.bf16.msra.mxu0 %v3162
      %3180 = vmatprep.subr.bf16.mxu0 0
      %3181 = vmatpush2.bf16.msra.mxu0 0
      %3182 = vmatprep.subr.bf16.mxu0 0
      %3183 = vmatpush2.bf16.msra.mxu0 0
      %3184 = vmatprep.subr.bf16.mxu0 0
      %3185 = vmatpush2.bf16.msra.mxu0 0
      %3186 = vmatprep.subr.bf16.mxu0 0
      %3187 = vmatpush2.bf16.msra.mxu0 0
      %3188 = vmatprep.subr.bf16.mxu0 0
      %3189 = vmatpush2.bf16.msra.mxu0 0
      %3190 = vmatprep.subr.bf16.mxu0 0
      %3191 = vmatpush2.bf16.msra.mxu0 0
      %3192 = vmatprep.subr.bf16.mxu0 0
      %3193 = vmatpush2.bf16.msra.mxu0 0
      %3194 = vmatprep.subr.bf16.mxu0 0
      %3195 = vmatpush2.bf16.msra.mxu0 0
      %3196 = vmatprep.mubr.bf16.mxu0 0
      %3197 = vmatmul.mubr.bf16.gmra.mxu0 %v3108
      %v3198 = vpop.f32.mrf.mxu0
      %v3199 = vadd.f32 0.0, %v3198
      %v3200 = vpop.f32.mrf.mxu0
      %v3201 = vpop.f32.mrf.mxu0
      %v3202 = vadd.f32 0.0, %v3201
      %v3203 = vpop.f32.mrf.mxu0
      %3204 = vmatprep.mubr.bf16.mxu0 0
      %3205 = vmatmul.mubr.bf16.gmra.mxu0 %v3111
      %v3206 = vpop.f32.mrf.mxu0
      %v3207 = vadd.f32 0.0, %v3206
      %v3208 = vpop.f32.mrf.mxu0
      %v3209 = vpop.f32.mrf.mxu0
      %v3210 = vadd.f32 0.0, %v3209
      %v3211 = vpop.f32.mrf.mxu0
      %3212 = vmatprep.mubr.bf16.mxu0 0
      %3213 = vmatmul.mubr.bf16.gmra.mxu0 %v3114
      %v3214 = vpop.f32.mrf.mxu0
      %v3215 = vadd.f32 0.0, %v3214
      %v3216 = vpop.f32.mrf.mxu0
      %v3217 = vpop.f32.mrf.mxu0
      %v3218 = vadd.f32 0.0, %v3217
      %v3219 = vpop.f32.mrf.mxu0
      %3220 = vmatprep.mubr.bf16.mxu0 0
      %3221 = vmatmul.mubr.bf16.gmra.mxu0 %v3117
      %v3222 = vpop.f32.mrf.mxu0
      %v3223 = vadd.f32 0.0, %v3222
      %v3224 = vpop.f32.mrf.mxu0
      %v3225 = vpop.f32.mrf.mxu0
      %v3226 = vadd.f32 0.0, %v3225
      %v3227 = vpop.f32.mrf.mxu0
      %3228 = vmatprep.mubr.bf16.mxu0 0
      %3229 = vmatmul.mubr.bf16.gmra.mxu0 %v3120
      %v3230 = vpop.f32.mrf.mxu0
      %v3231 = vadd.f32 0.0, %v3230
      %v3232 = vpop.f32.mrf.mxu0
      %v3233 = vpop.f32.mrf.mxu0
      %v3234 = vadd.f32 0.0, %v3233
      %v3235 = vpop.f32.mrf.mxu0
      %3236 = vmatprep.mubr.bf16.mxu0 0
      %3237 = vmatmul.mubr.bf16.gmra.mxu0 %v3123
      %v3238 = vpop.f32.mrf.mxu0
      %v3239 = vadd.f32 0.0, %v3238
      %v3240 = vpop.f32.mrf.mxu0
      %v3241 = vpop.f32.mrf.mxu0
      %v3242 = vadd.f32 0.0, %v3241
      %v3243 = vpop.f32.mrf.mxu0
      %3244 = vmatprep.mubr.bf16.mxu0 0
      %3245 = vmatmul.mubr.bf16.gmra.mxu0 %v3126
      %v3246 = vpop.f32.mrf.mxu0
      %v3247 = vadd.f32 0.0, %v3246
      %v3248 = vpop.f32.mrf.mxu0
      %v3249 = vpop.f32.mrf.mxu0
      %v3250 = vadd.f32 0.0, %v3249
      %v3251 = vpop.f32.mrf.mxu0
      %3252 = vmatprep.mubr.bf16.mxu0 0
      %3253 = vmatmul.mubr.bf16.gmra.mxu0 %v3129
      %v3254 = vpop.f32.mrf.mxu0
      %v3255 = vadd.f32 0.0, %v3254
      %v3256 = vpop.f32.mrf.mxu0
      %v3257 = vpop.f32.mrf.mxu0
      %v3258 = vadd.f32 0.0, %v3257
      %v3259 = vpop.f32.mrf.mxu0
      %3260 = vmatprep.mubr.bf16.mxu0 0
      %3261 = vmatmul.mubr.bf16.gmra.mxu0 %v3132
      %v3262 = vpop.f32.mrf.mxu0
      %v3263 = vadd.f32 0.0, %v3262
      %v3264 = vpop.f32.mrf.mxu0
      %v3265 = vpop.f32.mrf.mxu0
      %v3266 = vadd.f32 0.0, %v3265
      %v3267 = vpop.f32.mrf.mxu0
      %3268 = vmatprep.mubr.bf16.mxu0 0
      %3269 = vmatmul.mubr.bf16.gmra.mxu0 %v3135
      %v3270 = vpop.f32.mrf.mxu0
      %v3271 = vadd.f32 0.0, %v3270
      %v3272 = vpop.f32.mrf.mxu0
      %v3273 = vpop.f32.mrf.mxu0
      %v3274 = vadd.f32 0.0, %v3273
      %v3275 = vpop.f32.mrf.mxu0
      %3276 = vmatprep.mubr.bf16.mxu0 0
      %3277 = vmatmul.mubr.bf16.gmra.mxu0 %v3138
      %v3278 = vpop.f32.mrf.mxu0
      %v3279 = vadd.f32 0.0, %v3278
      %v3280 = vpop.f32.mrf.mxu0
      %v3281 = vpop.f32.mrf.mxu0
      %v3282 = vadd.f32 0.0, %v3281
      %v3283 = vpop.f32.mrf.mxu0
      %3284 = vmatprep.mubr.bf16.mxu0 0
      %3285 = vmatmul.mubr.bf16.gmra.mxu0 %v3141
      %v3286 = vpop.f32.mrf.mxu0
      %v3287 = vadd.f32 0.0, %v3286
      %v3288 = vpop.f32.mrf.mxu0
      %v3289 = vpop.f32.mrf.mxu0
      %v3290 = vadd.f32 0.0, %v3289
      %v3291 = vpop.f32.mrf.mxu0
      %3292 = vmatprep.mubr.bf16.mxu0 0
      %3293 = vmatmul.mubr.bf16.gmra.mxu0 %v3144
      %v3294 = vpop.f32.mrf.mxu0
      %v3295 = vadd.f32 0.0, %v3294
      %v3296 = vpop.f32.mrf.mxu0
      %v3297 = vpop.f32.mrf.mxu0
      %v3298 = vadd.f32 0.0, %v3297
      %v3299 = vpop.f32.mrf.mxu0
      %3300 = vmatprep.mubr.bf16.mxu0 0
      %3301 = vmatmul.mubr.bf16.gmra.mxu0 %v3147
      %v3302 = vpop.f32.mrf.mxu0
      %v3303 = vadd.f32 0.0, %v3302
      %v3304 = vpop.f32.mrf.mxu0
      %v3305 = vpop.f32.mrf.mxu0
      %v3306 = vadd.f32 0.0, %v3305
      %v3307 = vpop.f32.mrf.mxu0
      %3308 = vmatprep.mubr.bf16.mxu0 0
      %3309 = vmatmul.mubr.bf16.gmra.mxu0 %v3150
      %v3310 = vpop.f32.mrf.mxu0
      %v3311 = vadd.f32 0.0, %v3310
      %v3312 = vpop.f32.mrf.mxu0
      %v3313 = vpop.f32.mrf.mxu0
      %v3314 = vadd.f32 0.0, %v3313
      %v3315 = vpop.f32.mrf.mxu0
      %3316 = vmatprep.mubr.bf16.mxu0 0
      %3317 = vmatmul.mubr.bf16.gmra.mxu0 %v3153
      %v3318 = vpop.f32.mrf.mxu0
      %v3319 = vadd.f32 0.0, %v3318
      %v3320 = vpop.f32.mrf.mxu0
      %v3321 = vpop.f32.mrf.mxu0
      %v3322 = vadd.f32 0.0, %v3321
      %v3323 = vpop.f32.mrf.mxu0
      %3324 = vmatprep.mubr.bf16.mxu0 0
      %3325 = vmatmul.mubr.bf16.gmra.mxu0 %v3156
      %v3326 = vpop.f32.mrf.mxu0
      %v3327 = vadd.f32 0.0, %v3326
      %v3328 = vpop.f32.mrf.mxu0
      %v3329 = vpop.f32.mrf.mxu0
      %v3330 = vadd.f32 0.0, %v3329
      %v3331 = vpop.f32.mrf.mxu0
      %3332 = vmatprep.mubr.bf16.mxu0 0
      %3333 = vmatmul.mubr.bf16.gmra.mxu0 %v3159
      %v3334 = vpop.f32.mrf.mxu0
      %v3335 = vadd.f32 0.0, %v3334
      %v3336 = vpop.f32.mrf.mxu0
      %v3337 = vpop.f32.mrf.mxu0
      %v3338 = vadd.f32 0.0, %v3337
      %v3339 = vpop.f32.mrf.mxu0
      %3340 = vdwg.mxu0
      %v3341 = vadd.f32 %v2894, %v3199
      %v3342 = vadd.f32 %v2895, %v3202
      %v3343 = vadd.f32 %v2896, %v3207
      %v3344 = vadd.f32 %v2897, %v3210
      %v3345 = vadd.f32 %v2898, %v3215
      %v3346 = vadd.f32 %v2899, %v3218
      %v3347 = vadd.f32 %v2900, %v3223
      %v3348 = vadd.f32 %v2901, %v3226
      %v3349 = vadd.f32 %v2902, %v3231
      %v3350 = vadd.f32 %v2903, %v3234
      %v3351 = vadd.f32 %v2904, %v3239
      %v3352 = vadd.f32 %v2905, %v3242
      %v3353 = vadd.f32 %v2906, %v3247
      %v3354 = vadd.f32 %v2907, %v3250
      %v3355 = vadd.f32 %v2908, %v3255
      %v3356 = vadd.f32 %v2909, %v3258
      %v3357 = vadd.f32 %v2910, %v3263
      %v3358 = vadd.f32 %v2911, %v3266
      %v3359 = vadd.f32 %v2912, %v3271
      %v3360 = vadd.f32 %v2913, %v3274
      %v3361 = vadd.f32 %v2914, %v3279
      %v3362 = vadd.f32 %v2915, %v3282
      %v3363 = vadd.f32 %v2916, %v3287
      %v3364 = vadd.f32 %v2917, %v3290
      %v3365 = vadd.f32 %v2918, %v3295
      %v3366 = vadd.f32 %v2919, %v3298
      %v3367 = vadd.f32 %v2920, %v3303
      %v3368 = vadd.f32 %v2921, %v3306
      %v3369 = vadd.f32 %v2922, %v3311
      %v3370 = vadd.f32 %v2923, %v3314
      %v3371 = vadd.f32 %v2924, %v3319
      %v3372 = vadd.f32 %v2925, %v3322
      %v3373 = vadd.f32 %v2926, %v3327
      %v3374 = vadd.f32 %v2927, %v3330
      %v3375 = vadd.f32 %v2928, %v3335
      %v3376 = vadd.f32 %v2929, %v3338
      %v3377 = vld [vmem:[%s230 + $0x10] sm:$0x8]
      %s3378 = scalar_lea.vmem %s1, 16
      %v3379 = vld [vmem:[%s3378] sm:$0x3]
      %v3381 = vunpack.c.l.b16 %v3377
      %v3382 = vpack.c.b16 %v2568, %v3381
      %vm3383 = vcmask 1044480
      %v3384 = vrot.slane %v3382, 3
      %v3385 = vrot.slane %v2605, 3
      %v3386 = vsel %vm3383, %v3384, %v3385
      %v3387 = vrot.slane %v2606, 3
      %v3388 = vsel %vm3383, %v3385, %v3387
      %v3389 = vrot.slane %v2607, 3
      %v3390 = vsel %vm3383, %v3387, %v3389
      %v3391 = vrot.slane %v2608, 3
      %v3392 = vsel %vm3383, %v3389, %v3391
      %v3393 = vrot.slane %v2609, 3
      %v3394 = vsel %vm3383, %v3391, %v3393
      %v3395 = vrot.slane %v2610, 3
      %v3396 = vsel %vm3383, %v3393, %v3395
      %v3397 = vrot.slane %v2611, 3
      %v3398 = vsel %vm3383, %v3395, %v3397
      %v3399 = vrot.slane %v2612, 3
      %v3400 = vsel %vm3383, %v3397, %v3399
      %v3401 = vrot.slane %v2613, 3
      %v3402 = vsel %vm3383, %v3399, %v3401
      %v3403 = vrot.slane %v2614, 3
      %v3404 = vsel %vm3383, %v3401, %v3403
      %v3405 = vrot.slane %v2615, 3
      %v3406 = vsel %vm3383, %v3403, %v3405
      %v3407 = vrot.slane %v2616, 3
      %v3408 = vsel %vm3383, %v3405, %v3407
      %v3409 = vrot.slane %v2617, 3
      %v3410 = vsel %vm3383, %v3407, %v3409
      %v3411 = vrot.slane %v2618, 3
      %v3412 = vsel %vm3383, %v3409, %v3411
      %v3413 = vrot.slane %v2619, 3
      %v3414 = vsel %vm3383, %v3411, %v3413
      %v3415 = vrot.slane %v2620, 3
      %v3416 = vsel %vm3383, %v3413, %v3415
      %v3417 = vrot.slane %v2621, 3
      %v3418 = vsel %vm3383, %v3415, %v3417
      %v3419 = vrot.slane %v2935, 3
      %v3420 = vsel %vm3383, %v3417, %v3419
      %v3422 = vsel %vm525, %v3386, 0
      %v3425 = vsel %vm525, %v3388, 0
      %v3428 = vsel %vm525, %v3390, 0
      %v3431 = vsel %vm525, %v3392, 0
      %v3434 = vsel %vm525, %v3394, 0
      %v3437 = vsel %vm525, %v3396, 0
      %v3440 = vsel %vm525, %v3398, 0
      %v3443 = vsel %vm525, %v3400, 0
      %v3446 = vsel %vm525, %v3402, 0
      %v3449 = vsel %vm525, %v3404, 0
      %v3452 = vsel %vm525, %v3406, 0
      %v3455 = vsel %vm525, %v3408, 0
      %v3458 = vsel %vm525, %v3410, 0
      %v3461 = vsel %vm525, %v3412, 0
      %v3464 = vsel %vm525, %v3414, 0
      %v3467 = vsel %vm525, %v3416, 0
      %v3470 = vsel %vm525, %v3418, 0
      %v3473 = vsel %vm525, %v3420, 0
      %v3476 = vsel %vm580, %v3379, 0
      %3478 = vmatprep.subr.bf16.mxu0 0
      %3479 = vmatpush1.bf16.msra.mxu0 0
      %3480 = vmatprep.subr.bf16.mxu0 0
      %3481 = vmatpush1.bf16.msra.mxu0 0
      %3482 = vmatprep.subr.bf16.mxu0 0
      %3483 = vmatpush1.bf16.msra.mxu0 0
      %3484 = vmatprep.subr.bf16.mxu0 0
      %3485 = vmatpush1.bf16.msra.mxu0 0
      %3486 = vmatprep.subr.bf16.mxu0 0
      %3487 = vmatpush1.bf16.msra.mxu0 0
      %3488 = vmatprep.subr.bf16.mxu0 0
      %3489 = vmatpush1.bf16.msra.mxu0 0
      %3490 = vmatprep.subr.bf16.mxu0 0
      %3491 = vmatpush1.bf16.msra.mxu0 0
      %3492 = vmatprep.subr.bf16.mxu0 0
      %3493 = vmatpush1.bf16.msra.mxu0 %v3476
      %3494 = vmatprep.subr.bf16.mxu0 0
      %3495 = vmatpush2.bf16.msra.mxu0 0
      %3496 = vmatprep.subr.bf16.mxu0 0
      %3497 = vmatpush2.bf16.msra.mxu0 0
      %3498 = vmatprep.subr.bf16.mxu0 0
      %3499 = vmatpush2.bf16.msra.mxu0 0
      %3500 = vmatprep.subr.bf16.mxu0 0
      %3501 = vmatpush2.bf16.msra.mxu0 0
      %3502 = vmatprep.subr.bf16.mxu0 0
      %3503 = vmatpush2.bf16.msra.mxu0 0
      %3504 = vmatprep.subr.bf16.mxu0 0
      %3505 = vmatpush2.bf16.msra.mxu0 0
      %3506 = vmatprep.subr.bf16.mxu0 0
      %3507 = vmatpush2.bf16.msra.mxu0 0
      %3508 = vmatprep.subr.bf16.mxu0 0
      %3509 = vmatpush2.bf16.msra.mxu0 0
      %3510 = vmatprep.mubr.bf16.mxu0 0
      %3511 = vmatmul.mubr.bf16.gmra.mxu0 %v3422
      %v3512 = vpop.f32.mrf.mxu0
      %v3513 = vadd.f32 0.0, %v3512
      %v3514 = vpop.f32.mrf.mxu0
      %v3515 = vpop.f32.mrf.mxu0
      %v3516 = vadd.f32 0.0, %v3515
      %v3517 = vpop.f32.mrf.mxu0
      %3518 = vmatprep.mubr.bf16.mxu0 0
      %3519 = vmatmul.mubr.bf16.gmra.mxu0 %v3425
      %v3520 = vpop.f32.mrf.mxu0
      %v3521 = vadd.f32 0.0, %v3520
      %v3522 = vpop.f32.mrf.mxu0
      %v3523 = vpop.f32.mrf.mxu0
      %v3524 = vadd.f32 0.0, %v3523
      %v3525 = vpop.f32.mrf.mxu0
      %3526 = vmatprep.mubr.bf16.mxu0 0
      %3527 = vmatmul.mubr.bf16.gmra.mxu0 %v3428
      %v3528 = vpop.f32.mrf.mxu0
      %v3529 = vadd.f32 0.0, %v3528
      %v3530 = vpop.f32.mrf.mxu0
      %v3531 = vpop.f32.mrf.mxu0
      %v3532 = vadd.f32 0.0, %v3531
      %v3533 = vpop.f32.mrf.mxu0
      %3534 = vmatprep.mubr.bf16.mxu0 0
      %3535 = vmatmul.mubr.bf16.gmra.mxu0 %v3431
      %v3536 = vpop.f32.mrf.mxu0
      %v3537 = vadd.f32 0.0, %v3536
      %v3538 = vpop.f32.mrf.mxu0
      %v3539 = vpop.f32.mrf.mxu0
      %v3540 = vadd.f32 0.0, %v3539
      %v3541 = vpop.f32.mrf.mxu0
      %3542 = vmatprep.mubr.bf16.mxu0 0
      %3543 = vmatmul.mubr.bf16.gmra.mxu0 %v3434
      %v3544 = vpop.f32.mrf.mxu0
      %v3545 = vadd.f32 0.0, %v3544
      %v3546 = vpop.f32.mrf.mxu0
      %v3547 = vpop.f32.mrf.mxu0
      %v3548 = vadd.f32 0.0, %v3547
      %v3549 = vpop.f32.mrf.mxu0
      %3550 = vmatprep.mubr.bf16.mxu0 0
      %3551 = vmatmul.mubr.bf16.gmra.mxu0 %v3437
      %v3552 = vpop.f32.mrf.mxu0
      %v3553 = vadd.f32 0.0, %v3552
      %v3554 = vpop.f32.mrf.mxu0
      %v3555 = vpop.f32.mrf.mxu0
      %v3556 = vadd.f32 0.0, %v3555
      %v3557 = vpop.f32.mrf.mxu0
      %3558 = vmatprep.mubr.bf16.mxu0 0
      %3559 = vmatmul.mubr.bf16.gmra.mxu0 %v3440
      %v3560 = vpop.f32.mrf.mxu0
      %v3561 = vadd.f32 0.0, %v3560
      %v3562 = vpop.f32.mrf.mxu0
      %v3563 = vpop.f32.mrf.mxu0
      %v3564 = vadd.f32 0.0, %v3563
      %v3565 = vpop.f32.mrf.mxu0
      %3566 = vmatprep.mubr.bf16.mxu0 0
      %3567 = vmatmul.mubr.bf16.gmra.mxu0 %v3443
      %v3568 = vpop.f32.mrf.mxu0
      %v3569 = vadd.f32 0.0, %v3568
      %v3570 = vpop.f32.mrf.mxu0
      %v3571 = vpop.f32.mrf.mxu0
      %v3572 = vadd.f32 0.0, %v3571
      %v3573 = vpop.f32.mrf.mxu0
      %3574 = vmatprep.mubr.bf16.mxu0 0
      %3575 = vmatmul.mubr.bf16.gmra.mxu0 %v3446
      %v3576 = vpop.f32.mrf.mxu0
      %v3577 = vadd.f32 0.0, %v3576
      %v3578 = vpop.f32.mrf.mxu0
      %v3579 = vpop.f32.mrf.mxu0
      %v3580 = vadd.f32 0.0, %v3579
      %v3581 = vpop.f32.mrf.mxu0
      %3582 = vmatprep.mubr.bf16.mxu0 0
      %3583 = vmatmul.mubr.bf16.gmra.mxu0 %v3449
      %v3584 = vpop.f32.mrf.mxu0
      %v3585 = vadd.f32 0.0, %v3584
      %v3586 = vpop.f32.mrf.mxu0
      %v3587 = vpop.f32.mrf.mxu0
      %v3588 = vadd.f32 0.0, %v3587
      %v3589 = vpop.f32.mrf.mxu0
      %3590 = vmatprep.mubr.bf16.mxu0 0
      %3591 = vmatmul.mubr.bf16.gmra.mxu0 %v3452
      %v3592 = vpop.f32.mrf.mxu0
      %v3593 = vadd.f32 0.0, %v3592
      %v3594 = vpop.f32.mrf.mxu0
      %v3595 = vpop.f32.mrf.mxu0
      %v3596 = vadd.f32 0.0, %v3595
      %v3597 = vpop.f32.mrf.mxu0
      %3598 = vmatprep.mubr.bf16.mxu0 0
      %3599 = vmatmul.mubr.bf16.gmra.mxu0 %v3455
      %v3600 = vpop.f32.mrf.mxu0
      %v3601 = vadd.f32 0.0, %v3600
      %v3602 = vpop.f32.mrf.mxu0
      %v3603 = vpop.f32.mrf.mxu0
      %v3604 = vadd.f32 0.0, %v3603
      %v3605 = vpop.f32.mrf.mxu0
      %3606 = vmatprep.mubr.bf16.mxu0 0
      %3607 = vmatmul.mubr.bf16.gmra.mxu0 %v3458
      %v3608 = vpop.f32.mrf.mxu0
      %v3609 = vadd.f32 0.0, %v3608
      %v3610 = vpop.f32.mrf.mxu0
      %v3611 = vpop.f32.mrf.mxu0
      %v3612 = vadd.f32 0.0, %v3611
      %v3613 = vpop.f32.mrf.mxu0
      %3614 = vmatprep.mubr.bf16.mxu0 0
      %3615 = vmatmul.mubr.bf16.gmra.mxu0 %v3461
      %v3616 = vpop.f32.mrf.mxu0
      %v3617 = vadd.f32 0.0, %v3616
      %v3618 = vpop.f32.mrf.mxu0
      %v3619 = vpop.f32.mrf.mxu0
      %v3620 = vadd.f32 0.0, %v3619
      %v3621 = vpop.f32.mrf.mxu0
      %3622 = vmatprep.mubr.bf16.mxu0 0
      %3623 = vmatmul.mubr.bf16.gmra.mxu0 %v3464
      %v3624 = vpop.f32.mrf.mxu0
      %v3625 = vadd.f32 0.0, %v3624
      %v3626 = vpop.f32.mrf.mxu0
      %v3627 = vpop.f32.mrf.mxu0
      %v3628 = vadd.f32 0.0, %v3627
      %v3629 = vpop.f32.mrf.mxu0
      %3630 = vmatprep.mubr.bf16.mxu0 0
      %3631 = vmatmul.mubr.bf16.gmra.mxu0 %v3467
      %v3632 = vpop.f32.mrf.mxu0
      %v3633 = vadd.f32 0.0, %v3632
      %v3634 = vpop.f32.mrf.mxu0
      %v3635 = vpop.f32.mrf.mxu0
      %v3636 = vadd.f32 0.0, %v3635
      %v3637 = vpop.f32.mrf.mxu0
      %3638 = vmatprep.mubr.bf16.mxu0 0
      %3639 = vmatmul.mubr.bf16.gmra.mxu0 %v3470
      %v3640 = vpop.f32.mrf.mxu0
      %v3641 = vadd.f32 0.0, %v3640
      %v3642 = vpop.f32.mrf.mxu0
      %v3643 = vpop.f32.mrf.mxu0
      %v3644 = vadd.f32 0.0, %v3643
      %v3645 = vpop.f32.mrf.mxu0
      %3646 = vmatprep.mubr.bf16.mxu0 0
      %3647 = vmatmul.mubr.bf16.gmra.mxu0 %v3473
      %v3648 = vpop.f32.mrf.mxu0
      %v3649 = vadd.f32 0.0, %v3648
      %v3650 = vpop.f32.mrf.mxu0
      %v3651 = vpop.f32.mrf.mxu0
      %v3652 = vadd.f32 0.0, %v3651
      %v3653 = vpop.f32.mrf.mxu0
      %3654 = vdwg.mxu0
      %v3655 = vadd.f32 %v3341, %v3513
      %v3656 = vadd.f32 %v3342, %v3516
      %v3657 = vadd.f32 %v3343, %v3521
      %v3658 = vadd.f32 %v3344, %v3524
      %v3659 = vadd.f32 %v3345, %v3529
      %v3660 = vadd.f32 %v3346, %v3532
      %v3661 = vadd.f32 %v3347, %v3537
      %v3662 = vadd.f32 %v3348, %v3540
      %v3663 = vadd.f32 %v3349, %v3545
      %v3664 = vadd.f32 %v3350, %v3548
      %v3665 = vadd.f32 %v3351, %v3553
      %v3666 = vadd.f32 %v3352, %v3556
      %v3667 = vadd.f32 %v3353, %v3561
      %v3668 = vadd.f32 %v3354, %v3564
      %v3669 = vadd.f32 %v3355, %v3569
      %v3670 = vadd.f32 %v3356, %v3572
      %v3671 = vadd.f32 %v3357, %v3577
      %v3672 = vadd.f32 %v3358, %v3580
      %v3673 = vadd.f32 %v3359, %v3585
      %v3674 = vadd.f32 %v3360, %v3588
      %v3675 = vadd.f32 %v3361, %v3593
      %v3676 = vadd.f32 %v3362, %v3596
      %v3677 = vadd.f32 %v3363, %v3601
      %v3678 = vadd.f32 %v3364, %v3604
      %v3679 = vadd.f32 %v3365, %v3609
      %v3680 = vadd.f32 %v3366, %v3612
      %v3681 = vadd.f32 %v3367, %v3617
      %v3682 = vadd.f32 %v3368, %v3620
      %v3683 = vadd.f32 %v3369, %v3625
      %v3684 = vadd.f32 %v3370, %v3628
      %v3685 = vadd.f32 %v3371, %v3633
      %v3686 = vadd.f32 %v3372, %v3636
      %v3687 = vadd.f32 %v3373, %v3641
      %v3688 = vadd.f32 %v3374, %v3644
      %v3689 = vadd.f32 %v3375, %v3649
      %v3690 = vadd.f32 %v3376, %v3652
      %v3691 = vpack.c.bf16 %v3656, %v3655
      %v3692 = vpack.c.bf16 %v3658, %v3657
      %v3693 = vpack.c.bf16 %v3660, %v3659
      %v3694 = vpack.c.bf16 %v3662, %v3661
      %v3695 = vpack.c.bf16 %v3664, %v3663
      %v3696 = vpack.c.bf16 %v3666, %v3665
      %v3697 = vpack.c.bf16 %v3668, %v3667
      %v3698 = vpack.c.bf16 %v3670, %v3669
      %v3699 = vpack.c.bf16 %v3672, %v3671
      %v3700 = vpack.c.bf16 %v3674, %v3673
      %v3701 = vpack.c.bf16 %v3676, %v3675
      %v3702 = vpack.c.bf16 %v3678, %v3677
      %v3703 = vpack.c.bf16 %v3680, %v3679
      %v3704 = vpack.c.bf16 %v3682, %v3681
      %v3705 = vpack.c.bf16 %v3684, %v3683
      %v3706 = vpack.c.bf16 %v3686, %v3685
      %v3707 = vpack.c.bf16 %v3688, %v3687
      %v3708 = vpack.c.bf16 %v3690, %v3689
      %v3727 = vunpack.c.l.b16 %v3691
      %v3728 = vunpack.c.h.b16 %v3691
      %v3729 = vunpack.c.l.b16 %v3692
      %v3730 = vunpack.c.h.b16 %v3692
      %v3731 = vunpack.c.l.b16 %v3693
      %v3732 = vunpack.c.h.b16 %v3693
      %v3733 = vunpack.c.l.b16 %v3694
      %v3734 = vunpack.c.h.b16 %v3694
      %v3735 = vunpack.c.l.b16 %v3695
      %v3736 = vunpack.c.h.b16 %v3695
      %v3737 = vunpack.c.l.b16 %v3696
      %v3738 = vunpack.c.h.b16 %v3696
      %v3739 = vunpack.c.l.b16 %v3697
      %v3740 = vunpack.c.h.b16 %v3697
      %v3741 = vunpack.c.l.b16 %v3698
      %v3742 = vunpack.c.h.b16 %v3698
      %v3743 = vunpack.c.l.b16 %v3699
      %v3744 = vunpack.c.h.b16 %v3699
      %v3745 = vunpack.c.l.b16 %v3700
      %v3746 = vunpack.c.h.b16 %v3700
      %v3747 = vunpack.c.l.b16 %v3701
      %v3748 = vunpack.c.h.b16 %v3701
      %v3749 = vunpack.c.l.b16 %v3702
      %v3750 = vunpack.c.h.b16 %v3702
      %v3751 = vunpack.c.l.b16 %v3703
      %v3752 = vunpack.c.h.b16 %v3703
      %v3753 = vunpack.c.l.b16 %v3704
      %v3754 = vunpack.c.h.b16 %v3704
      %v3755 = vunpack.c.l.b16 %v3705
      %v3756 = vunpack.c.h.b16 %v3705
      %v3757 = vunpack.c.l.b16 %v3706
      %v3758 = vunpack.c.h.b16 %v3706
      %v3759 = vunpack.c.l.b16 %v3707
      %v3760 = vunpack.c.h.b16 %v3707
      %v3761 = vunpack.c.l.b16 %v3708
      %v3762 = vunpack.c.h.b16 %v3708
      %v3763 = vpack.c.b16 %v3727, %v3727
      %v3764 = vpack.c.b16 %v3728, %v3728
      %v3765 = vpack.c.b16 %v3729, %v3729
      %v3766 = vpack.c.b16 %v3730, %v3730
      %v3767 = vpack.c.b16 %v3731, %v3731
      %v3768 = vpack.c.b16 %v3732, %v3732
      %v3769 = vpack.c.b16 %v3733, %v3733
      %v3770 = vpack.c.b16 %v3734, %v3734
      %v3771 = vpack.c.b16 %v3735, %v3735
      %v3772 = vpack.c.b16 %v3736, %v3736
      %v3773 = vpack.c.b16 %v3737, %v3737
      %v3774 = vpack.c.b16 %v3738, %v3738
      %v3775 = vpack.c.b16 %v3739, %v3739
      %v3776 = vpack.c.b16 %v3740, %v3740
      %v3777 = vpack.c.b16 %v3741, %v3741
      %v3778 = vpack.c.b16 %v3742, %v3742
      %v3779 = vpack.c.b16 %v3743, %v3743
      %v3780 = vpack.c.b16 %v3744, %v3744
      %v3781 = vpack.c.b16 %v3745, %v3745
      %v3782 = vpack.c.b16 %v3746, %v3746
      %v3783 = vpack.c.b16 %v3747, %v3747
      %v3784 = vpack.c.b16 %v3748, %v3748
      %v3785 = vpack.c.b16 %v3749, %v3749
      %v3786 = vpack.c.b16 %v3750, %v3750
      %v3787 = vpack.c.b16 %v3751, %v3751
      %v3788 = vpack.c.b16 %v3752, %v3752
      %v3789 = vpack.c.b16 %v3753, %v3753
      %v3790 = vpack.c.b16 %v3754, %v3754
      %v3791 = vpack.c.b16 %v3755, %v3755
      %v3792 = vpack.c.b16 %v3756, %v3756
      %v3793 = vpack.c.b16 %v3757, %v3757
      %v3794 = vpack.c.b16 %v3758, %v3758
      %v3795 = vpack.c.b16 %v3759, %v3759
      %v3796 = vpack.c.b16 %v3760, %v3760
      %v3797 = vpack.c.b16 %v3761, %v3761
      %v3798 = vpack.c.b16 %v3762, %v3762
      %vm3835 = vcmask 60416
      %3836 = vst.msk [vmem:[%s235] sm:$0xf] %vm3835, %v3763
      %3837 = vst.msk [vmem:[%s235 + $0x4] sm:$0xf] %vm3835, %v3764
      %3838 = vst.msk [vmem:[%s235 + $0x8] sm:$0xf] %vm3835, %v3765
      %3839 = vst.msk [vmem:[%s235 + $0xc] sm:$0xf] %vm3835, %v3766
      %3840 = vst.msk [vmem:[%s235 + $0x10] sm:$0xf] %vm3835, %v3767
      %3841 = vst.msk [vmem:[%s235 + $0x14] sm:$0xf] %vm3835, %v3768
      %3842 = vst.msk [vmem:[%s235 + $0x18] sm:$0xf] %vm3835, %v3769
      %3843 = vst.msk [vmem:[%s235 + $0x1c] sm:$0xf] %vm3835, %v3770
      %3844 = vst.msk [vmem:[%s235 + $0x20] sm:$0xf] %vm3835, %v3771
      %3845 = vst.msk [vmem:[%s235 + $0x24] sm:$0xf] %vm3835, %v3772
      %3846 = vst.msk [vmem:[%s235 + $0x28] sm:$0xf] %vm3835, %v3773
      %3847 = vst.msk [vmem:[%s235 + $0x2c] sm:$0xf] %vm3835, %v3774
      %3848 = vst.msk [vmem:[%s235 + $0x30] sm:$0xf] %vm3835, %v3775
      %3849 = vst.msk [vmem:[%s235 + $0x34] sm:$0xf] %vm3835, %v3776
      %3850 = vst.msk [vmem:[%s235 + $0x38] sm:$0xf] %vm3835, %v3777
      %3851 = vst.msk [vmem:[%s235 + $0x3c] sm:$0xf] %vm3835, %v3778
      %3852 = vst.msk [vmem:[%s235 + $0x40] sm:$0xf] %vm3835, %v3779
      %3853 = vst.msk [vmem:[%s235 + $0x44] sm:$0xf] %vm3835, %v3780
      %3854 = vst.msk [vmem:[%s235 + $0x48] sm:$0xf] %vm3835, %v3781
      %3855 = vst.msk [vmem:[%s235 + $0x4c] sm:$0xf] %vm3835, %v3782
      %3856 = vst.msk [vmem:[%s235 + $0x50] sm:$0xf] %vm3835, %v3783
      %3857 = vst.msk [vmem:[%s235 + $0x54] sm:$0xf] %vm3835, %v3784
      %3858 = vst.msk [vmem:[%s235 + $0x58] sm:$0xf] %vm3835, %v3785
      %3859 = vst.msk [vmem:[%s235 + $0x5c] sm:$0xf] %vm3835, %v3786
      %3860 = vst.msk [vmem:[%s235 + $0x60] sm:$0xf] %vm3835, %v3787
      %3861 = vst.msk [vmem:[%s235 + $0x64] sm:$0xf] %vm3835, %v3788
      %3862 = vst.msk [vmem:[%s235 + $0x68] sm:$0xf] %vm3835, %v3789
      %3863 = vst.msk [vmem:[%s235 + $0x6c] sm:$0xf] %vm3835, %v3790
      %3864 = vst.msk [vmem:[%s235 + $0x70] sm:$0xf] %vm3835, %v3791
      %3865 = vst.msk [vmem:[%s235 + $0x74] sm:$0xf] %vm3835, %v3792
      %3866 = vst.msk [vmem:[%s235 + $0x78] sm:$0xf] %vm3835, %v3793
      %3867 = vst.msk [vmem:[%s235 + $0x7c] sm:$0xf] %vm3835, %v3794
      %3868 = vst.msk [vmem:[%s235 + $0x80] sm:$0xf] %vm3835, %v3795
      %3869 = vst.msk [vmem:[%s235 + $0x84] sm:$0xf] %vm3835, %v3796
      %3870 = vst.msk [vmem:[%s235 + $0x88] sm:$0xf] %vm3835, %v3797
      %3871 = vst.msk [vmem:[%s235 + $0x8c] sm:$0xf] %vm3835, %v3798
      %v3872 = vld [vmem:[%s2] sm:$0xff]
      %v3873 = vld [vmem:[%s2 + $0x8] sm:$0xff]
      %v3874 = vld [vmem:[%s2 + $0x10] sm:$0xff]
      %v3875 = vld [vmem:[%s2 + $0x18] sm:$0xff]
      %v3876 = vld [vmem:[%s2 + $0x20] sm:$0xff]
      %v3877 = vld [vmem:[%s2 + $0x28] sm:$0xff]
      %v3878 = vld [vmem:[%s2 + $0x30] sm:$0xff]
      %v3879 = vld [vmem:[%s2 + $0x38] sm:$0xff]
      %v3880 = vld [vmem:[%s2 + $0x40] sm:$0xff]
      %v3881 = vld [vmem:[%s2 + $0x48] sm:$0xff]
      %v3882 = vld [vmem:[%s2 + $0x50] sm:$0xff]
      %v3883 = vld [vmem:[%s2 + $0x58] sm:$0xff]
      %v3884 = vld [vmem:[%s2 + $0x60] sm:$0xff]
      %v3885 = vld [vmem:[%s2 + $0x68] sm:$0xff]
      %v3886 = vld [vmem:[%s2 + $0x70] sm:$0xff]
      %v3887 = vld [vmem:[%s2 + $0x78] sm:$0xff]
      %v3888 = vld [vmem:[%s2 + $0x80] sm:$0xff]
      %v3889 = vld [vmem:[%s2 + $0x88] sm:$0xff]
      %v3890 = vld [vmem:[%s2 + $0x90] sm:$0xff]
      %v3891 = vld [vmem:[%s2 + $0x98] sm:$0xff]
      %v3892 = vld [vmem:[%s2 + $0xa0] sm:$0xff]
      %v3893 = vld [vmem:[%s2 + $0xa8] sm:$0xff]
      %v3894 = vld [vmem:[%s2 + $0xb0] sm:$0xff]
      %v3895 = vld [vmem:[%s2 + $0xb8] sm:$0xff]
      %v3896 = vld [vmem:[%s2 + $0xc0] sm:$0xff]
      %v3897 = vld [vmem:[%s2 + $0xc8] sm:$0xff]
      %v3898 = vld [vmem:[%s2 + $0xd0] sm:$0xff]
      %v3899 = vld [vmem:[%s2 + $0xd8] sm:$0xff]
      %v3900 = vld [vmem:[%s2 + $0xe0] sm:$0xff]
      %v3901 = vld [vmem:[%s2 + $0xe8] sm:$0xff]
      %v3902 = vld [vmem:[%s2 + $0xf0] sm:$0xff]
      %v3903 = vld [vmem:[%s2 + $0xf8] sm:$0xff]
      %v3904 = vld [vmem:[%s2 + $0x100] sm:$0xff]
      %v3905 = vld [vmem:[%s2 + $0x108] sm:$0xff]
      %v3906 = vld [vmem:[%s2 + $0x110] sm:$0xff]
      %v3907 = vld [vmem:[%s2 + $0x118] sm:$0xff]
      %3909 = vset.pattern.permute.xlu0 0
      %3910 = vperm.xlu0 %3909, %v3872
      %v3911 = vpop.permute.xlu0 %3910
      %3914 = vset.pattern.permute.xlu0 0
      %3915 = vperm.xlu0 %3914, %v3873
      %v3916 = vpop.permute.xlu0 %3915
      %3919 = vset.pattern.permute.xlu0 0
      %3920 = vperm.xlu0 %3919, %v3874
      %v3921 = vpop.permute.xlu0 %3920
      %3924 = vset.pattern.permute.xlu0 0
      %3925 = vperm.xlu0 %3924, %v3875
      %v3926 = vpop.permute.xlu0 %3925
      %3929 = vset.pattern.permute.xlu0 0
      %3930 = vperm.xlu0 %3929, %v3876
      %v3931 = vpop.permute.xlu0 %3930
      %3934 = vset.pattern.permute.xlu0 0
      %3935 = vperm.xlu0 %3934, %v3877
      %v3936 = vpop.permute.xlu0 %3935
      %3939 = vset.pattern.permute.xlu0 0
      %3940 = vperm.xlu0 %3939, %v3878
      %v3941 = vpop.permute.xlu0 %3940
      %3944 = vset.pattern.permute.xlu0 0
      %3945 = vperm.xlu0 %3944, %v3879
      %v3946 = vpop.permute.xlu0 %3945
      %3949 = vset.pattern.permute.xlu0 0
      %3950 = vperm.xlu0 %3949, %v3880
      %v3951 = vpop.permute.xlu0 %3950
      %3954 = vset.pattern.permute.xlu0 0
      %3955 = vperm.xlu0 %3954, %v3881
      %v3956 = vpop.permute.xlu0 %3955
      %3959 = vset.pattern.permute.xlu0 0
      %3960 = vperm.xlu0 %3959, %v3882
      %v3961 = vpop.permute.xlu0 %3960
      %3964 = vset.pattern.permute.xlu0 0
      %3965 = vperm.xlu0 %3964, %v3883
      %v3966 = vpop.permute.xlu0 %3965
      %3969 = vset.pattern.permute.xlu0 0
      %3970 = vperm.xlu0 %3969, %v3884
      %v3971 = vpop.permute.xlu0 %3970
      %3974 = vset.pattern.permute.xlu0 0
      %3975 = vperm.xlu0 %3974, %v3885
      %v3976 = vpop.permute.xlu0 %3975
      %3979 = vset.pattern.permute.xlu0 0
      %3980 = vperm.xlu0 %3979, %v3886
      %v3981 = vpop.permute.xlu0 %3980
      %3984 = vset.pattern.permute.xlu0 0
      %3985 = vperm.xlu0 %3984, %v3887
      %v3986 = vpop.permute.xlu0 %3985
      %3989 = vset.pattern.permute.xlu0 0
      %3990 = vperm.xlu0 %3989, %v3888
      %v3991 = vpop.permute.xlu0 %3990
      %3994 = vset.pattern.permute.xlu0 0
      %3995 = vperm.xlu0 %3994, %v3889
      %v3996 = vpop.permute.xlu0 %3995
      %3999 = vset.pattern.permute.xlu0 0
      %4000 = vperm.xlu0 %3999, %v3890
      %v4001 = vpop.permute.xlu0 %4000
      %4004 = vset.pattern.permute.xlu0 0
      %4005 = vperm.xlu0 %4004, %v3891
      %v4006 = vpop.permute.xlu0 %4005
      %4009 = vset.pattern.permute.xlu0 0
      %4010 = vperm.xlu0 %4009, %v3892
      %v4011 = vpop.permute.xlu0 %4010
      %4014 = vset.pattern.permute.xlu0 0
      %4015 = vperm.xlu0 %4014, %v3893
      %v4016 = vpop.permute.xlu0 %4015
      %4019 = vset.pattern.permute.xlu0 0
      %4020 = vperm.xlu0 %4019, %v3894
      %v4021 = vpop.permute.xlu0 %4020
      %4024 = vset.pattern.permute.xlu0 0
      %4025 = vperm.xlu0 %4024, %v3895
      %v4026 = vpop.permute.xlu0 %4025
      %4029 = vset.pattern.permute.xlu0 0
      %4030 = vperm.xlu0 %4029, %v3896
      %v4031 = vpop.permute.xlu0 %4030
      %4034 = vset.pattern.permute.xlu0 0
      %4035 = vperm.xlu0 %4034, %v3897
      %v4036 = vpop.permute.xlu0 %4035
      %4039 = vset.pattern.permute.xlu0 0
      %4040 = vperm.xlu0 %4039, %v3898
      %v4041 = vpop.permute.xlu0 %4040
      %4044 = vset.pattern.permute.xlu0 0
      %4045 = vperm.xlu0 %4044, %v3899
      %v4046 = vpop.permute.xlu0 %4045
      %4049 = vset.pattern.permute.xlu0 0
      %4050 = vperm.xlu0 %4049, %v3900
      %v4051 = vpop.permute.xlu0 %4050
      %4054 = vset.pattern.permute.xlu0 0
      %4055 = vperm.xlu0 %4054, %v3901
      %v4056 = vpop.permute.xlu0 %4055
      %4059 = vset.pattern.permute.xlu0 0
      %4060 = vperm.xlu0 %4059, %v3902
      %v4061 = vpop.permute.xlu0 %4060
      %4064 = vset.pattern.permute.xlu0 0
      %4065 = vperm.xlu0 %4064, %v3903
      %v4066 = vpop.permute.xlu0 %4065
      %4069 = vset.pattern.permute.xlu0 0
      %4070 = vperm.xlu0 %4069, %v3904
      %v4071 = vpop.permute.xlu0 %4070
      %4074 = vset.pattern.permute.xlu0 0
      %4075 = vperm.xlu0 %4074, %v3905
      %v4076 = vpop.permute.xlu0 %4075
      %4079 = vset.pattern.permute.xlu0 0
      %4080 = vperm.xlu0 %4079, %v3906
      %v4081 = vpop.permute.xlu0 %4080
      %4084 = vset.pattern.permute.xlu0 0
      %4085 = vperm.xlu0 %4084, %v3907
      %v4086 = vpop.permute.xlu0 %4085
      %v4088 = vmul.f32 %v3655, %v3911
      %v4089 = vmul.f32 %v3656, %v3916
      %v4090 = vmul.f32 %v3657, %v3921
      %v4091 = vmul.f32 %v3658, %v3926
      %v4092 = vmul.f32 %v3659, %v3931
      %v4093 = vmul.f32 %v3660, %v3936
      %v4094 = vmul.f32 %v3661, %v3941
      %v4095 = vmul.f32 %v3662, %v3946
      %v4096 = vmul.f32 %v3663, %v3951
      %v4097 = vmul.f32 %v3664, %v3956
      %v4098 = vmul.f32 %v3665, %v3961
      %v4099 = vmul.f32 %v3666, %v3966
      %v4100 = vmul.f32 %v3667, %v3971
      %v4101 = vmul.f32 %v3668, %v3976
      %v4102 = vmul.f32 %v3669, %v3981
      %v4103 = vmul.f32 %v3670, %v3986
      %v4104 = vmul.f32 %v3671, %v3991
      %v4105 = vmul.f32 %v3672, %v3996
      %v4106 = vmul.f32 %v3673, %v4001
      %v4107 = vmul.f32 %v3674, %v4006
      %v4108 = vmul.f32 %v3675, %v4011
      %v4109 = vmul.f32 %v3676, %v4016
      %v4110 = vmul.f32 %v3677, %v4021
      %v4111 = vmul.f32 %v3678, %v4026
      %v4112 = vmul.f32 %v3679, %v4031
      %v4113 = vmul.f32 %v3680, %v4036
      %v4114 = vmul.f32 %v3681, %v4041
      %v4115 = vmul.f32 %v3682, %v4046
      %v4116 = vmul.f32 %v3683, %v4051
      %v4117 = vmul.f32 %v3684, %v4056
      %v4118 = vmul.f32 %v3685, %v4061
      %v4119 = vmul.f32 %v3686, %v4066
      %v4120 = vmul.f32 %v3687, %v4071
      %v4121 = vmul.f32 %v3688, %v4076
      %v4122 = vmul.f32 %v3689, %v4081
      %v4123 = vmul.f32 %v3690, %v4086
      %vm4124 = vcmask 64512
      %v4125 = vsel %vm4124, %v4088, 0.0
      %v4126 = vsel %vm4124, %v4089, 0.0
      %v4127 = vadd.f32 %v4125, %v4126
      %v4128 = vsel %vm4124, %v4090, 0.0
      %v4129 = vadd.f32 %v4127, %v4128
      %v4130 = vsel %vm4124, %v4091, 0.0
      %v4131 = vadd.f32 %v4129, %v4130
      %v4132 = vsel %vm4124, %v4092, 0.0
      %v4133 = vadd.f32 %v4131, %v4132
      %v4134 = vsel %vm4124, %v4093, 0.0
      %v4135 = vadd.f32 %v4133, %v4134
      %v4136 = vsel %vm4124, %v4094, 0.0
      %v4137 = vadd.f32 %v4135, %v4136
      %v4138 = vsel %vm4124, %v4095, 0.0
      %v4139 = vadd.f32 %v4137, %v4138
      %v4140 = vsel %vm4124, %v4096, 0.0
      %v4141 = vadd.f32 %v4139, %v4140
      %v4142 = vsel %vm4124, %v4097, 0.0
      %v4143 = vadd.f32 %v4141, %v4142
      %v4144 = vsel %vm4124, %v4098, 0.0
      %v4145 = vadd.f32 %v4143, %v4144
      %v4146 = vsel %vm4124, %v4099, 0.0
      %v4147 = vadd.f32 %v4145, %v4146
      %v4148 = vsel %vm4124, %v4100, 0.0
      %v4149 = vadd.f32 %v4147, %v4148
      %v4150 = vsel %vm4124, %v4101, 0.0
      %v4151 = vadd.f32 %v4149, %v4150
      %v4152 = vsel %vm4124, %v4102, 0.0
      %v4153 = vadd.f32 %v4151, %v4152
      %v4154 = vsel %vm4124, %v4103, 0.0
      %v4155 = vadd.f32 %v4153, %v4154
      %v4156 = vsel %vm4124, %v4104, 0.0
      %v4157 = vadd.f32 %v4155, %v4156
      %v4158 = vsel %vm4124, %v4105, 0.0
      %v4159 = vadd.f32 %v4157, %v4158
      %v4160 = vsel %vm4124, %v4106, 0.0
      %v4161 = vadd.f32 %v4159, %v4160
      %v4162 = vsel %vm4124, %v4107, 0.0
      %v4163 = vadd.f32 %v4161, %v4162
      %v4164 = vsel %vm4124, %v4108, 0.0
      %v4165 = vadd.f32 %v4163, %v4164
      %v4166 = vsel %vm4124, %v4109, 0.0
      %v4167 = vadd.f32 %v4165, %v4166
      %v4168 = vsel %vm4124, %v4110, 0.0
      %v4169 = vadd.f32 %v4167, %v4168
      %v4170 = vsel %vm4124, %v4111, 0.0
      %v4171 = vadd.f32 %v4169, %v4170
      %v4172 = vsel %vm4124, %v4112, 0.0
      %v4173 = vadd.f32 %v4171, %v4172
      %v4174 = vsel %vm4124, %v4113, 0.0
      %v4175 = vadd.f32 %v4173, %v4174
      %v4176 = vsel %vm4124, %v4114, 0.0
      %v4177 = vadd.f32 %v4175, %v4176
      %v4178 = vsel %vm4124, %v4115, 0.0
      %v4179 = vadd.f32 %v4177, %v4178
      %v4180 = vsel %vm4124, %v4116, 0.0
      %v4181 = vadd.f32 %v4179, %v4180
      %v4182 = vsel %vm4124, %v4117, 0.0
      %v4183 = vadd.f32 %v4181, %v4182
      %v4184 = vsel %vm4124, %v4118, 0.0
      %v4185 = vadd.f32 %v4183, %v4184
      %v4186 = vsel %vm4124, %v4119, 0.0
      %v4187 = vadd.f32 %v4185, %v4186
      %v4188 = vsel %vm4124, %v4120, 0.0
      %v4189 = vadd.f32 %v4187, %v4188
      %v4190 = vsel %vm4124, %v4121, 0.0
      %v4191 = vadd.f32 %v4189, %v4190
      %v4192 = vsel %vm4124, %v4122, 0.0
      %v4193 = vadd.f32 %v4191, %v4192
      %v4194 = vsel %vm4124, %v4123, 0.0
      %v4195 = vadd.f32 %v4193, %v4194
      %v4196 = vrot.slane %v4195, 4
      %v4197 = vadd.f32 %v4195, %v4196
      %v4198 = vrot.slane %v4197, 2
      %v4199 = vadd.f32 %v4197, %v4198
      %v4200 = vrot.slane %v4199, 1
      %v4201 = vadd.f32 %v4199, %v4200
      %vm4202 = vcmask 57344
      %4203 = vst.msk [vmem:[%s238] sm:$0x1] %vm4202, %v4201
      %v4204 = vmul.f32 %v4088, %v4088
      %v4205 = vmul.f32 %v4089, %v4089
      %v4206 = vmul.f32 %v4090, %v4090
      %v4207 = vmul.f32 %v4091, %v4091
      %v4208 = vmul.f32 %v4092, %v4092
      %v4209 = vmul.f32 %v4093, %v4093
      %v4210 = vmul.f32 %v4094, %v4094
      %v4211 = vmul.f32 %v4095, %v4095
      %v4212 = vmul.f32 %v4096, %v4096
      %v4213 = vmul.f32 %v4097, %v4097
      %v4214 = vmul.f32 %v4098, %v4098
      %v4215 = vmul.f32 %v4099, %v4099
      %v4216 = vmul.f32 %v4100, %v4100
      %v4217 = vmul.f32 %v4101, %v4101
      %v4218 = vmul.f32 %v4102, %v4102
      %v4219 = vmul.f32 %v4103, %v4103
      %v4220 = vmul.f32 %v4104, %v4104
      %v4221 = vmul.f32 %v4105, %v4105
      %v4222 = vmul.f32 %v4106, %v4106
      %v4223 = vmul.f32 %v4107, %v4107
      %v4224 = vmul.f32 %v4108, %v4108
      %v4225 = vmul.f32 %v4109, %v4109
      %v4226 = vmul.f32 %v4110, %v4110
      %v4227 = vmul.f32 %v4111, %v4111
      %v4228 = vmul.f32 %v4112, %v4112
      %v4229 = vmul.f32 %v4113, %v4113
      %v4230 = vmul.f32 %v4114, %v4114
      %v4231 = vmul.f32 %v4115, %v4115
      %v4232 = vmul.f32 %v4116, %v4116
      %v4233 = vmul.f32 %v4117, %v4117
      %v4234 = vmul.f32 %v4118, %v4118
      %v4235 = vmul.f32 %v4119, %v4119
      %v4236 = vmul.f32 %v4120, %v4120
      %v4237 = vmul.f32 %v4121, %v4121
      %v4238 = vmul.f32 %v4122, %v4122
      %v4239 = vmul.f32 %v4123, %v4123
      %v4240 = vsel %vm4124, %v4204, 0.0
      %v4241 = vsel %vm4124, %v4205, 0.0
      %v4242 = vadd.f32 %v4240, %v4241
      %v4243 = vsel %vm4124, %v4206, 0.0
      %v4244 = vadd.f32 %v4242, %v4243
      %v4245 = vsel %vm4124, %v4207, 0.0
      %v4246 = vadd.f32 %v4244, %v4245
      %v4247 = vsel %vm4124, %v4208, 0.0
      %v4248 = vadd.f32 %v4246, %v4247
      %v4249 = vsel %vm4124, %v4209, 0.0
      %v4250 = vadd.f32 %v4248, %v4249
      %v4251 = vsel %vm4124, %v4210, 0.0
      %v4252 = vadd.f32 %v4250, %v4251
      %v4253 = vsel %vm4124, %v4211, 0.0
      %v4254 = vadd.f32 %v4252, %v4253
      %v4255 = vsel %vm4124, %v4212, 0.0
      %v4256 = vadd.f32 %v4254, %v4255
      %v4257 = vsel %vm4124, %v4213, 0.0
      %v4258 = vadd.f32 %v4256, %v4257
      %v4259 = vsel %vm4124, %v4214, 0.0
      %v4260 = vadd.f32 %v4258, %v4259
      %v4261 = vsel %vm4124, %v4215, 0.0
      %v4262 = vadd.f32 %v4260, %v4261
      %v4263 = vsel %vm4124, %v4216, 0.0
      %v4264 = vadd.f32 %v4262, %v4263
      %v4265 = vsel %vm4124, %v4217, 0.0
      %v4266 = vadd.f32 %v4264, %v4265
      %v4267 = vsel %vm4124, %v4218, 0.0
      %v4268 = vadd.f32 %v4266, %v4267
      %v4269 = vsel %vm4124, %v4219, 0.0
      %v4270 = vadd.f32 %v4268, %v4269
      %v4271 = vsel %vm4124, %v4220, 0.0
      %v4272 = vadd.f32 %v4270, %v4271
      %v4273 = vsel %vm4124, %v4221, 0.0
      %v4274 = vadd.f32 %v4272, %v4273
      %v4275 = vsel %vm4124, %v4222, 0.0
      %v4276 = vadd.f32 %v4274, %v4275
      %v4277 = vsel %vm4124, %v4223, 0.0
      %v4278 = vadd.f32 %v4276, %v4277
      %v4279 = vsel %vm4124, %v4224, 0.0
      %v4280 = vadd.f32 %v4278, %v4279
      %v4281 = vsel %vm4124, %v4225, 0.0
      %v4282 = vadd.f32 %v4280, %v4281
      %v4283 = vsel %vm4124, %v4226, 0.0
      %v4284 = vadd.f32 %v4282, %v4283
      %v4285 = vsel %vm4124, %v4227, 0.0
      %v4286 = vadd.f32 %v4284, %v4285
      %v4287 = vsel %vm4124, %v4228, 0.0
      %v4288 = vadd.f32 %v4286, %v4287
      %v4289 = vsel %vm4124, %v4229, 0.0
      %v4290 = vadd.f32 %v4288, %v4289
      %v4291 = vsel %vm4124, %v4230, 0.0
      %v4292 = vadd.f32 %v4290, %v4291
      %v4293 = vsel %vm4124, %v4231, 0.0
      %v4294 = vadd.f32 %v4292, %v4293
      %v4295 = vsel %vm4124, %v4232, 0.0
      %v4296 = vadd.f32 %v4294, %v4295
      %v4297 = vsel %vm4124, %v4233, 0.0
      %v4298 = vadd.f32 %v4296, %v4297
      %v4299 = vsel %vm4124, %v4234, 0.0
      %v4300 = vadd.f32 %v4298, %v4299
      %v4301 = vsel %vm4124, %v4235, 0.0
      %v4302 = vadd.f32 %v4300, %v4301
      %v4303 = vsel %vm4124, %v4236, 0.0
      %v4304 = vadd.f32 %v4302, %v4303
      %v4305 = vsel %vm4124, %v4237, 0.0
      %v4306 = vadd.f32 %v4304, %v4305
      %v4307 = vsel %vm4124, %v4238, 0.0
      %v4308 = vadd.f32 %v4306, %v4307
      %v4309 = vsel %vm4124, %v4239, 0.0
      %v4310 = vadd.f32 %v4308, %v4309
      %v4311 = vrot.slane %v4310, 4
      %v4312 = vadd.f32 %v4310, %v4311
      %v4313 = vrot.slane %v4312, 2
      %v4314 = vadd.f32 %v4312, %v4313
      %v4315 = vrot.slane %v4314, 1
      %v4316 = vadd.f32 %v4314, %v4315
      %4317 = vst.msk [vmem:[%s241] sm:$0x1] %vm4202, %v4316
      %p4318 = scmp.lt.s32.totalorder %s17, 1
      %s4319 = scalar_select %p4318, %s17, 1
      %s4320 = smul.addr %s4319, 36
      %s4321 = smul.addr %s4320, 4
      %s4322 = scalar_lea.vmem %s3, %s4321
      %p4323 = scmp.lt.s32.totalorder %s17, 1
      %s4324 = scalar_select %p4323, %s17, 1
      %s4325 = scalar_lea.vmem %s4, %s4324
      %p4326 = scmp.lt.s32.totalorder %s17, 1
      %s4327 = scalar_select %p4326, %s17, 1
      %s4328 = scalar_lea.vmem %s5, %s4327
      // Predicated region
      $region33: #{convblock_forward.2} parent=31 // pred_check
        %p4329 = pneg %p103
      $region34: #{convblock_forward.2} parent=31 // pred_check_branch
        %4331 = sbr.rel (%p4329) target = $region36
      $region35: #{convblock_forward.2} parent=31 // pred_region
        _
      $region36: #{convblock_forward.2} parent=31 // pred_fallthru
        _
      // Predicated region
      $region37: #{convblock_forward.2} parent=31 // pred_check
        %p4332 = pneg %p129
      $region38: #{convblock_forward.2} parent=31 // pred_check_branch
        %4334 = sbr.rel (%p4332) target = $region40
      $region39: #{convblock_forward.2} parent=31 // pred_region
        _
      $region40: #{convblock_forward.2} parent=31 // pred_fallthru
        _
      // Predicated region
      $region41: #{convblock_forward.2} parent=31 // pred_check
        %p4335 = pneg %p155
      $region42: #{convblock_forward.2} parent=31 // pred_check_branch
        %4337 = sbr.rel (%p4335) target = $region44
      $region43: #{convblock_forward.2} parent=31 // pred_region
        _
      $region44: #{convblock_forward.2} parent=31 // pred_fallthru
        _
    $region32: #{convblock_forward.2} parent=5 // pred_fallthru
      _
    %p4338 = scmp.le.s32.totalorder 2, %s12
    // Predicated region
    $region45: #{convblock_forward.2} parent=5 // pred_check
      %p4339 = pneg %p4338
    $region46: #{convblock_forward.2} parent=5 // pred_check_branch
      %4341 = sbr.rel (%p4339) target = $region48
    $region47: #{convblock_forward.2} parent=5 // pred_region
      %s4342 = ssub.s32 %s12, 2
      // Predicated region
      $region49: #{convblock_forward.2} parent=47 // pred_check
        %p4343 = pneg %p109
      $region50: #{convblock_forward.2} parent=47 // pred_check_branch
        %4345 = sbr.rel (%p4343) target = $region52
      $region51: #{convblock_forward.2} parent=47 // pred_region
        %p4346 = scmp.lt.s32.totalorder %s18, 1
        %s4347 = scalar_select %p4346, %s18, 1
        %s4348 = smul.addr %s4347, 36
        %s4349 = smul.addr %s4348, 4
        %s4350 = scalar_lea.vmem %s3, %s4349
      $region52: #{convblock_forward.2} parent=47 // pred_fallthru
        _
      // Predicated region
      $region53: #{convblock_forward.2} parent=47 // pred_check
        %p4351 = pneg %p135
      $region54: #{convblock_forward.2} parent=47 // pred_check_branch
        %4353 = sbr.rel (%p4351) target = $region56
      $region55: #{convblock_forward.2} parent=47 // pred_region
        %p4354 = scmp.lt.s32.totalorder %s18, 1
        %s4355 = scalar_select %p4354, %s18, 1
        %s4356 = scalar_lea.vmem %s4, %s4355
      $region56: #{convblock_forward.2} parent=47 // pred_fallthru
        _
      // Predicated region
      $region57: #{convblock_forward.2} parent=47 // pred_check
        %p4357 = pneg %p161
      $region58: #{convblock_forward.2} parent=47 // pred_check_branch
        %4359 = sbr.rel (%p4357) target = $region60
      $region59: #{convblock_forward.2} parent=47 // pred_region
        %p4360 = scmp.lt.s32.totalorder %s18, 1
        %s4361 = scalar_select %p4360, %s18, 1
        %s4362 = scalar_lea.vmem %s5, %s4361
      $region60: #{convblock_forward.2} parent=47 // pred_fallthru
        _
    $region48: #{convblock_forward.2} parent=5 // pred_fallthru
      _
  $region6: #{convblock_forward.2} parent=0 // loop_footer
    %s16 = sadd.s32 1, %s12
  $region7: #{convblock_forward.2} parent=0 // loop_footer_branch
    %11 = sbr.rel target = $region3
  $region8: #{convblock_forward.2} parent=0 // loop_exit
    _

</llo_original>
